<compile_context>
chip_gen: v5e
topology: v5e:2x2
jax: 0.10.0
libtpu: 0.0.40
codegen_flags: <defaults>
</compile_context>

<pallas_src>
import functools

import jax
import jax.numpy as jnp
import numpy as np
from jax.experimental import pallas as pl
from jax.experimental.pallas import tpu as pltpu


def _conv_lstm_kernel(h_ref, cm_ref, w_ref, b_ref, wl_ref, bl_ref, out_ref,
                      *, h_ch, W, TH, forget_bias):
    """Fused ConvLSTM cell for one (batch, row-tile) grid step.

    h_ref  : ((TH+3)*(W+2), C)  bf16  zero-padded, halo'd hidden-state slab
    cm_ref : (TH*(W+2), 2*C)    bf16  packed [c || m] previous state
    w_ref  : (9, C, 8*C)        f32   fused [s_cc || t_cc] 3x3 conv weights
    b_ref  : (1, 8*C)           f32   fused conv bias
    wl_ref : (2*C, C)           f32   1x1 "last" conv weight
    bl_ref : (1, C)             f32   1x1 "last" conv bias
    out_ref: (TH*(W+2), 3*C)    f32   packed [new_h || new_c || new_m]
    """
    C = h_ch
    Wp = W + 2
    R = TH * Wp

    # One aligned load of the halo'd slab, upcast once; taps are value slices.
    hs = h_ref[...].astype(jnp.float32)

    # Fused s_cc || t_cc 3x3 conv: 9 shifted matmuls accumulated in f32.
    # Output "corner row" r needs slab row r + dy*Wp + dx for tap (dy, dx).
    acc = jnp.zeros((R, 8 * C), jnp.float32)
    for k in range(9):
        dy, dx = divmod(k, 3)
        off = dy * Wp + dx
        acc = acc + jnp.dot(hs[off:off + R, :], w_ref[k],
                            preferred_element_type=jnp.float32)
    acc = acc + b_ref[...]
    s = acc[:, :4 * C]          # s_cc(h)  (also the "x" gates: reference quirk)
    t = acc[:, 4 * C:]          # t_cc(h)

    # Full-width (128-lane for C=32) gate pre-activations; forget_bias is
    # applied via a lane mask on the f-gate slice only.
    lane = jax.lax.broadcasted_iota(jnp.int32, (1, 4 * C), 1)
    fb = jnp.where((lane >= 2 * C) & (lane < 3 * C),
                   jnp.float32(forget_bias), jnp.float32(0.0))
    u = s + t + fb              # i, g, f ("t" branch) pre-activations
    v = 2.0 * s + fb            # i_, g_, f_ ("s" branch) pre-activations
    sig_u = jax.nn.sigmoid(u)
    tan_u = jnp.tanh(u)
    sig_v = jax.nn.sigmoid(v)
    tan_v = jnp.tanh(v)

    i = sig_u[:, 0:C]
    g = tan_u[:, C:2 * C]
    f = sig_u[:, 2 * C:3 * C]
    i_ = sig_v[:, 0:C]
    g_ = tan_v[:, C:2 * C]
    f_ = sig_v[:, 2 * C:3 * C]
    o = jax.nn.sigmoid(u[:, 3 * C:] + s[:, 3 * C:])   # s_o + t_o + s_o

    cm = cm_ref[...].astype(jnp.float32)
    c_prev = cm[:, 0:C]
    m_prev = cm[:, C:2 * C]

    new_m = f_ * m_prev + i_ * g_
    new_c = f * c_prev + i * g

    # 1x1 "last" conv on cat([new_c, new_m]) without the lane concatenation:
    cell = (jnp.dot(new_c, wl_ref[0:C, :], preferred_element_type=jnp.float32)
            + jnp.dot(new_m, wl_ref[C:2 * C, :],
                      preferred_element_type=jnp.float32)
            + bl_ref[...])
    new_h = o * jnp.tanh(cell)

    # Single packed, lane-denser store; wrapper splits h/c/m.
    out_ref[...] = jnp.concatenate([new_h, new_c, new_m], axis=1)


def conv_lstm_forward(params, x, h, c, m, *, h_ch, forget_bias=1.0,
                      row_tile=None):
    """Matches ConvLSTM.forward. x/h/c/m are NCHW f32; returns NCHW f32."""
    N, _, H, W = x.shape
    C = h_ch
    if h is None:
        h = jnp.zeros((N, C, H, W), jnp.float32)
    if c is None:
        c = jnp.zeros((N, C, H, W), jnp.float32)
    if m is None:
        m = jnp.zeros((N, C, H, W), jnp.float32)

    TH = row_tile if (row_tile is not None and H % row_tile == 0) else H
    n_tiles = H // TH
    Wp = W + 2
    R = TH * Wp                # kernel row count (incl. 2 garbage cols/row)
    Rh = (TH + 3) * Wp         # halo'd h-slab rows (1 top + 2 bottom pad rows)

    # ---------------- layout plumbing (plain JAX glue) ----------------
    # h: NCHW -> NHWC, bf16, zero-pad H by (1,2) and W by (1,1), cut halo'd
    # row tiles, flatten (rows, cols) -> rows.
    h_nhwc = jnp.transpose(h, (0, 2, 3, 1)).astype(jnp.bfloat16)
    h_pad = jnp.pad(h_nhwc, ((0, 0), (1, 2), (1, 1), (0, 0)))
    h_tiles = jnp.stack(
        [h_pad[:, t * TH:t * TH + TH + 3] for t in range(n_tiles)], axis=1)
    h_tiles = h_tiles.reshape(N, n_tiles, Rh, C)

    # c, m: NCHW -> NHWC, 2 zero pad columns on the right so rows line up with
    # the conv "corner row" layout, packed along channels, bf16.
    def prep_state(a):
        a = jnp.transpose(a, (0, 2, 3, 1))
        a = jnp.pad(a, ((0, 0), (0, 0), (0, 2), (0, 0)))
        return a.reshape(N, n_tiles, R, C)

    cm = jnp.concatenate([prep_state(c), prep_state(m)],
                         axis=-1).astype(jnp.bfloat16)

    # Fused [s_cc || t_cc] weights / bias (small, VMEM-resident).
    w_st = jnp.concatenate([params["w_s"], params["w_t"]],
                           axis=-1).astype(jnp.float32)      # (9, C, 8C)
    b_st = jnp.concatenate([params["b_s"], params["b_t"]],
                           axis=-1).astype(jnp.float32)      # (1, 8C)
    wl = params["w_last"].astype(jnp.float32)                # (2C, C)
    bl = params["b_last"].astype(jnp.float32)                # (1, C)

    kernel = functools.partial(_conv_lstm_kernel, h_ch=C, W=W, TH=TH,
                               forget_bias=forget_bias)

    def tile_spec(rows, cols):
        return pl.BlockSpec((None, None, rows, cols),
                            lambda n, t: (n, t, 0, 0))

    def const_spec(shape):
        return pl.BlockSpec(shape, lambda n, t: (0,) * len(shape))

    flops = int(N * H * W * (2 * 9 * C * 8 * C + 2 * 2 * C * C + 30 * C))
    transc = int(N * n_tiles * R * (4 * 4 * C + 2 * C))
    bytes_acc = int(N * n_tiles * (Rh * C * 2 + R * 2 * C * 2 + R * 3 * C * 4)
                    + 9 * C * 8 * C * 4 + 8 * C * 4 + 2 * C * C * 4 + C * 4)

    out = pl.pallas_call(
        kernel,
        grid=(N, n_tiles),
        in_specs=[tile_spec(Rh, C),             # halo'd h slab
                  tile_spec(R, 2 * C),          # packed c||m
                  const_spec((9, C, 8 * C)),    # fused conv weight (resident)
                  const_spec((1, 8 * C)),       # fused conv bias
                  const_spec((2 * C, C)),       # 1x1 last conv weight
                  const_spec((1, C))],          # 1x1 last conv bias
        out_specs=tile_spec(R, 3 * C),
        out_shape=jax.ShapeDtypeStruct((N, n_tiles, R, 3 * C), jnp.float32),
        compiler_params=pltpu.CompilerParams(
            dimension_semantics=("parallel", "parallel"),
            vmem_limit_bytes=32 * 1024 * 1024),
        cost_estimate=pl.CostEstimate(flops=flops, transcendentals=transc,
                                      bytes_accessed=bytes_acc),
    )(h_tiles, cm, w_st, b_st, wl, bl)

    # Drop the 2 garbage columns, un-tile, back to NCHW, split h/c/m.
    out = out.reshape(N, n_tiles, TH, Wp, 3 * C)[:, :, :, :W, :]
    out = out.reshape(N, H, W, 3 * C)
    out = jnp.transpose(out, (0, 3, 1, 2))
    return out[:, 0:C], out[:, C:2 * C], out[:, 2 * C:3 * C]


# ---------------- pure-JAX reference (correctness check only) ----------------
def _ref_forward(params, x, h, c, m, *, h_ch, forget_bias=1.0):
    def conv3x3(inp_nchw, w_k_ci_co, b):
        w = w_k_ci_co.reshape(3, 3, w_k_ci_co.shape[1], w_k_ci_co.shape[2])
        w_oihw = jnp.transpose(w, (3, 2, 0, 1))
        out = jax.lax.conv_general_dilated(
            inp_nchw, w_oihw, (1, 1), [(1, 1), (1, 1)],
            dimension_numbers=("NCHW", "OIHW", "NCHW"),
            precision=jax.lax.Precision.HIGHEST)
        return out + b.reshape(1, -1, 1, 1)

    s = conv3x3(h, params["w_s"], params["b_s"])
    t = conv3x3(h, params["w_t"], params["b_t"])
    xg = s                                   # reference quirk: x-gates = s_cc(h)
    sp = lambda a: (a[:, :h_ch], a[:, h_ch:2 * h_ch],
                    a[:, 2 * h_ch:3 * h_ch], a[:, 3 * h_ch:])
    i_s, g_s, f_s, o_s = sp(s)
    i_t, g_t, f_t, o_t = sp(t)
    i_x, g_x, f_x, o_x = sp(xg)
    i = jax.nn.sigmoid(i_x + i_t)
    i_ = jax.nn.sigmoid(i_x + i_s)
    g = jnp.tanh(g_x + g_t)
    g_ = jnp.tanh(g_x + g_s)
    f = jax.nn.sigmoid(f_x + f_t + forget_bias)
    f_ = jax.nn.sigmoid(f_x + f_s + forget_bias)
    o = jax.nn.sigmoid(o_x + o_t + o_s)
    new_m = f_ * m + i_ * g_
    new_c = f * c + i * g
    cell_in = jnp.concatenate([new_c, new_m], axis=1)
    w_last_oihw = jnp.transpose(params["w_last"], (1, 0)).reshape(
        h_ch, 2 * h_ch, 1, 1)
    cell = jax.lax.conv_general_dilated(
        cell_in, w_last_oihw, (1, 1), [(0, 0), (0, 0)],
        dimension_numbers=("NCHW", "OIHW", "NCHW"),
        precision=jax.lax.Precision.HIGHEST)
    cell = cell + params["b_last"].reshape(1, -1, 1, 1)
    new_h = o * jnp.tanh(cell)
    return new_h, new_c, new_m


def _init_params(key, in_ch, h_ch):
    ks = jax.random.split(key, 8)
    scale = 0.1
    return {
        # s_cc / t_cc: Conv2d(h_ch, 4*h_ch, 3) -> stored (9, h_ch, 4*h_ch)
        "w_s": scale * jax.random.normal(ks[0], (9, h_ch, 4 * h_ch), jnp.float32),
        "b_s": scale * jax.random.normal(ks[1], (1, 4 * h_ch), jnp.float32),
        "w_t": scale * jax.random.normal(ks[2], (9, h_ch, 4 * h_ch), jnp.float32),
        "b_t": scale * jax.random.normal(ks[3], (1, 4 * h_ch), jnp.float32),
        # x_cc exists in __init__ but is never used in forward (reference bug).
        "w_x": scale * jax.random.normal(ks[4], (9, in_ch, 4 * h_ch), jnp.float32),
        "b_x": scale * jax.random.normal(ks[5], (1, 4 * h_ch), jnp.float32),
        # last: Conv2d(2*h_ch, h_ch, 1) -> stored (2*h_ch, h_ch)
        "w_last": scale * jax.random.normal(ks[6], (2 * h_ch, h_ch), jnp.float32),
        "b_last": scale * jax.random.normal(ks[7], (1, h_ch), jnp.float32),
    }


if __name__ == "__main__":
    N, in_ch, h_ch, H, W = 2, 4, 32, 16, 16

    key = jax.random.PRNGKey(0)
    kp, kx, kh, kc, km = jax.random.split(key, 5)
    params = _init_params(kp, in_ch, h_ch)

    x = jax.random.normal(kx, (N, in_ch, H, W), jnp.float32)
    h = 0.5 * jax.random.normal(kh, (N, h_ch, H, W), jnp.float32)
    c = 0.5 * jax.random.normal(kc, (N, h_ch, H, W), jnp.float32)
    m = 0.5 * jax.random.normal(km, (N, h_ch, H, W), jnp.float32)

    # row_tile=8 exercises the halo'd row-tiling path (grid = (2, 2)).
    out = conv_lstm_forward(params, x, h, c, m, h_ch=h_ch, row_tile=8)
    out = jax.block_until_ready(out)

    # Tolerance accounts for the bf16 HBM casts of h/c/m (math stays f32).
    ref = _ref_forward(params, x, h, c, m, h_ch=h_ch)
    for a, b in zip(out, ref):
        np.testing.assert_allclose(np.asarray(a), np.asarray(b),
                                   atol=3e-2, rtol=3e-2)

    print("KERNEL_OK")
</pallas_src>

<mosaic_0001>
module attributes {stable_mosaic.version = 11 : i64} {
  func.func @_conv_lstm_kernel(%arg0: i32, %arg1: i32, %arg2: memref<1x1x198x32xbf16, #tpu.memory_space<vmem>>, %arg3: memref<1x1x144x64xbf16, #tpu.memory_space<vmem>>, %arg4: memref<9x32x256xf32, #tpu.memory_space<vmem>>, %arg5: memref<1x256xf32, #tpu.memory_space<vmem>>, %arg6: memref<64x32xf32, #tpu.memory_space<vmem>>, %arg7: memref<1x32xf32, #tpu.memory_space<vmem>>, %arg8: memref<1x1x144x96xf32, #tpu.memory_space<vmem>>) attributes {dimension_semantics = [#tpu.dimension_semantics<parallel>, #tpu.dimension_semantics<parallel>], iteration_bounds = array<i64: 2, 2>, scalar_prefetch = 0 : i64, scratch_operands = 0 : i64, tpu.core_type = #tpu.core_type<tc>, window_params = [{transform_indices = @transform_0, window_bounds = array<i64: 1, 1, 198, 32>}, {transform_indices = @transform_1, window_bounds = array<i64: 1, 1, 144, 64>}, {pipeline_mode = #tpu.pipeline_mode<synchronous>, transform_indices = @transform_2, window_bounds = array<i64: 9, 32, 256>}, {pipeline_mode = #tpu.pipeline_mode<synchronous>, transform_indices = @transform_3, window_bounds = array<i64: 1, 256>}, {pipeline_mode = #tpu.pipeline_mode<synchronous>, transform_indices = @transform_4, window_bounds = array<i64: 64, 32>}, {pipeline_mode = #tpu.pipeline_mode<synchronous>, transform_indices = @transform_5, window_bounds = array<i64: 1, 32>}, {transform_indices = @transform_6, window_bounds = array<i64: 1, 1, 144, 96>}]} {
    %c0 = arith.constant 0 : index
    %c0_0 = arith.constant 0 : index
    %c0_1 = arith.constant 0 : index
    %c0_2 = arith.constant 0 : index
    %0 = vector.load %arg2[%c0, %c0_0, %c0_1, %c0_2] : memref<1x1x198x32xbf16, #tpu.memory_space<vmem>>, vector<1x1x198x32xbf16>
    %1 = vector.shape_cast %0 : vector<1x1x198x32xbf16> to vector<198x32xbf16>
    %2 = arith.extf %1 : vector<198x32xbf16> to vector<198x32xf32>
    %cst = arith.constant 0.000000e+00 : f32
    %3 = vector.broadcast %cst : f32 to vector<144x256xf32>
    %4 = vector.extract_strided_slice %2 {offsets = [0, 0], sizes = [144, 32], strides = [1, 1]} : vector<198x32xf32> to vector<144x32xf32>
    %c0_3 = arith.constant 0 : index
    %c0_4 = arith.constant 0 : index
    %c0_5 = arith.constant 0 : index
    %5 = vector.load %arg4[%c0_3, %c0_4, %c0_5] : memref<9x32x256xf32, #tpu.memory_space<vmem>>, vector<1x32x256xf32>
    %6 = vector.shape_cast %5 : vector<1x32x256xf32> to vector<32x256xf32>
    %cst_6 = arith.constant dense<0.000000e+00> : vector<144x256xf32>
    %7 = tpu.matmul %4, %6, %cst_6 {dimension_numbers = #tpu.dot_dimension_numbers<[1], [0], [0], [1], [0, 0, 1, 1], [], []>} : vector<144x32xf32>, vector<32x256xf32>, vector<144x256xf32> -> vector<144x256xf32>
    %8 = arith.addf %3, %7 : vector<144x256xf32>
    %9 = vector.extract_strided_slice %2 {offsets = [1, 0], sizes = [144, 32], strides = [1, 1]} : vector<198x32xf32> to vector<144x32xf32>
    %c1 = arith.constant 1 : index
    %c0_7 = arith.constant 0 : index
    %c0_8 = arith.constant 0 : index
    %10 = vector.load %arg4[%c1, %c0_7, %c0_8] : memref<9x32x256xf32, #tpu.memory_space<vmem>>, vector<1x32x256xf32>
    %11 = vector.shape_cast %10 : vector<1x32x256xf32> to vector<32x256xf32>
    %cst_9 = arith.constant dense<0.000000e+00> : vector<144x256xf32>
    %12 = tpu.matmul %9, %11, %cst_9 {dimension_numbers = #tpu.dot_dimension_numbers<[1], [0], [0], [1], [0, 0, 1, 1], [], []>} : vector<144x32xf32>, vector<32x256xf32>, vector<144x256xf32> -> vector<144x256xf32>
    %13 = arith.addf %8, %12 : vector<144x256xf32>
    %14 = vector.extract_strided_slice %2 {offsets = [2, 0], sizes = [144, 32], strides = [1, 1]} : vector<198x32xf32> to vector<144x32xf32>
    %c2 = arith.constant 2 : index
    %c0_10 = arith.constant 0 : index
    %c0_11 = arith.constant 0 : index
    %15 = vector.load %arg4[%c2, %c0_10, %c0_11] : memref<9x32x256xf32, #tpu.memory_space<vmem>>, vector<1x32x256xf32>
    %16 = vector.shape_cast %15 : vector<1x32x256xf32> to vector<32x256xf32>
    %cst_12 = arith.constant dense<0.000000e+00> : vector<144x256xf32>
    %17 = tpu.matmul %14, %16, %cst_12 {dimension_numbers = #tpu.dot_dimension_numbers<[1], [0], [0], [1], [0, 0, 1, 1], [], []>} : vector<144x32xf32>, vector<32x256xf32>, vector<144x256xf32> -> vector<144x256xf32>
    %18 = arith.addf %13, %17 : vector<144x256xf32>
    %19 = vector.extract_strided_slice %2 {offsets = [18, 0], sizes = [144, 32], strides = [1, 1]} : vector<198x32xf32> to vector<144x32xf32>
    %c3 = arith.constant 3 : index
    %c0_13 = arith.constant 0 : index
    %c0_14 = arith.constant 0 : index
    %20 = vector.load %arg4[%c3, %c0_13, %c0_14] : memref<9x32x256xf32, #tpu.memory_space<vmem>>, vector<1x32x256xf32>
    %21 = vector.shape_cast %20 : vector<1x32x256xf32> to vector<32x256xf32>
    %cst_15 = arith.constant dense<0.000000e+00> : vector<144x256xf32>
    %22 = tpu.matmul %19, %21, %cst_15 {dimension_numbers = #tpu.dot_dimension_numbers<[1], [0], [0], [1], [0, 0, 1, 1], [], []>} : vector<144x32xf32>, vector<32x256xf32>, vector<144x256xf32> -> vector<144x256xf32>
    %23 = arith.addf %18, %22 : vector<144x256xf32>
    %24 = vector.extract_strided_slice %2 {offsets = [19, 0], sizes = [144, 32], strides = [1, 1]} : vector<198x32xf32> to vector<144x32xf32>
    %c4 = arith.constant 4 : index
    %c0_16 = arith.constant 0 : index
    %c0_17 = arith.constant 0 : index
    %25 = vector.load %arg4[%c4, %c0_16, %c0_17] : memref<9x32x256xf32, #tpu.memory_space<vmem>>, vector<1x32x256xf32>
    %26 = vector.shape_cast %25 : vector<1x32x256xf32> to vector<32x256xf32>
    %cst_18 = arith.constant dense<0.000000e+00> : vector<144x256xf32>
    %27 = tpu.matmul %24, %26, %cst_18 {dimension_numbers = #tpu.dot_dimension_numbers<[1], [0], [0], [1], [0, 0, 1, 1], [], []>} : vector<144x32xf32>, vector<32x256xf32>, vector<144x256xf32> -> vector<144x256xf32>
    %28 = arith.addf %23, %27 : vector<144x256xf32>
    %29 = vector.extract_strided_slice %2 {offsets = [20, 0], sizes = [144, 32], strides = [1, 1]} : vector<198x32xf32> to vector<144x32xf32>
    %c5 = arith.constant 5 : index
    %c0_19 = arith.constant 0 : index
    %c0_20 = arith.constant 0 : index
    %30 = vector.load %arg4[%c5, %c0_19, %c0_20] : memref<9x32x256xf32, #tpu.memory_space<vmem>>, vector<1x32x256xf32>
    %31 = vector.shape_cast %30 : vector<1x32x256xf32> to vector<32x256xf32>
    %cst_21 = arith.constant dense<0.000000e+00> : vector<144x256xf32>
    %32 = tpu.matmul %29, %31, %cst_21 {dimension_numbers = #tpu.dot_dimension_numbers<[1], [0], [0], [1], [0, 0, 1, 1], [], []>} : vector<144x32xf32>, vector<32x256xf32>, vector<144x256xf32> -> vector<144x256xf32>
    %33 = arith.addf %28, %32 : vector<144x256xf32>
    %34 = vector.extract_strided_slice %2 {offsets = [36, 0], sizes = [144, 32], strides = [1, 1]} : vector<198x32xf32> to vector<144x32xf32>
    %c6 = arith.constant 6 : index
    %c0_22 = arith.constant 0 : index
    %c0_23 = arith.constant 0 : index
    %35 = vector.load %arg4[%c6, %c0_22, %c0_23] : memref<9x32x256xf32, #tpu.memory_space<vmem>>, vector<1x32x256xf32>
    %36 = vector.shape_cast %35 : vector<1x32x256xf32> to vector<32x256xf32>
    %cst_24 = arith.constant dense<0.000000e+00> : vector<144x256xf32>
    %37 = tpu.matmul %34, %36, %cst_24 {dimension_numbers = #tpu.dot_dimension_numbers<[1], [0], [0], [1], [0, 0, 1, 1], [], []>} : vector<144x32xf32>, vector<32x256xf32>, vector<144x256xf32> -> vector<144x256xf32>
    %38 = arith.addf %33, %37 : vector<144x256xf32>
    %39 = vector.extract_strided_slice %2 {offsets = [37, 0], sizes = [144, 32], strides = [1, 1]} : vector<198x32xf32> to vector<144x32xf32>
    %c7 = arith.constant 7 : index
    %c0_25 = arith.constant 0 : index
    %c0_26 = arith.constant 0 : index
    %40 = vector.load %arg4[%c7, %c0_25, %c0_26] : memref<9x32x256xf32, #tpu.memory_space<vmem>>, vector<1x32x256xf32>
    %41 = vector.shape_cast %40 : vector<1x32x256xf32> to vector<32x256xf32>
    %cst_27 = arith.constant dense<0.000000e+00> : vector<144x256xf32>
    %42 = tpu.matmul %39, %41, %cst_27 {dimension_numbers = #tpu.dot_dimension_numbers<[1], [0], [0], [1], [0, 0, 1, 1], [], []>} : vector<144x32xf32>, vector<32x256xf32>, vector<144x256xf32> -> vector<144x256xf32>
    %43 = arith.addf %38, %42 : vector<144x256xf32>
    %44 = vector.extract_strided_slice %2 {offsets = [38, 0], sizes = [144, 32], strides = [1, 1]} : vector<198x32xf32> to vector<144x32xf32>
    %c8 = arith.constant 8 : index
    %c0_28 = arith.constant 0 : index
    %c0_29 = arith.constant 0 : index
    %45 = vector.load %arg4[%c8, %c0_28, %c0_29] : memref<9x32x256xf32, #tpu.memory_space<vmem>>, vector<1x32x256xf32>
    %46 = vector.shape_cast %45 : vector<1x32x256xf32> to vector<32x256xf32>
    %cst_30 = arith.constant dense<0.000000e+00> : vector<144x256xf32>
    %47 = tpu.matmul %44, %46, %cst_30 {dimension_numbers = #tpu.dot_dimension_numbers<[1], [0], [0], [1], [0, 0, 1, 1], [], []>} : vector<144x32xf32>, vector<32x256xf32>, vector<144x256xf32> -> vector<144x256xf32>
    %48 = arith.addf %43, %47 : vector<144x256xf32>
    %c0_31 = arith.constant 0 : index
    %c0_32 = arith.constant 0 : index
    %49 = vector.load %arg5[%c0_31, %c0_32] : memref<1x256xf32, #tpu.memory_space<vmem>>, vector<1x256xf32>
    %50 = vector.broadcast %49 : vector<1x256xf32> to vector<144x256xf32>
    %51 = arith.addf %48, %50 : vector<144x256xf32>
    %52 = vector.extract_strided_slice %51 {offsets = [0, 0], sizes = [144, 128], strides = [1, 1]} : vector<144x256xf32> to vector<144x128xf32>
    %53 = vector.extract_strided_slice %51 {offsets = [0, 128], sizes = [144, 128], strides = [1, 1]} : vector<144x256xf32> to vector<144x128xf32>
    %54 = tpu.iota {dimensions = array<i32: 1>} : vector<1x128xi32>
    %c64_i32 = arith.constant 64 : i32
    %55 = vector.broadcast %c64_i32 : i32 to vector<1x128xi32>
    %56 = arith.cmpi sge, %54, %55 : vector<1x128xi32>
    %c96_i32 = arith.constant 96 : i32
    %57 = vector.broadcast %c96_i32 : i32 to vector<1x128xi32>
    %58 = arith.cmpi slt, %54, %57 : vector<1x128xi32>
    %59 = arith.andi %56, %58 : vector<1x128xi1>
    %cst_33 = arith.constant 1.000000e+00 : f32
    %cst_34 = arith.constant 0.000000e+00 : f32
    %60 = vector.broadcast %cst_33 : f32 to vector<1x128xf32>
    %61 = vector.broadcast %cst_34 : f32 to vector<1x128xf32>
    %62 = arith.select %59, %60, %61 : vector<1x128xi1>, vector<1x128xf32>
    %63 = arith.addf %52, %53 : vector<144x128xf32>
    %64 = vector.broadcast %62 : vector<1x128xf32> to vector<144x128xf32>
    %65 = arith.addf %63, %64 : vector<144x128xf32>
    %cst_35 = arith.constant 2.000000e+00 : f32
    %66 = vector.broadcast %cst_35 : f32 to vector<144x128xf32>
    %67 = arith.mulf %66, %52 : vector<144x128xf32>
    %68 = vector.broadcast %62 : vector<1x128xf32> to vector<144x128xf32>
    %69 = arith.addf %67, %68 : vector<144x128xf32>
    %70 = arith.negf %65 : vector<144x128xf32>
    %71 = math.exp %70 : vector<144x128xf32>
    %cst_36 = arith.constant 1.000000e+00 : f32
    %72 = vector.broadcast %cst_36 : f32 to vector<144x128xf32>
    %73 = arith.addf %72, %71 : vector<144x128xf32>
    %74 = arith.divf %72, %73 : vector<144x128xf32>
    %75 = math.tanh %65 : vector<144x128xf32>
    %76 = arith.negf %69 : vector<144x128xf32>
    %77 = math.exp %76 : vector<144x128xf32>
    %cst_37 = arith.constant 1.000000e+00 : f32
    %78 = vector.broadcast %cst_37 : f32 to vector<144x128xf32>
    %79 = arith.addf %78, %77 : vector<144x128xf32>
    %80 = arith.divf %78, %79 : vector<144x128xf32>
    %81 = math.tanh %69 : vector<144x128xf32>
    %82 = vector.extract_strided_slice %74 {offsets = [0, 0], sizes = [144, 32], strides = [1, 1]} : vector<144x128xf32> to vector<144x32xf32>
    %83 = vector.extract_strided_slice %75 {offsets = [0, 32], sizes = [144, 32], strides = [1, 1]} : vector<144x128xf32> to vector<144x32xf32>
    %84 = vector.extract_strided_slice %74 {offsets = [0, 64], sizes = [144, 32], strides = [1, 1]} : vector<144x128xf32> to vector<144x32xf32>
    %85 = vector.extract_strided_slice %80 {offsets = [0, 0], sizes = [144, 32], strides = [1, 1]} : vector<144x128xf32> to vector<144x32xf32>
    %86 = vector.extract_strided_slice %81 {offsets = [0, 32], sizes = [144, 32], strides = [1, 1]} : vector<144x128xf32> to vector<144x32xf32>
    %87 = vector.extract_strided_slice %80 {offsets = [0, 64], sizes = [144, 32], strides = [1, 1]} : vector<144x128xf32> to vector<144x32xf32>
    %88 = vector.extract_strided_slice %65 {offsets = [0, 96], sizes = [144, 32], strides = [1, 1]} : vector<144x128xf32> to vector<144x32xf32>
    %89 = vector.extract_strided_slice %52 {offsets = [0, 96], sizes = [144, 32], strides = [1, 1]} : vector<144x128xf32> to vector<144x32xf32>
    %90 = arith.addf %88, %89 : vector<144x32xf32>
    %91 = arith.negf %90 : vector<144x32xf32>
    %92 = math.exp %91 : vector<144x32xf32>
    %cst_38 = arith.constant 1.000000e+00 : f32
    %93 = vector.broadcast %cst_38 : f32 to vector<144x32xf32>
    %94 = arith.addf %93, %92 : vector<144x32xf32>
    %95 = arith.divf %93, %94 : vector<144x32xf32>
    %c0_39 = arith.constant 0 : index
    %c0_40 = arith.constant 0 : index
    %c0_41 = arith.constant 0 : index
    %c0_42 = arith.constant 0 : index
    %96 = vector.load %arg3[%c0_39, %c0_40, %c0_41, %c0_42] : memref<1x1x144x64xbf16, #tpu.memory_space<vmem>>, vector<1x1x144x64xbf16>
    %97 = vector.shape_cast %96 : vector<1x1x144x64xbf16> to vector<144x64xbf16>
    %98 = arith.extf %97 : vector<144x64xbf16> to vector<144x64xf32>
    %99 = vector.extract_strided_slice %98 {offsets = [0, 0], sizes = [144, 32], strides = [1, 1]} : vector<144x64xf32> to vector<144x32xf32>
    %100 = vector.extract_strided_slice %98 {offsets = [0, 32], sizes = [144, 32], strides = [1, 1]} : vector<144x64xf32> to vector<144x32xf32>
    %101 = arith.mulf %87, %100 : vector<144x32xf32>
    %102 = arith.mulf %85, %86 : vector<144x32xf32>
    %103 = arith.addf %101, %102 : vector<144x32xf32>
    %104 = arith.mulf %84, %99 : vector<144x32xf32>
    %105 = arith.mulf %82, %83 : vector<144x32xf32>
    %106 = arith.addf %104, %105 : vector<144x32xf32>
    %c0_43 = arith.constant 0 : index
    %c0_44 = arith.constant 0 : index
    %107 = vector.load %arg6[%c0_43, %c0_44] : memref<64x32xf32, #tpu.memory_space<vmem>>, vector<32x32xf32>
    %cst_45 = arith.constant dense<0.000000e+00> : vector<144x32xf32>
    %108 = tpu.matmul %106, %107, %cst_45 {dimension_numbers = #tpu.dot_dimension_numbers<[1], [0], [0], [1], [0, 0, 1, 1], [], []>} : vector<144x32xf32>, vector<32x32xf32>, vector<144x32xf32> -> vector<144x32xf32>
    %c32 = arith.constant 32 : index
    %c0_46 = arith.constant 0 : index
    %109 = vector.load %arg6[%c32, %c0_46] : memref<64x32xf32, #tpu.memory_space<vmem>>, vector<32x32xf32>
    %cst_47 = arith.constant dense<0.000000e+00> : vector<144x32xf32>
    %110 = tpu.matmul %103, %109, %cst_47 {dimension_numbers = #tpu.dot_dimension_numbers<[1], [0], [0], [1], [0, 0, 1, 1], [], []>} : vector<144x32xf32>, vector<32x32xf32>, vector<144x32xf32> -> vector<144x32xf32>
    %111 = arith.addf %108, %110 : vector<144x32xf32>
    %c0_48 = arith.constant 0 : index
    %c0_49 = arith.constant 0 : index
    %112 = vector.load %arg7[%c0_48, %c0_49] : memref<1x32xf32, #tpu.memory_space<vmem>>, vector<1x32xf32>
    %113 = vector.broadcast %112 : vector<1x32xf32> to vector<144x32xf32>
    %114 = arith.addf %111, %113 : vector<144x32xf32>
    %115 = math.tanh %114 : vector<144x32xf32>
    %116 = arith.mulf %95, %115 : vector<144x32xf32>
    %117 = tpu.concatenate %116, %106, %103 in 1 : vector<144x32xf32>, vector<144x32xf32>, vector<144x32xf32> -> vector<144x96xf32>
    %c0_50 = arith.constant 0 : index
    %c0_51 = arith.constant 0 : index
    %c0_52 = arith.constant 0 : index
    %c0_53 = arith.constant 0 : index
    %118 = vector.load %arg8[%c0_50, %c0_51, %c0_52, %c0_53] : memref<1x1x144x96xf32, #tpu.memory_space<vmem>>, vector<1x1x144x96xf32>
    %119 = vector.shape_cast %118 : vector<1x1x144x96xf32> to vector<144x96xf32>
    %120 = vector.shape_cast %117 : vector<144x96xf32> to vector<1x1x144x96xf32>
    tpu.vector_store %arg8[%c0_50, %c0_51, %c0_52, %c0_53], %120 {strides = array<i32>} : memref<1x1x144x96xf32, #tpu.memory_space<vmem>>, vector<1x1x144x96xf32>,
    return
  }
  func.func @transform_0(%arg0: i32, %arg1: i32) -> (i32, i32, i32, i32) {
    %c0_i32 = arith.constant 0 : i32
    %c0_i32_0 = arith.constant 0 : i32
    %c0_i32_1 = arith.constant 0 : i32
    return %arg0, %arg1, %c0_i32, %c0_i32_0 : i32, i32, i32, i32
  }
  func.func @transform_1(%arg0: i32, %arg1: i32) -> (i32, i32, i32, i32) {
    %c0_i32 = arith.constant 0 : i32
    %c0_i32_0 = arith.constant 0 : i32
    %c0_i32_1 = arith.constant 0 : i32
    return %arg0, %arg1, %c0_i32, %c0_i32_0 : i32, i32, i32, i32
  }
  func.func @transform_2(%arg0: i32, %arg1: i32) -> (i32, i32, i32) {
    %c0_i32 = arith.constant 0 : i32
    %c0_i32_0 = arith.constant 0 : i32
    %c0_i32_1 = arith.constant 0 : i32
    %c0_i32_2 = arith.constant 0 : i32
    return %c0_i32, %c0_i32_0, %c0_i32_1 : i32, i32, i32
  }
  func.func @transform_3(%arg0: i32, %arg1: i32) -> (i32, i32) {
    %c0_i32 = arith.constant 0 : i32
    %c0_i32_0 = arith.constant 0 : i32
    %c0_i32_1 = arith.constant 0 : i32
    return %c0_i32, %c0_i32_0 : i32, i32
  }
  func.func @transform_4(%arg0: i32, %arg1: i32) -> (i32, i32) {
    %c0_i32 = arith.constant 0 : i32
    %c0_i32_0 = arith.constant 0 : i32
    %c0_i32_1 = arith.constant 0 : i32
    return %c0_i32, %c0_i32_0 : i32, i32
  }
  func.func @transform_5(%arg0: i32, %arg1: i32) -> (i32, i32) {
    %c0_i32 = arith.constant 0 : i32
    %c0_i32_0 = arith.constant 0 : i32
    %c0_i32_1 = arith.constant 0 : i32
    return %c0_i32, %c0_i32_0 : i32, i32
  }
  func.func @transform_6(%arg0: i32, %arg1: i32) -> (i32, i32, i32, i32) {
    %c0_i32 = arith.constant 0 : i32
    %c0_i32_0 = arith.constant 0 : i32
    %c0_i32_1 = arith.constant 0 : i32
    return %arg0, %arg1, %c0_i32, %c0_i32_0 : i32, i32, i32, i32
  }
}

</mosaic_0001>

<llo_original>
// kernel: tpu_custom_call.1
$region0: #{tpu_custom_call.1}
  #allocation0 [shape = 'u32[]', space=smem, size = 0x4, offset = 0x4, fixed_abs, tag = 'smem constant byte address 0x4 - core index']
  #allocation1 [shape = 'u32[72,128]{1,0:T(1,128)}', space=vmem, size = 0x9000, scoped, tag = 'internal scratch']
  %s0 = inlined_call_operand.vmem [shape: bf16[2,2,198,32], index: 0, kind: input, shape index: {}]
  %s1 = inlined_call_operand.vmem [shape: bf16[2,2,144,64], index: 1, kind: input, shape index: {}]
  %s2 = inlined_call_operand.vmem [shape: f32[9,32,256], index: 2, kind: input, shape index: {}]
  %s3 = inlined_call_operand.vmem [shape: f32[1,256], index: 3, kind: input, shape index: {}]
  %s4 = inlined_call_operand.vmem [shape: f32[64,32], index: 4, kind: input, shape index: {}]
  %s5 = inlined_call_operand.vmem [shape: f32[1,32], index: 5, kind: input, shape index: {}]
  %s6 = inlined_call_operand.hbm [shape: f32[2,2,144,96], index: 6, kind: output, shape index: {}]
  %s7 = sld [smem:[#allocation0]]
  $region57: #{tpu_custom_call.1} parent=0
    _
  %s9 = ssub.s32 1, %s7
  %s10 = scalar_select 0, %s9, %s7
  $region1: #{tpu_custom_call.1} parent=0
    #allocation2 [shape = 'u8[147456]{0}', space=vmem, size = 0x24000, scoped, tag = 'output window, operand 0']
    #allocation3 [shape = 's32[2]{0}', space=sflag, size = 0x8, scoped, tag = 'scoped memory for tpu_custom_call.1']
    %11 = vsyncpa [#allocation3], 0
    %s12 = scalar_lea.sflag [#allocation3], 1
    %13 = vsyncpa %s12, 0
    loop: start=0, step=1, limit=6
    $region2: #{tpu_custom_call.1} parent=1 // loop_pre_header
      _
    $region3: #{tpu_custom_call.1} parent=1 // loop_header
      %s15 = sphi 0, %s19
      %p16 = scmp.ge.s32.totalorder %s15, 6
      %s22 = sphi 0, %s34
      %s23 = sphi 0, %s30
      %s24 = sphi 0, %s22
      %s25 = sphi 0, %s23
      %s26 = sphi 0, %s24
      %s27 = sphi 0, %s25
      %s39 = sphi 0, %s41
      %s42 = sphi 0, %s39
      %s43 = sphi 0, %s42
      %s59 = sphi 0, %s43
      %s67 = sphi 0, %s69
      %s70 = sphi 0, %s67
      %s71 = sphi 0, %s70
      %s87 = sphi 0, %s71
      %s91 = sphi 0, %s91
      %s93 = sphi 0, %s91
      %s94 = sphi 0, %s93
      %s108 = sphi 0, %s94
      %s112 = sphi 0, %s112
      %s114 = sphi 0, %s112
      %s115 = sphi 0, %s114
      %s129 = sphi 0, %s115
      %s133 = sphi 0, %s133
      %s135 = sphi 0, %s133
      %s136 = sphi 0, %s135
      %s150 = sphi 0, %s136
      %s154 = sphi 0, %s154
      %s156 = sphi 0, %s154
      %s157 = sphi 0, %s156
      %s171 = sphi 0, %s157
      %s179 = sphi 0, %s181
      %s182 = sphi 0, %s179
      %s183 = sphi 0, %s182
      %s199 = sphi 0, %s183
    $region4: #{tpu_custom_call.1} parent=1 // loop_header_branch
      %18 = sbr.rel (%p16) target = $region8
    $region5: #{tpu_custom_call.1} parent=1 // loop_body
      %s20 = ssub.s32 %s15, 1
      %s21 = ssub.s32 %s15, 2
      %s28 = sadd.s32 1, %s23
      %p29 = scmp.ge.s32.totalorder %s28, 2
      %s30 = scalar_select %p29, 0, %s28
      %s31 = sadd.s32 1, %s22
      %s32 = scalar_select %p29, %s31, %s22
      %p33 = scmp.ge.s32.totalorder %s32, 2
      %s34 = scalar_select %p33, 0, %s32
      %s35 = ssub.s32 %s22, %s34
      %s36 = ssub.s32 %s23, %s30
      %s37 = sor.u32 %s35, %s36
      %p38 = scmp.eq.s32.totalorder %s37, 0
      %s40 = sadd.s32 %s39, 1
      %s41 = scalar_select %p38, %s39, %s40
      %p44 = pneg %p38
      %p45 = scmp.eq.s32.totalorder %s15, 3
      %p46 = por %p44, %p45
      %p47 = scmp.ne.s32.totalorder %s39, %s42
      %p48 = scmp.eq.s32.totalorder %s15, 0
      %p49 = por %p47, %p48
      %p50 = scmp.ne.s32.totalorder %s39, %s42
      %p51 = scmp.eq.s32.totalorder %s20, 3
      %p52 = por %p50, %p51
      %p53 = scmp.ne.s32.totalorder %s42, %s43
      %p54 = scmp.eq.s32.totalorder %s20, 0
      %p55 = por %p53, %p54
      %p56 = scmp.ne.s32.totalorder %s42, %s43
      %p57 = scmp.eq.s32.totalorder %s21, 3
      %p58 = por %p56, %p57
      %p60 = scmp.ne.s32.totalorder %s43, %s59
      %p61 = scmp.eq.s32.totalorder %s21, 0
      %p62 = por %p60, %p61
      %s63 = ssub.s32 %s22, %s34
      %s64 = ssub.s32 %s23, %s30
      %s65 = sor.u32 %s63, %s64
      %p66 = scmp.eq.s32.totalorder %s65, 0
      %s68 = sadd.s32 %s67, 1
      %s69 = scalar_select %p66, %s67, %s68
      %p72 = pneg %p66
      %p73 = scmp.eq.s32.totalorder %s15, 3
      %p74 = por %p72, %p73
      %p75 = scmp.ne.s32.totalorder %s67, %s70
      %p76 = scmp.eq.s32.totalorder %s15, 0
      %p77 = por %p75, %p76
      %p78 = scmp.ne.s32.totalorder %s67, %s70
      %p79 = scmp.eq.s32.totalorder %s20, 3
      %p80 = por %p78, %p79
      %p81 = scmp.ne.s32.totalorder %s70, %s71
      %p82 = scmp.eq.s32.totalorder %s20, 0
      %p83 = por %p81, %p82
      %p84 = scmp.ne.s32.totalorder %s70, %s71
      %p85 = scmp.eq.s32.totalorder %s21, 3
      %p86 = por %p84, %p85
      %p88 = scmp.ne.s32.totalorder %s71, %s87
      %p89 = scmp.eq.s32.totalorder %s21, 0
      %p90 = por %p88, %p89
      %s92 = sadd.s32 %s91, 1
      %p95 = scmp.eq.s32.totalorder %s15, 3
      %p96 = scmp.ne.s32.totalorder %s91, %s93
      %p97 = scmp.eq.s32.totalorder %s15, 0
      %p98 = por %p96, %p97
      %p99 = scmp.ne.s32.totalorder %s91, %s93
      %p100 = scmp.eq.s32.totalorder %s20, 3
      %p101 = por %p99, %p100
      %p102 = scmp.ne.s32.totalorder %s93, %s94
      %p103 = scmp.eq.s32.totalorder %s20, 0
      %p104 = por %p102, %p103
      %p105 = scmp.ne.s32.totalorder %s93, %s94
      %p106 = scmp.eq.s32.totalorder %s21, 3
      %p107 = por %p105, %p106
      %p109 = scmp.ne.s32.totalorder %s94, %s108
      %p110 = scmp.eq.s32.totalorder %s21, 0
      %p111 = por %p109, %p110
      %s113 = sadd.s32 %s112, 1
      %p116 = scmp.eq.s32.totalorder %s15, 3
      %p117 = scmp.ne.s32.totalorder %s112, %s114
      %p118 = scmp.eq.s32.totalorder %s15, 0
      %p119 = por %p117, %p118
      %p120 = scmp.ne.s32.totalorder %s112, %s114
      %p121 = scmp.eq.s32.totalorder %s20, 3
      %p122 = por %p120, %p121
      %p123 = scmp.ne.s32.totalorder %s114, %s115
      %p124 = scmp.eq.s32.totalorder %s20, 0
      %p125 = por %p123, %p124
      %p126 = scmp.ne.s32.totalorder %s114, %s115
      %p127 = scmp.eq.s32.totalorder %s21, 3
      %p128 = por %p126, %p127
      %p130 = scmp.ne.s32.totalorder %s115, %s129
      %p131 = scmp.eq.s32.totalorder %s21, 0
      %p132 = por %p130, %p131
      %s134 = sadd.s32 %s133, 1
      %p137 = scmp.eq.s32.totalorder %s15, 3
      %p138 = scmp.ne.s32.totalorder %s133, %s135
      %p139 = scmp.eq.s32.totalorder %s15, 0
      %p140 = por %p138, %p139
      %p141 = scmp.ne.s32.totalorder %s133, %s135
      %p142 = scmp.eq.s32.totalorder %s20, 3
      %p143 = por %p141, %p142
      %p144 = scmp.ne.s32.totalorder %s135, %s136
      %p145 = scmp.eq.s32.totalorder %s20, 0
      %p146 = por %p144, %p145
      %p147 = scmp.ne.s32.totalorder %s135, %s136
      %p148 = scmp.eq.s32.totalorder %s21, 3
      %p149 = por %p147, %p148
      %p151 = scmp.ne.s32.totalorder %s136, %s150
      %p152 = scmp.eq.s32.totalorder %s21, 0
      %p153 = por %p151, %p152
      %s155 = sadd.s32 %s154, 1
      %p158 = scmp.eq.s32.totalorder %s15, 3
      %p159 = scmp.ne.s32.totalorder %s154, %s156
      %p160 = scmp.eq.s32.totalorder %s15, 0
      %p161 = por %p159, %p160
      %p162 = scmp.ne.s32.totalorder %s154, %s156
      %p163 = scmp.eq.s32.totalorder %s20, 3
      %p164 = por %p162, %p163
      %p165 = scmp.ne.s32.totalorder %s156, %s157
      %p166 = scmp.eq.s32.totalorder %s20, 0
      %p167 = por %p165, %p166
      %p168 = scmp.ne.s32.totalorder %s156, %s157
      %p169 = scmp.eq.s32.totalorder %s21, 3
      %p170 = por %p168, %p169
      %p172 = scmp.ne.s32.totalorder %s157, %s171
      %p173 = scmp.eq.s32.totalorder %s21, 0
      %p174 = por %p172, %p173
      %s175 = ssub.s32 %s22, %s34
      %s176 = ssub.s32 %s23, %s30
      %s177 = sor.u32 %s175, %s176
      %p178 = scmp.eq.s32.totalorder %s177, 0
      %s180 = sadd.s32 %s179, 1
      %s181 = scalar_select %p178, %s179, %s180
      %p184 = pneg %p178
      %p185 = scmp.eq.s32.totalorder %s15, 3
      %p186 = por %p184, %p185
      %p187 = scmp.ne.s32.totalorder %s179, %s182
      %p188 = scmp.eq.s32.totalorder %s15, 0
      %p189 = por %p187, %p188
      %p190 = scmp.ne.s32.totalorder %s179, %s182
      %p191 = scmp.eq.s32.totalorder %s20, 3
      %p192 = por %p190, %p191
      %p193 = scmp.ne.s32.totalorder %s182, %s183
      %p194 = scmp.eq.s32.totalorder %s20, 0
      %p195 = por %p193, %p194
      %p196 = scmp.ne.s32.totalorder %s182, %s183
      %p197 = scmp.eq.s32.totalorder %s21, 3
      %p198 = por %p196, %p197
      %p200 = scmp.ne.s32.totalorder %s183, %s199
      %p201 = scmp.eq.s32.totalorder %s21, 0
      %p202 = por %p200, %p201
      %p203 = scmp.le.s32.totalorder 1, %s15
      %p204 = scmp.lt.s32.totalorder %s15, 5
      %p205 = pnand %p203, %p204
      %p206 = pneg %p205
      // Predicated region
      $region9: #{tpu_custom_call.1} parent=5 // pred_check
        _
      $region10: #{tpu_custom_call.1} parent=5 // pred_check_branch
        %208 = sbr.rel (%p205) target = $region12
      $region11: #{tpu_custom_call.1} parent=5 // pred_region
        %s209 = ssub.s32 %s15, 1
        // Predicated region
        $region13: #{tpu_custom_call.1} parent=11 // pred_check
          %p210 = pneg %p104
        $region14: #{tpu_custom_call.1} parent=11 // pred_check_branch
          %212 = sbr.rel (%p210) target = $region16
        $region15: #{tpu_custom_call.1} parent=11 // pred_region
          _
        $region16: #{tpu_custom_call.1} parent=11 // pred_fallthru
          _
        // Predicated region
        $region17: #{tpu_custom_call.1} parent=11 // pred_check
          %p213 = pneg %p125
        $region18: #{tpu_custom_call.1} parent=11 // pred_check_branch
          %215 = sbr.rel (%p213) target = $region20
        $region19: #{tpu_custom_call.1} parent=11 // pred_region
          _
        $region20: #{tpu_custom_call.1} parent=11 // pred_fallthru
          _
        // Predicated region
        $region21: #{tpu_custom_call.1} parent=11 // pred_check
          %p216 = pneg %p146
        $region22: #{tpu_custom_call.1} parent=11 // pred_check_branch
          %218 = sbr.rel (%p216) target = $region24
        $region23: #{tpu_custom_call.1} parent=11 // pred_region
          _
        $region24: #{tpu_custom_call.1} parent=11 // pred_fallthru
          _
        // Predicated region
        $region25: #{tpu_custom_call.1} parent=11 // pred_check
          %p219 = pneg %p167
        $region26: #{tpu_custom_call.1} parent=11 // pred_check_branch
          %221 = sbr.rel (%p219) target = $region28
        $region27: #{tpu_custom_call.1} parent=11 // pred_region
          _
        $region28: #{tpu_custom_call.1} parent=11 // pred_fallthru
          _
      $region12: #{tpu_custom_call.1} parent=5 // pred_fallthru
        _
      %p222 = scmp.lt.s32.totalorder %s15, 4
      // Predicated region
      $region29: #{tpu_custom_call.1} parent=5 // pred_check
        %p223 = pneg %p222
      $region30: #{tpu_custom_call.1} parent=5 // pred_check_branch
        %225 = sbr.rel (%p223) target = $region32
      $region31: #{tpu_custom_call.1} parent=5 // pred_region
        // Predicated region
        $region33: #{tpu_custom_call.1} parent=31 // pred_check
          %p226 = pneg %p49
        $region34: #{tpu_custom_call.1} parent=31 // pred_check_branch
          %228 = sbr.rel (%p226) target = $region36
        $region35: #{tpu_custom_call.1} parent=31 // pred_region
          %p229 = scmp.lt.s32.totalorder %s22, 1
          %s230 = scalar_select %p229, %s22, 1
          %p231 = scmp.lt.s32.totalorder %s23, 1
          %s232 = scalar_select %p231, %s23, 1
          %s233 = smul.addr %s232, 25
          %s234 = smul.addr %s230, 50
          %s235 = sadd.s32 %s233, %s234
          %s236 = smul.addr %s235, 4
          %s237 = scalar_lea.vmem %s0, %s236
        $region36: #{tpu_custom_call.1} parent=31 // pred_fallthru
          _
        // Predicated region
        $region37: #{tpu_custom_call.1} parent=31 // pred_check
          %p238 = pneg %p77
        $region38: #{tpu_custom_call.1} parent=31 // pred_check_branch
          %240 = sbr.rel (%p238) target = $region40
        $region39: #{tpu_custom_call.1} parent=31 // pred_region
          %p241 = scmp.lt.s32.totalorder %s22, 1
          %s242 = scalar_select %p241, %s22, 1
          %p243 = scmp.lt.s32.totalorder %s23, 1
          %s244 = scalar_select %p243, %s23, 1
          %s245 = smul.addr %s244, 18
          %s246 = smul.addr %s242, 36
          %s247 = sadd.s32 %s245, %s246
          %s248 = smul.addr %s247, 4
          %s249 = scalar_lea.vmem %s1, %s248
        $region40: #{tpu_custom_call.1} parent=31 // pred_fallthru
          _
      $region32: #{tpu_custom_call.1} parent=5 // pred_fallthru
        _
      %p250 = scmp.le.s32.totalorder 1, %s15
      %p251 = scmp.lt.s32.totalorder %s15, 5
      %p252 = pnand %p250, %p251
      %p253 = pneg %p252
      // Predicated region
      $region41: #{tpu_custom_call.1} parent=5 // pred_check
        _
      $region42: #{tpu_custom_call.1} parent=5 // pred_check_branch
        %255 = sbr.rel (%p252) target = $region44
      $region43: #{tpu_custom_call.1} parent=5 // pred_region
        %s256 = ssub.s32 %s15, 1
        %p257 = scmp.lt.s32.totalorder %s24, 1
        %s258 = scalar_select %p257, %s24, 1
        %p259 = scmp.lt.s32.totalorder %s25, 1
        %s260 = scalar_select %p259, %s25, 1
        %s261 = smul.addr %s260, 25
        %s262 = smul.addr %s258, 50
        %s263 = sadd.s32 %s261, %s262
        %s264 = smul.addr %s263, 4
        %s265 = scalar_lea.vmem %s0, %s264
        %p266 = pneg %p55
        %p267 = pneg %p52
        %p268 = scmp.lt.s32.totalorder %s24, 1
        %s269 = scalar_select %p268, %s24, 1
        %p270 = scmp.lt.s32.totalorder %s25, 1
        %s271 = scalar_select %p270, %s25, 1
        %s272 = smul.addr %s271, 18
        %s273 = smul.addr %s269, 36
        %s274 = sadd.s32 %s272, %s273
        %s275 = smul.addr %s274, 4
        %s276 = scalar_lea.vmem %s1, %s275
        %p277 = pneg %p83
        %p278 = pneg %p80
        %p279 = pneg %p104
        %p280 = pneg %p101
        %p281 = pneg %p125
        %p282 = pneg %p122
        %p283 = pneg %p146
        %p284 = pneg %p143
        %p285 = pneg %p167
        %p286 = pneg %p164
        %p287 = pneg %p195
        %p288 = pneg %p192
        %s289 = sand.u32 %s182, 1
        %s290 = scalar_lea.sflag [#allocation3], %s289
        %s291 = sand.u32 %s182, 1
        %s292 = smul.addr %s291, 144
        %s293 = scalar_lea.vmem [#allocation2], %s292
        %p294 = scmp.lt.s32.totalorder %s24, 1
        %s295 = scalar_select %p294, %s24, 1
        %p296 = scmp.lt.s32.totalorder %s25, 1
        %s297 = scalar_select %p296, %s25, 1
        %s298 = smul.addr %s297, 25
        %s299 = smul.addr %s295, 50
        %s300 = sadd.s32 %s298, %s299
        %s301 = smul.addr %s300, 4
        %s302 = scalar_lea.vmem %s0, %s301
        %p303 = scmp.lt.s32.totalorder %s24, 1
        %s304 = scalar_select %p303, %s24, 1
        %p305 = scmp.lt.s32.totalorder %s25, 1
        %s306 = scalar_select %p305, %s25, 1
        %s307 = smul.addr %s306, 18
        %s308 = smul.addr %s304, 36
        %s309 = sadd.s32 %s307, %s308
        %s310 = smul.addr %s309, 4
        %s311 = scalar_lea.vmem %s1, %s310
        %v312 = vld [vmem:[%s302] sm:$0xf]
        %v313 = vld [vmem:[%s302 + $0x4] sm:$0xf]
        %v314 = vld [vmem:[%s302 + $0x8] sm:$0xf]
        %v315 = vld [vmem:[%s302 + $0xc] sm:$0xf]
        %v316 = vld [vmem:[%s302 + $0x10] sm:$0xf]
        %v317 = vld [vmem:[%s302 + $0x14] sm:$0xf]
        %v318 = vld [vmem:[%s302 + $0x18] sm:$0xf]
        %v319 = vld [vmem:[%s302 + $0x1c] sm:$0xf]
        %v320 = vld [vmem:[%s302 + $0x20] sm:$0xf]
        %v321 = vld [vmem:[%s302 + $0x24] sm:$0xf]
        %v322 = vld [vmem:[%s302 + $0x28] sm:$0xf]
        %v323 = vld [vmem:[%s302 + $0x2c] sm:$0xf]
        %v324 = vld [vmem:[%s302 + $0x30] sm:$0xf]
        %v325 = vld [vmem:[%s302 + $0x34] sm:$0xf]
        %v326 = vld [vmem:[%s302 + $0x38] sm:$0xf]
        %v327 = vld [vmem:[%s302 + $0x3c] sm:$0xf]
        %v328 = vld [vmem:[%s302 + $0x40] sm:$0xf]
        %v329 = vld [vmem:[%s302 + $0x44] sm:$0xf]
        %v330 = vld [vmem:[%s302 + $0x48] sm:$0xf]
        %v331 = vld [vmem:[%s302 + $0x4c] sm:$0xf]
        %v332 = vld [vmem:[%s302 + $0x50] sm:$0xf]
        %v333 = vld [vmem:[%s302 + $0x54] sm:$0xf]
        %v334 = vld [vmem:[%s302 + $0x58] sm:$0xf]
        %v335 = vunpack.c.l.bf16 %v312
        %v336 = vunpack.c.l.bf16 %v313
        %v337 = vunpack.c.l.bf16 %v314
        %v338 = vunpack.c.l.bf16 %v315
        %v339 = vunpack.c.l.bf16 %v316
        %v340 = vunpack.c.l.bf16 %v317
        %v341 = vunpack.c.l.bf16 %v318
        %v342 = vunpack.c.l.bf16 %v319
        %v343 = vunpack.c.l.bf16 %v320
        %v344 = vunpack.c.l.bf16 %v321
        %v345 = vunpack.c.l.bf16 %v322
        %v346 = vunpack.c.l.bf16 %v323
        %v347 = vunpack.c.l.bf16 %v324
        %v348 = vunpack.c.l.bf16 %v325
        %v349 = vunpack.c.l.bf16 %v326
        %v350 = vunpack.c.l.bf16 %v327
        %v351 = vunpack.c.l.bf16 %v328
        %v352 = vunpack.c.l.bf16 %v329
        %v353 = vunpack.c.l.bf16 %v330
        %v354 = vunpack.c.l.bf16 %v331
        %v355 = vunpack.c.l.bf16 %v332
        %v356 = vunpack.c.l.bf16 %v333
        %v357 = vunpack.c.l.bf16 %v334
        %v358 = vld [vmem:[%s2] sm:$0xff]
        %v359 = vld [vmem:[%s2 + $0x8] sm:$0xff]
        %v360 = vld [vmem:[%s2 + $0x10] sm:$0xff]
        %v361 = vld [vmem:[%s2 + $0x18] sm:$0xff]
        %v362 = vld [vmem:[%s2 + $0x20] sm:$0xff]
        %v363 = vld [vmem:[%s2 + $0x28] sm:$0xff]
        %v364 = vld [vmem:[%s2 + $0x30] sm:$0xff]
        %v365 = vld [vmem:[%s2 + $0x38] sm:$0xff]
        %s366 = scalar_lea.vmem %s2, 64
        %v367 = vld [vmem:[%s366] sm:$0xff]
        %v368 = vld [vmem:[%s366 + $0x8] sm:$0xff]
        %v369 = vld [vmem:[%s366 + $0x10] sm:$0xff]
        %v370 = vld [vmem:[%s366 + $0x18] sm:$0xff]
        %v371 = vld [vmem:[%s366 + $0x20] sm:$0xff]
        %v372 = vld [vmem:[%s366 + $0x28] sm:$0xff]
        %v373 = vld [vmem:[%s366 + $0x30] sm:$0xff]
        %v374 = vld [vmem:[%s366 + $0x38] sm:$0xff]
        %vm394 = vcmask 1046528
        %v395 = vrot.slane %v335, 1
        %v396 = vrot.slane %v336, 1
        %v397 = vsel %vm394, %v395, %v396
        %v398 = vrot.slane %v337, 1
        %v399 = vsel %vm394, %v396, %v398
        %v400 = vrot.slane %v338, 1
        %v401 = vsel %vm394, %v398, %v400
        %v402 = vrot.slane %v339, 1
        %v403 = vsel %vm394, %v400, %v402
        %v404 = vrot.slane %v340, 1
        %v405 = vsel %vm394, %v402, %v404
        %v406 = vrot.slane %v341, 1
        %v407 = vsel %vm394, %v404, %v406
        %v408 = vrot.slane %v342, 1
        %v409 = vsel %vm394, %v406, %v408
        %v410 = vrot.slane %v343, 1
        %v411 = vsel %vm394, %v408, %v410
        %v412 = vrot.slane %v344, 1
        %v413 = vsel %vm394, %v410, %v412
        %v414 = vrot.slane %v345, 1
        %v415 = vsel %vm394, %v412, %v414
        %v416 = vrot.slane %v346, 1
        %v417 = vsel %vm394, %v414, %v416
        %v418 = vrot.slane %v347, 1
        %v419 = vsel %vm394, %v416, %v418
        %v420 = vrot.slane %v348, 1
        %v421 = vsel %vm394, %v418, %v420
        %v422 = vrot.slane %v349, 1
        %v423 = vsel %vm394, %v420, %v422
        %v424 = vrot.slane %v350, 1
        %v425 = vsel %vm394, %v422, %v424
        %v426 = vrot.slane %v351, 1
        %v427 = vsel %vm394, %v424, %v426
        %v428 = vrot.slane %v352, 1
        %v429 = vsel %vm394, %v426, %v428
        %v430 = vrot.slane %v353, 1
        %v431 = vsel %vm394, %v428, %v430
        %vm432 = vcmask 261120
        %v433 = vsel %vm432, %v397, 0
        %v435 = vsel %vm432, %v399, 0
        %v437 = vsel %vm432, %v401, 0
        %v439 = vsel %vm432, %v403, 0
        %v441 = vsel %vm432, %v405, 0
        %v443 = vsel %vm432, %v407, 0
        %v445 = vsel %vm432, %v409, 0
        %v447 = vsel %vm432, %v411, 0
        %v449 = vsel %vm432, %v413, 0
        %v451 = vsel %vm432, %v415, 0
        %v453 = vsel %vm432, %v417, 0
        %v455 = vsel %vm432, %v419, 0
        %v457 = vsel %vm432, %v421, 0
        %v459 = vsel %vm432, %v423, 0
        %v461 = vsel %vm432, %v425, 0
        %v463 = vsel %vm432, %v427, 0
        %v465 = vsel %vm432, %v429, 0
        %v467 = vsel %vm432, %v431, 0
        %469 = vmatpush.msra.mxu0 0.0
        %470 = vmatpush.msra.mxu0 0.0
        %471 = vmatpush.msra.mxu0 0.0
        %472 = vmatpush.msra.mxu0 0.0
        %473 = vmatpush.msra.mxu0 0.0
        %474 = vmatpush.msra.mxu0 0.0
        %475 = vmatpush.msra.mxu0 0.0
        %476 = vmatpush.msra.mxu0 0.0
        %477 = vmatpush.msra.mxu0 0.0
        %478 = vmatpush.msra.mxu0 0.0
        %479 = vmatpush.msra.mxu0 0.0
        %480 = vmatpush.msra.mxu0 0.0
        %481 = vmatpush.msra.mxu0 %v373
        %482 = vmatpush.msra.mxu0 %v371
        %483 = vmatpush.msra.mxu0 %v369
        %484 = vmatpush.msra.mxu0 %v367
        %485 = vmatmul.f32.gmra.mxu0 %v433
        %v486 = vpop.f32.mrf.mxu0
        %v487 = vadd.f32 0.0, %v486
        %488 = vmatmul.f32.gmra.mxu0 %v435
        %v489 = vpop.f32.mrf.mxu0
        %v490 = vadd.f32 0.0, %v489
        %491 = vmatmul.f32.gmra.mxu0 %v437
        %v492 = vpop.f32.mrf.mxu0
        %v493 = vadd.f32 0.0, %v492
        %494 = vmatmul.f32.gmra.mxu0 %v439
        %v495 = vpop.f32.mrf.mxu0
        %v496 = vadd.f32 0.0, %v495
        %497 = vmatmul.f32.gmra.mxu0 %v441
        %v498 = vpop.f32.mrf.mxu0
        %v499 = vadd.f32 0.0, %v498
        %500 = vmatmul.f32.gmra.mxu0 %v443
        %v501 = vpop.f32.mrf.mxu0
        %v502 = vadd.f32 0.0, %v501
        %503 = vmatmul.f32.gmra.mxu0 %v445
        %v504 = vpop.f32.mrf.mxu0
        %v505 = vadd.f32 0.0, %v504
        %506 = vmatmul.f32.gmra.mxu0 %v447
        %v507 = vpop.f32.mrf.mxu0
        %v508 = vadd.f32 0.0, %v507
        %509 = vmatmul.f32.gmra.mxu0 %v449
        %v510 = vpop.f32.mrf.mxu0
        %v511 = vadd.f32 0.0, %v510
        %512 = vmatmul.f32.gmra.mxu0 %v451
        %v513 = vpop.f32.mrf.mxu0
        %v514 = vadd.f32 0.0, %v513
        %515 = vmatmul.f32.gmra.mxu0 %v453
        %v516 = vpop.f32.mrf.mxu0
        %v517 = vadd.f32 0.0, %v516
        %518 = vmatmul.f32.gmra.mxu0 %v455
        %v519 = vpop.f32.mrf.mxu0
        %v520 = vadd.f32 0.0, %v519
        %521 = vmatmul.f32.gmra.mxu0 %v457
        %v522 = vpop.f32.mrf.mxu0
        %v523 = vadd.f32 0.0, %v522
        %524 = vmatmul.f32.gmra.mxu0 %v459
        %v525 = vpop.f32.mrf.mxu0
        %v526 = vadd.f32 0.0, %v525
        %527 = vmatmul.f32.gmra.mxu0 %v461
        %v528 = vpop.f32.mrf.mxu0
        %v529 = vadd.f32 0.0, %v528
        %530 = vmatmul.f32.gmra.mxu0 %v463
        %v531 = vpop.f32.mrf.mxu0
        %v532 = vadd.f32 0.0, %v531
        %533 = vmatmul.f32.gmra.mxu0 %v465
        %v534 = vpop.f32.mrf.mxu0
        %v535 = vadd.f32 0.0, %v534
        %536 = vmatmul.f32.gmra.mxu0 %v467
        %v537 = vpop.f32.mrf.mxu0
        %v538 = vadd.f32 0.0, %v537
        %539 = vdwg.mxu0
        %540 = vmatpush.msra.mxu0 0.0
        %541 = vmatpush.msra.mxu0 0.0
        %542 = vmatpush.msra.mxu0 0.0
        %543 = vmatpush.msra.mxu0 0.0
        %544 = vmatpush.msra.mxu0 0.0
        %545 = vmatpush.msra.mxu0 0.0
        %546 = vmatpush.msra.mxu0 0.0
        %547 = vmatpush.msra.mxu0 0.0
        %548 = vmatpush.msra.mxu0 0.0
        %549 = vmatpush.msra.mxu0 0.0
        %550 = vmatpush.msra.mxu0 0.0
        %551 = vmatpush.msra.mxu0 0.0
        %552 = vmatpush.msra.mxu0 %v374
        %553 = vmatpush.msra.mxu0 %v372
        %554 = vmatpush.msra.mxu0 %v370
        %555 = vmatpush.msra.mxu0 %v368
        %556 = vmatmul.f32.gmra.mxu0 %v433
        %v557 = vpop.f32.mrf.mxu0
        %v558 = vadd.f32 0.0, %v557
        %559 = vmatmul.f32.gmra.mxu0 %v435
        %v560 = vpop.f32.mrf.mxu0
        %v561 = vadd.f32 0.0, %v560
        %562 = vmatmul.f32.gmra.mxu0 %v437
        %v563 = vpop.f32.mrf.mxu0
        %v564 = vadd.f32 0.0, %v563
        %565 = vmatmul.f32.gmra.mxu0 %v439
        %v566 = vpop.f32.mrf.mxu0
        %v567 = vadd.f32 0.0, %v566
        %568 = vmatmul.f32.gmra.mxu0 %v441
        %v569 = vpop.f32.mrf.mxu0
        %v570 = vadd.f32 0.0, %v569
        %571 = vmatmul.f32.gmra.mxu0 %v443
        %v572 = vpop.f32.mrf.mxu0
        %v573 = vadd.f32 0.0, %v572
        %574 = vmatmul.f32.gmra.mxu0 %v445
        %v575 = vpop.f32.mrf.mxu0
        %v576 = vadd.f32 0.0, %v575
        %577 = vmatmul.f32.gmra.mxu0 %v447
        %v578 = vpop.f32.mrf.mxu0
        %v579 = vadd.f32 0.0, %v578
        %580 = vmatmul.f32.gmra.mxu0 %v449
        %v581 = vpop.f32.mrf.mxu0
        %v582 = vadd.f32 0.0, %v581
        %583 = vmatmul.f32.gmra.mxu0 %v451
        %v584 = vpop.f32.mrf.mxu0
        %v585 = vadd.f32 0.0, %v584
        %586 = vmatmul.f32.gmra.mxu0 %v453
        %v587 = vpop.f32.mrf.mxu0
        %v588 = vadd.f32 0.0, %v587
        %589 = vmatmul.f32.gmra.mxu0 %v455
        %v590 = vpop.f32.mrf.mxu0
        %v591 = vadd.f32 0.0, %v590
        %592 = vmatmul.f32.gmra.mxu0 %v457
        %v593 = vpop.f32.mrf.mxu0
        %v594 = vadd.f32 0.0, %v593
        %595 = vmatmul.f32.gmra.mxu0 %v459
        %v596 = vpop.f32.mrf.mxu0
        %v597 = vadd.f32 0.0, %v596
        %598 = vmatmul.f32.gmra.mxu0 %v461
        %v599 = vpop.f32.mrf.mxu0
        %v600 = vadd.f32 0.0, %v599
        %601 = vmatmul.f32.gmra.mxu0 %v463
        %v602 = vpop.f32.mrf.mxu0
        %v603 = vadd.f32 0.0, %v602
        %604 = vmatmul.f32.gmra.mxu0 %v465
        %v605 = vpop.f32.mrf.mxu0
        %v606 = vadd.f32 0.0, %v605
        %607 = vmatmul.f32.gmra.mxu0 %v467
        %v608 = vpop.f32.mrf.mxu0
        %v609 = vadd.f32 0.0, %v608
        %610 = vdwg.mxu0
        %v611 = vsel %vm432, %v335, 0
        %v613 = vsel %vm432, %v336, 0
        %v615 = vsel %vm432, %v337, 0
        %v617 = vsel %vm432, %v338, 0
        %v619 = vsel %vm432, %v339, 0
        %v621 = vsel %vm432, %v340, 0
        %v623 = vsel %vm432, %v341, 0
        %v625 = vsel %vm432, %v342, 0
        %v627 = vsel %vm432, %v343, 0
        %v629 = vsel %vm432, %v344, 0
        %v631 = vsel %vm432, %v345, 0
        %v633 = vsel %vm432, %v346, 0
        %v635 = vsel %vm432, %v347, 0
        %v637 = vsel %vm432, %v348, 0
        %v639 = vsel %vm432, %v349, 0
        %v641 = vsel %vm432, %v350, 0
        %v643 = vsel %vm432, %v351, 0
        %v645 = vsel %vm432, %v352, 0
        %647 = vmatpush.msra.mxu0 0.0
        %648 = vmatpush.msra.mxu0 0.0
        %649 = vmatpush.msra.mxu0 0.0
        %650 = vmatpush.msra.mxu0 0.0
        %651 = vmatpush.msra.mxu0 0.0
        %652 = vmatpush.msra.mxu0 0.0
        %653 = vmatpush.msra.mxu0 0.0
        %654 = vmatpush.msra.mxu0 0.0
        %655 = vmatpush.msra.mxu0 0.0
        %656 = vmatpush.msra.mxu0 0.0
        %657 = vmatpush.msra.mxu0 0.0
        %658 = vmatpush.msra.mxu0 0.0
        %659 = vmatpush.msra.mxu0 %v364
        %660 = vmatpush.msra.mxu0 %v362
        %661 = vmatpush.msra.mxu0 %v360
        %662 = vmatpush.msra.mxu0 %v358
        %663 = vmatmul.f32.gmra.mxu0 %v611
        %v664 = vpop.f32.mrf.mxu0
        %v665 = vadd.f32 %v487, %v664
        %666 = vmatmul.f32.gmra.mxu0 %v613
        %v667 = vpop.f32.mrf.mxu0
        %v668 = vadd.f32 %v490, %v667
        %669 = vmatmul.f32.gmra.mxu0 %v615
        %v670 = vpop.f32.mrf.mxu0
        %v671 = vadd.f32 %v493, %v670
        %672 = vmatmul.f32.gmra.mxu0 %v617
        %v673 = vpop.f32.mrf.mxu0
        %v674 = vadd.f32 %v496, %v673
        %675 = vmatmul.f32.gmra.mxu0 %v619
        %v676 = vpop.f32.mrf.mxu0
        %v677 = vadd.f32 %v499, %v676
        %678 = vmatmul.f32.gmra.mxu0 %v621
        %v679 = vpop.f32.mrf.mxu0
        %v680 = vadd.f32 %v502, %v679
        %681 = vmatmul.f32.gmra.mxu0 %v623
        %v682 = vpop.f32.mrf.mxu0
        %v683 = vadd.f32 %v505, %v682
        %684 = vmatmul.f32.gmra.mxu0 %v625
        %v685 = vpop.f32.mrf.mxu0
        %v686 = vadd.f32 %v508, %v685
        %687 = vmatmul.f32.gmra.mxu0 %v627
        %v688 = vpop.f32.mrf.mxu0
        %v689 = vadd.f32 %v511, %v688
        %690 = vmatmul.f32.gmra.mxu0 %v629
        %v691 = vpop.f32.mrf.mxu0
        %v692 = vadd.f32 %v514, %v691
        %693 = vmatmul.f32.gmra.mxu0 %v631
        %v694 = vpop.f32.mrf.mxu0
        %v695 = vadd.f32 %v517, %v694
        %696 = vmatmul.f32.gmra.mxu0 %v633
        %v697 = vpop.f32.mrf.mxu0
        %v698 = vadd.f32 %v520, %v697
        %699 = vmatmul.f32.gmra.mxu0 %v635
        %v700 = vpop.f32.mrf.mxu0
        %v701 = vadd.f32 %v523, %v700
        %702 = vmatmul.f32.gmra.mxu0 %v637
        %v703 = vpop.f32.mrf.mxu0
        %v704 = vadd.f32 %v526, %v703
        %705 = vmatmul.f32.gmra.mxu0 %v639
        %v706 = vpop.f32.mrf.mxu0
        %v707 = vadd.f32 %v529, %v706
        %708 = vmatmul.f32.gmra.mxu0 %v641
        %v709 = vpop.f32.mrf.mxu0
        %v710 = vadd.f32 %v532, %v709
        %711 = vmatmul.f32.gmra.mxu0 %v643
        %v712 = vpop.f32.mrf.mxu0
        %v713 = vadd.f32 %v535, %v712
        %714 = vmatmul.f32.gmra.mxu0 %v645
        %v715 = vpop.f32.mrf.mxu0
        %v716 = vadd.f32 %v538, %v715
        %717 = vdwg.mxu0
        %718 = vmatpush.msra.mxu0 0.0
        %719 = vmatpush.msra.mxu0 0.0
        %720 = vmatpush.msra.mxu0 0.0
        %721 = vmatpush.msra.mxu0 0.0
        %722 = vmatpush.msra.mxu0 0.0
        %723 = vmatpush.msra.mxu0 0.0
        %724 = vmatpush.msra.mxu0 0.0
        %725 = vmatpush.msra.mxu0 0.0
        %726 = vmatpush.msra.mxu0 0.0
        %727 = vmatpush.msra.mxu0 0.0
        %728 = vmatpush.msra.mxu0 0.0
        %729 = vmatpush.msra.mxu0 0.0
        %730 = vmatpush.msra.mxu0 %v365
        %731 = vmatpush.msra.mxu0 %v363
        %732 = vmatpush.msra.mxu0 %v361
        %733 = vmatpush.msra.mxu0 %v359
        %734 = vmatmul.f32.gmra.mxu0 %v611
        %v735 = vpop.f32.mrf.mxu0
        %v736 = vadd.f32 %v558, %v735
        %737 = vmatmul.f32.gmra.mxu0 %v613
        %v738 = vpop.f32.mrf.mxu0
        %v739 = vadd.f32 %v561, %v738
        %740 = vmatmul.f32.gmra.mxu0 %v615
        %v741 = vpop.f32.mrf.mxu0
        %v742 = vadd.f32 %v564, %v741
        %743 = vmatmul.f32.gmra.mxu0 %v617
        %v744 = vpop.f32.mrf.mxu0
        %v745 = vadd.f32 %v567, %v744
        %746 = vmatmul.f32.gmra.mxu0 %v619
        %v747 = vpop.f32.mrf.mxu0
        %v748 = vadd.f32 %v570, %v747
        %749 = vmatmul.f32.gmra.mxu0 %v621
        %v750 = vpop.f32.mrf.mxu0
        %v751 = vadd.f32 %v573, %v750
        %752 = vmatmul.f32.gmra.mxu0 %v623
        %v753 = vpop.f32.mrf.mxu0
        %v754 = vadd.f32 %v576, %v753
        %755 = vmatmul.f32.gmra.mxu0 %v625
        %v756 = vpop.f32.mrf.mxu0
        %v757 = vadd.f32 %v579, %v756
        %758 = vmatmul.f32.gmra.mxu0 %v627
        %v759 = vpop.f32.mrf.mxu0
        %v760 = vadd.f32 %v582, %v759
        %761 = vmatmul.f32.gmra.mxu0 %v629
        %v762 = vpop.f32.mrf.mxu0
        %v763 = vadd.f32 %v585, %v762
        %764 = vmatmul.f32.gmra.mxu0 %v631
        %v765 = vpop.f32.mrf.mxu0
        %v766 = vadd.f32 %v588, %v765
        %767 = vmatmul.f32.gmra.mxu0 %v633
        %v768 = vpop.f32.mrf.mxu0
        %v769 = vadd.f32 %v591, %v768
        %770 = vmatmul.f32.gmra.mxu0 %v635
        %v771 = vpop.f32.mrf.mxu0
        %v772 = vadd.f32 %v594, %v771
        %773 = vmatmul.f32.gmra.mxu0 %v637
        %v774 = vpop.f32.mrf.mxu0
        %v775 = vadd.f32 %v597, %v774
        %776 = vmatmul.f32.gmra.mxu0 %v639
        %v777 = vpop.f32.mrf.mxu0
        %v778 = vadd.f32 %v600, %v777
        %779 = vmatmul.f32.gmra.mxu0 %v641
        %v780 = vpop.f32.mrf.mxu0
        %v781 = vadd.f32 %v603, %v780
        %782 = vmatmul.f32.gmra.mxu0 %v643
        %v783 = vpop.f32.mrf.mxu0
        %v784 = vadd.f32 %v606, %v783
        %785 = vmatmul.f32.gmra.mxu0 %v645
        %v786 = vpop.f32.mrf.mxu0
        %v787 = vadd.f32 %v609, %v786
        %788 = vdwg.mxu0
        %s789 = scalar_lea.vmem %s2, 128
        %v790 = vld [vmem:[%s789] sm:$0xff]
        %v791 = vld [vmem:[%s789 + $0x8] sm:$0xff]
        %v792 = vld [vmem:[%s789 + $0x10] sm:$0xff]
        %v793 = vld [vmem:[%s789 + $0x18] sm:$0xff]
        %v794 = vld [vmem:[%s789 + $0x20] sm:$0xff]
        %v795 = vld [vmem:[%s789 + $0x28] sm:$0xff]
        %v796 = vld [vmem:[%s789 + $0x30] sm:$0xff]
        %v797 = vld [vmem:[%s789 + $0x38] sm:$0xff]
        %vm798 = vcmask 1045504
        %v799 = vrot.slane %v335, 2
        %v800 = vrot.slane %v336, 2
        %v801 = vsel %vm798, %v799, %v800
        %v802 = vrot.slane %v337, 2
        %v803 = vsel %vm798, %v800, %v802
        %v804 = vrot.slane %v338, 2
        %v805 = vsel %vm798, %v802, %v804
        %v806 = vrot.slane %v339, 2
        %v807 = vsel %vm798, %v804, %v806
        %v808 = vrot.slane %v340, 2
        %v809 = vsel %vm798, %v806, %v808
        %v810 = vrot.slane %v341, 2
        %v811 = vsel %vm798, %v808, %v810
        %v812 = vrot.slane %v342, 2
        %v813 = vsel %vm798, %v810, %v812
        %v814 = vrot.slane %v343, 2
        %v815 = vsel %vm798, %v812, %v814
        %v816 = vrot.slane %v344, 2
        %v817 = vsel %vm798, %v814, %v816
        %v818 = vrot.slane %v345, 2
        %v819 = vsel %vm798, %v816, %v818
        %v820 = vrot.slane %v346, 2
        %v821 = vsel %vm798, %v818, %v820
        %v822 = vrot.slane %v347, 2
        %v823 = vsel %vm798, %v820, %v822
        %v824 = vrot.slane %v348, 2
        %v825 = vsel %vm798, %v822, %v824
        %v826 = vrot.slane %v349, 2
        %v827 = vsel %vm798, %v824, %v826
        %v828 = vrot.slane %v350, 2
        %v829 = vsel %vm798, %v826, %v828
        %v830 = vrot.slane %v351, 2
        %v831 = vsel %vm798, %v828, %v830
        %v832 = vrot.slane %v352, 2
        %v833 = vsel %vm798, %v830, %v832
        %v834 = vrot.slane %v353, 2
        %v835 = vsel %vm798, %v832, %v834
        %v836 = vsel %vm432, %v801, 0
        %v838 = vsel %vm432, %v803, 0
        %v840 = vsel %vm432, %v805, 0
        %v842 = vsel %vm432, %v807, 0
        %v844 = vsel %vm432, %v809, 0
        %v846 = vsel %vm432, %v811, 0
        %v848 = vsel %vm432, %v813, 0
        %v850 = vsel %vm432, %v815, 0
        %v852 = vsel %vm432, %v817, 0
        %v854 = vsel %vm432, %v819, 0
        %v856 = vsel %vm432, %v821, 0
        %v858 = vsel %vm432, %v823, 0
        %v860 = vsel %vm432, %v825, 0
        %v862 = vsel %vm432, %v827, 0
        %v864 = vsel %vm432, %v829, 0
        %v866 = vsel %vm432, %v831, 0
        %v868 = vsel %vm432, %v833, 0
        %v870 = vsel %vm432, %v835, 0
        %872 = vmatpush.msra.mxu0 0.0
        %873 = vmatpush.msra.mxu0 0.0
        %874 = vmatpush.msra.mxu0 0.0
        %875 = vmatpush.msra.mxu0 0.0
        %876 = vmatpush.msra.mxu0 0.0
        %877 = vmatpush.msra.mxu0 0.0
        %878 = vmatpush.msra.mxu0 0.0
        %879 = vmatpush.msra.mxu0 0.0
        %880 = vmatpush.msra.mxu0 0.0
        %881 = vmatpush.msra.mxu0 0.0
        %882 = vmatpush.msra.mxu0 0.0
        %883 = vmatpush.msra.mxu0 0.0
        %884 = vmatpush.msra.mxu0 %v796
        %885 = vmatpush.msra.mxu0 %v794
        %886 = vmatpush.msra.mxu0 %v792
        %887 = vmatpush.msra.mxu0 %v790
        %888 = vmatmul.f32.gmra.mxu0 %v836
        %v889 = vpop.f32.mrf.mxu0
        %v890 = vadd.f32 0.0, %v889
        %891 = vmatmul.f32.gmra.mxu0 %v838
        %v892 = vpop.f32.mrf.mxu0
        %v893 = vadd.f32 0.0, %v892
        %894 = vmatmul.f32.gmra.mxu0 %v840
        %v895 = vpop.f32.mrf.mxu0
        %v896 = vadd.f32 0.0, %v895
        %897 = vmatmul.f32.gmra.mxu0 %v842
        %v898 = vpop.f32.mrf.mxu0
        %v899 = vadd.f32 0.0, %v898
        %900 = vmatmul.f32.gmra.mxu0 %v844
        %v901 = vpop.f32.mrf.mxu0
        %v902 = vadd.f32 0.0, %v901
        %903 = vmatmul.f32.gmra.mxu0 %v846
        %v904 = vpop.f32.mrf.mxu0
        %v905 = vadd.f32 0.0, %v904
        %906 = vmatmul.f32.gmra.mxu0 %v848
        %v907 = vpop.f32.mrf.mxu0
        %v908 = vadd.f32 0.0, %v907
        %909 = vmatmul.f32.gmra.mxu0 %v850
        %v910 = vpop.f32.mrf.mxu0
        %v911 = vadd.f32 0.0, %v910
        %912 = vmatmul.f32.gmra.mxu0 %v852
        %v913 = vpop.f32.mrf.mxu0
        %v914 = vadd.f32 0.0, %v913
        %915 = vmatmul.f32.gmra.mxu0 %v854
        %v916 = vpop.f32.mrf.mxu0
        %v917 = vadd.f32 0.0, %v916
        %918 = vmatmul.f32.gmra.mxu0 %v856
        %v919 = vpop.f32.mrf.mxu0
        %v920 = vadd.f32 0.0, %v919
        %921 = vmatmul.f32.gmra.mxu0 %v858
        %v922 = vpop.f32.mrf.mxu0
        %v923 = vadd.f32 0.0, %v922
        %924 = vmatmul.f32.gmra.mxu0 %v860
        %v925 = vpop.f32.mrf.mxu0
        %v926 = vadd.f32 0.0, %v925
        %927 = vmatmul.f32.gmra.mxu0 %v862
        %v928 = vpop.f32.mrf.mxu0
        %v929 = vadd.f32 0.0, %v928
        %930 = vmatmul.f32.gmra.mxu0 %v864
        %v931 = vpop.f32.mrf.mxu0
        %v932 = vadd.f32 0.0, %v931
        %933 = vmatmul.f32.gmra.mxu0 %v866
        %v934 = vpop.f32.mrf.mxu0
        %v935 = vadd.f32 0.0, %v934
        %936 = vmatmul.f32.gmra.mxu0 %v868
        %v937 = vpop.f32.mrf.mxu0
        %v938 = vadd.f32 0.0, %v937
        %939 = vmatmul.f32.gmra.mxu0 %v870
        %v940 = vpop.f32.mrf.mxu0
        %v941 = vadd.f32 0.0, %v940
        %942 = vdwg.mxu0
        %943 = vmatpush.msra.mxu0 0.0
        %944 = vmatpush.msra.mxu0 0.0
        %945 = vmatpush.msra.mxu0 0.0
        %946 = vmatpush.msra.mxu0 0.0
        %947 = vmatpush.msra.mxu0 0.0
        %948 = vmatpush.msra.mxu0 0.0
        %949 = vmatpush.msra.mxu0 0.0
        %950 = vmatpush.msra.mxu0 0.0
        %951 = vmatpush.msra.mxu0 0.0
        %952 = vmatpush.msra.mxu0 0.0
        %953 = vmatpush.msra.mxu0 0.0
        %954 = vmatpush.msra.mxu0 0.0
        %955 = vmatpush.msra.mxu0 %v797
        %956 = vmatpush.msra.mxu0 %v795
        %957 = vmatpush.msra.mxu0 %v793
        %958 = vmatpush.msra.mxu0 %v791
        %959 = vmatmul.f32.gmra.mxu0 %v836
        %v960 = vpop.f32.mrf.mxu0
        %v961 = vadd.f32 0.0, %v960
        %962 = vmatmul.f32.gmra.mxu0 %v838
        %v963 = vpop.f32.mrf.mxu0
        %v964 = vadd.f32 0.0, %v963
        %965 = vmatmul.f32.gmra.mxu0 %v840
        %v966 = vpop.f32.mrf.mxu0
        %v967 = vadd.f32 0.0, %v966
        %968 = vmatmul.f32.gmra.mxu0 %v842
        %v969 = vpop.f32.mrf.mxu0
        %v970 = vadd.f32 0.0, %v969
        %971 = vmatmul.f32.gmra.mxu0 %v844
        %v972 = vpop.f32.mrf.mxu0
        %v973 = vadd.f32 0.0, %v972
        %974 = vmatmul.f32.gmra.mxu0 %v846
        %v975 = vpop.f32.mrf.mxu0
        %v976 = vadd.f32 0.0, %v975
        %977 = vmatmul.f32.gmra.mxu0 %v848
        %v978 = vpop.f32.mrf.mxu0
        %v979 = vadd.f32 0.0, %v978
        %980 = vmatmul.f32.gmra.mxu0 %v850
        %v981 = vpop.f32.mrf.mxu0
        %v982 = vadd.f32 0.0, %v981
        %983 = vmatmul.f32.gmra.mxu0 %v852
        %v984 = vpop.f32.mrf.mxu0
        %v985 = vadd.f32 0.0, %v984
        %986 = vmatmul.f32.gmra.mxu0 %v854
        %v987 = vpop.f32.mrf.mxu0
        %v988 = vadd.f32 0.0, %v987
        %989 = vmatmul.f32.gmra.mxu0 %v856
        %v990 = vpop.f32.mrf.mxu0
        %v991 = vadd.f32 0.0, %v990
        %992 = vmatmul.f32.gmra.mxu0 %v858
        %v993 = vpop.f32.mrf.mxu0
        %v994 = vadd.f32 0.0, %v993
        %995 = vmatmul.f32.gmra.mxu0 %v860
        %v996 = vpop.f32.mrf.mxu0
        %v997 = vadd.f32 0.0, %v996
        %998 = vmatmul.f32.gmra.mxu0 %v862
        %v999 = vpop.f32.mrf.mxu0
        %v1000 = vadd.f32 0.0, %v999
        %1001 = vmatmul.f32.gmra.mxu0 %v864
        %v1002 = vpop.f32.mrf.mxu0
        %v1003 = vadd.f32 0.0, %v1002
        %1004 = vmatmul.f32.gmra.mxu0 %v866
        %v1005 = vpop.f32.mrf.mxu0
        %v1006 = vadd.f32 0.0, %v1005
        %1007 = vmatmul.f32.gmra.mxu0 %v868
        %v1008 = vpop.f32.mrf.mxu0
        %v1009 = vadd.f32 0.0, %v1008
        %1010 = vmatmul.f32.gmra.mxu0 %v870
        %v1011 = vpop.f32.mrf.mxu0
        %v1012 = vadd.f32 0.0, %v1011
        %1013 = vdwg.mxu0
        %v1014 = vadd.f32 %v665, %v890
        %v1015 = vadd.f32 %v736, %v961
        %v1016 = vadd.f32 %v668, %v893
        %v1017 = vadd.f32 %v739, %v964
        %v1018 = vadd.f32 %v671, %v896
        %v1019 = vadd.f32 %v742, %v967
        %v1020 = vadd.f32 %v674, %v899
        %v1021 = vadd.f32 %v745, %v970
        %v1022 = vadd.f32 %v677, %v902
        %v1023 = vadd.f32 %v748, %v973
        %v1024 = vadd.f32 %v680, %v905
        %v1025 = vadd.f32 %v751, %v976
        %v1026 = vadd.f32 %v683, %v908
        %v1027 = vadd.f32 %v754, %v979
        %v1028 = vadd.f32 %v686, %v911
        %v1029 = vadd.f32 %v757, %v982
        %v1030 = vadd.f32 %v689, %v914
        %v1031 = vadd.f32 %v760, %v985
        %v1032 = vadd.f32 %v692, %v917
        %v1033 = vadd.f32 %v763, %v988
        %v1034 = vadd.f32 %v695, %v920
        %v1035 = vadd.f32 %v766, %v991
        %v1036 = vadd.f32 %v698, %v923
        %v1037 = vadd.f32 %v769, %v994
        %v1038 = vadd.f32 %v701, %v926
        %v1039 = vadd.f32 %v772, %v997
        %v1040 = vadd.f32 %v704, %v929
        %v1041 = vadd.f32 %v775, %v1000
        %v1042 = vadd.f32 %v707, %v932
        %v1043 = vadd.f32 %v778, %v1003
        %v1044 = vadd.f32 %v710, %v935
        %v1045 = vadd.f32 %v781, %v1006
        %v1046 = vadd.f32 %v713, %v938
        %v1047 = vadd.f32 %v784, %v1009
        %v1048 = vadd.f32 %v716, %v941
        %v1049 = vadd.f32 %v787, %v1012
        %s1050 = scalar_lea.vmem %s2, 192
        %v1051 = vld [vmem:[%s1050] sm:$0xff]
        %v1052 = vld [vmem:[%s1050 + $0x8] sm:$0xff]
        %v1053 = vld [vmem:[%s1050 + $0x10] sm:$0xff]
        %v1054 = vld [vmem:[%s1050 + $0x18] sm:$0xff]
        %v1055 = vld [vmem:[%s1050 + $0x20] sm:$0xff]
        %v1056 = vld [vmem:[%s1050 + $0x28] sm:$0xff]
        %v1057 = vld [vmem:[%s1050 + $0x30] sm:$0xff]
        %v1058 = vld [vmem:[%s1050 + $0x38] sm:$0xff]
        %v1061 = vrot.slane %v354, 2
        %v1062 = vsel %vm798, %v834, %v1061
        %v1063 = vrot.slane %v355, 2
        %v1064 = vsel %vm798, %v1061, %v1063
        %v1065 = vsel %vm432, %v1062, 0
        %v1067 = vsel %vm432, %v1064, 0
        %1069 = vmatpush.msra.mxu0 0.0
        %1070 = vmatpush.msra.mxu0 0.0
        %1071 = vmatpush.msra.mxu0 0.0
        %1072 = vmatpush.msra.mxu0 0.0
        %1073 = vmatpush.msra.mxu0 0.0
        %1074 = vmatpush.msra.mxu0 0.0
        %1075 = vmatpush.msra.mxu0 0.0
        %1076 = vmatpush.msra.mxu0 0.0
        %1077 = vmatpush.msra.mxu0 0.0
        %1078 = vmatpush.msra.mxu0 0.0
        %1079 = vmatpush.msra.mxu0 0.0
        %1080 = vmatpush.msra.mxu0 0.0
        %1081 = vmatpush.msra.mxu0 %v1057
        %1082 = vmatpush.msra.mxu0 %v1055
        %1083 = vmatpush.msra.mxu0 %v1053
        %1084 = vmatpush.msra.mxu0 %v1051
        %1085 = vmatmul.f32.gmra.mxu0 %v840
        %v1086 = vpop.f32.mrf.mxu0
        %v1087 = vadd.f32 0.0, %v1086
        %1088 = vmatmul.f32.gmra.mxu0 %v842
        %v1089 = vpop.f32.mrf.mxu0
        %v1090 = vadd.f32 0.0, %v1089
        %1091 = vmatmul.f32.gmra.mxu0 %v844
        %v1092 = vpop.f32.mrf.mxu0
        %v1093 = vadd.f32 0.0, %v1092
        %1094 = vmatmul.f32.gmra.mxu0 %v846
        %v1095 = vpop.f32.mrf.mxu0
        %v1096 = vadd.f32 0.0, %v1095
        %1097 = vmatmul.f32.gmra.mxu0 %v848
        %v1098 = vpop.f32.mrf.mxu0
        %v1099 = vadd.f32 0.0, %v1098
        %1100 = vmatmul.f32.gmra.mxu0 %v850
        %v1101 = vpop.f32.mrf.mxu0
        %v1102 = vadd.f32 0.0, %v1101
        %1103 = vmatmul.f32.gmra.mxu0 %v852
        %v1104 = vpop.f32.mrf.mxu0
        %v1105 = vadd.f32 0.0, %v1104
        %1106 = vmatmul.f32.gmra.mxu0 %v854
        %v1107 = vpop.f32.mrf.mxu0
        %v1108 = vadd.f32 0.0, %v1107
        %1109 = vmatmul.f32.gmra.mxu0 %v856
        %v1110 = vpop.f32.mrf.mxu0
        %v1111 = vadd.f32 0.0, %v1110
        %1112 = vmatmul.f32.gmra.mxu0 %v858
        %v1113 = vpop.f32.mrf.mxu0
        %v1114 = vadd.f32 0.0, %v1113
        %1115 = vmatmul.f32.gmra.mxu0 %v860
        %v1116 = vpop.f32.mrf.mxu0
        %v1117 = vadd.f32 0.0, %v1116
        %1118 = vmatmul.f32.gmra.mxu0 %v862
        %v1119 = vpop.f32.mrf.mxu0
        %v1120 = vadd.f32 0.0, %v1119
        %1121 = vmatmul.f32.gmra.mxu0 %v864
        %v1122 = vpop.f32.mrf.mxu0
        %v1123 = vadd.f32 0.0, %v1122
        %1124 = vmatmul.f32.gmra.mxu0 %v866
        %v1125 = vpop.f32.mrf.mxu0
        %v1126 = vadd.f32 0.0, %v1125
        %1127 = vmatmul.f32.gmra.mxu0 %v868
        %v1128 = vpop.f32.mrf.mxu0
        %v1129 = vadd.f32 0.0, %v1128
        %1130 = vmatmul.f32.gmra.mxu0 %v870
        %v1131 = vpop.f32.mrf.mxu0
        %v1132 = vadd.f32 0.0, %v1131
        %1133 = vmatmul.f32.gmra.mxu0 %v1065
        %v1134 = vpop.f32.mrf.mxu0
        %v1135 = vadd.f32 0.0, %v1134
        %1136 = vmatmul.f32.gmra.mxu0 %v1067
        %v1137 = vpop.f32.mrf.mxu0
        %v1138 = vadd.f32 0.0, %v1137
        %1139 = vdwg.mxu0
        %1140 = vmatpush.msra.mxu0 0.0
        %1141 = vmatpush.msra.mxu0 0.0
        %1142 = vmatpush.msra.mxu0 0.0
        %1143 = vmatpush.msra.mxu0 0.0
        %1144 = vmatpush.msra.mxu0 0.0
        %1145 = vmatpush.msra.mxu0 0.0
        %1146 = vmatpush.msra.mxu0 0.0
        %1147 = vmatpush.msra.mxu0 0.0
        %1148 = vmatpush.msra.mxu0 0.0
        %1149 = vmatpush.msra.mxu0 0.0
        %1150 = vmatpush.msra.mxu0 0.0
        %1151 = vmatpush.msra.mxu0 0.0
        %1152 = vmatpush.msra.mxu0 %v1058
        %1153 = vmatpush.msra.mxu0 %v1056
        %1154 = vmatpush.msra.mxu0 %v1054
        %1155 = vmatpush.msra.mxu0 %v1052
        %1156 = vmatmul.f32.gmra.mxu0 %v840
        %v1157 = vpop.f32.mrf.mxu0
        %v1158 = vadd.f32 0.0, %v1157
        %1159 = vmatmul.f32.gmra.mxu0 %v842
        %v1160 = vpop.f32.mrf.mxu0
        %v1161 = vadd.f32 0.0, %v1160
        %1162 = vmatmul.f32.gmra.mxu0 %v844
        %v1163 = vpop.f32.mrf.mxu0
        %v1164 = vadd.f32 0.0, %v1163
        %1165 = vmatmul.f32.gmra.mxu0 %v846
        %v1166 = vpop.f32.mrf.mxu0
        %v1167 = vadd.f32 0.0, %v1166
        %1168 = vmatmul.f32.gmra.mxu0 %v848
        %v1169 = vpop.f32.mrf.mxu0
        %v1170 = vadd.f32 0.0, %v1169
        %1171 = vmatmul.f32.gmra.mxu0 %v850
        %v1172 = vpop.f32.mrf.mxu0
        %v1173 = vadd.f32 0.0, %v1172
        %1174 = vmatmul.f32.gmra.mxu0 %v852
        %v1175 = vpop.f32.mrf.mxu0
        %v1176 = vadd.f32 0.0, %v1175
        %1177 = vmatmul.f32.gmra.mxu0 %v854
        %v1178 = vpop.f32.mrf.mxu0
        %v1179 = vadd.f32 0.0, %v1178
        %1180 = vmatmul.f32.gmra.mxu0 %v856
        %v1181 = vpop.f32.mrf.mxu0
        %v1182 = vadd.f32 0.0, %v1181
        %1183 = vmatmul.f32.gmra.mxu0 %v858
        %v1184 = vpop.f32.mrf.mxu0
        %v1185 = vadd.f32 0.0, %v1184
        %1186 = vmatmul.f32.gmra.mxu0 %v860
        %v1187 = vpop.f32.mrf.mxu0
        %v1188 = vadd.f32 0.0, %v1187
        %1189 = vmatmul.f32.gmra.mxu0 %v862
        %v1190 = vpop.f32.mrf.mxu0
        %v1191 = vadd.f32 0.0, %v1190
        %1192 = vmatmul.f32.gmra.mxu0 %v864
        %v1193 = vpop.f32.mrf.mxu0
        %v1194 = vadd.f32 0.0, %v1193
        %1195 = vmatmul.f32.gmra.mxu0 %v866
        %v1196 = vpop.f32.mrf.mxu0
        %v1197 = vadd.f32 0.0, %v1196
        %1198 = vmatmul.f32.gmra.mxu0 %v868
        %v1199 = vpop.f32.mrf.mxu0
        %v1200 = vadd.f32 0.0, %v1199
        %1201 = vmatmul.f32.gmra.mxu0 %v870
        %v1202 = vpop.f32.mrf.mxu0
        %v1203 = vadd.f32 0.0, %v1202
        %1204 = vmatmul.f32.gmra.mxu0 %v1065
        %v1205 = vpop.f32.mrf.mxu0
        %v1206 = vadd.f32 0.0, %v1205
        %1207 = vmatmul.f32.gmra.mxu0 %v1067
        %v1208 = vpop.f32.mrf.mxu0
        %v1209 = vadd.f32 0.0, %v1208
        %1210 = vdwg.mxu0
        %v1211 = vadd.f32 %v1014, %v1087
        %v1212 = vadd.f32 %v1015, %v1158
        %v1213 = vadd.f32 %v1016, %v1090
        %v1214 = vadd.f32 %v1017, %v1161
        %v1215 = vadd.f32 %v1018, %v1093
        %v1216 = vadd.f32 %v1019, %v1164
        %v1217 = vadd.f32 %v1020, %v1096
        %v1218 = vadd.f32 %v1021, %v1167
        %v1219 = vadd.f32 %v1022, %v1099
        %v1220 = vadd.f32 %v1023, %v1170
        %v1221 = vadd.f32 %v1024, %v1102
        %v1222 = vadd.f32 %v1025, %v1173
        %v1223 = vadd.f32 %v1026, %v1105
        %v1224 = vadd.f32 %v1027, %v1176
        %v1225 = vadd.f32 %v1028, %v1108
        %v1226 = vadd.f32 %v1029, %v1179
        %v1227 = vadd.f32 %v1030, %v1111
        %v1228 = vadd.f32 %v1031, %v1182
        %v1229 = vadd.f32 %v1032, %v1114
        %v1230 = vadd.f32 %v1033, %v1185
        %v1231 = vadd.f32 %v1034, %v1117
        %v1232 = vadd.f32 %v1035, %v1188
        %v1233 = vadd.f32 %v1036, %v1120
        %v1234 = vadd.f32 %v1037, %v1191
        %v1235 = vadd.f32 %v1038, %v1123
        %v1236 = vadd.f32 %v1039, %v1194
        %v1237 = vadd.f32 %v1040, %v1126
        %v1238 = vadd.f32 %v1041, %v1197
        %v1239 = vadd.f32 %v1042, %v1129
        %v1240 = vadd.f32 %v1043, %v1200
        %v1241 = vadd.f32 %v1044, %v1132
        %v1242 = vadd.f32 %v1045, %v1203
        %v1243 = vadd.f32 %v1046, %v1135
        %v1244 = vadd.f32 %v1047, %v1206
        %v1245 = vadd.f32 %v1048, %v1138
        %v1246 = vadd.f32 %v1049, %v1209
        %s1247 = scalar_lea.vmem %s2, 256
        %v1248 = vld [vmem:[%s1247] sm:$0xff]
        %v1249 = vld [vmem:[%s1247 + $0x8] sm:$0xff]
        %v1250 = vld [vmem:[%s1247 + $0x10] sm:$0xff]
        %v1251 = vld [vmem:[%s1247 + $0x18] sm:$0xff]
        %v1252 = vld [vmem:[%s1247 + $0x20] sm:$0xff]
        %v1253 = vld [vmem:[%s1247 + $0x28] sm:$0xff]
        %v1254 = vld [vmem:[%s1247 + $0x30] sm:$0xff]
        %v1255 = vld [vmem:[%s1247 + $0x38] sm:$0xff]
        %vm1256 = vcmask 1044480
        %v1257 = vrot.slane %v337, 3
        %v1258 = vrot.slane %v338, 3
        %v1259 = vsel %vm1256, %v1257, %v1258
        %v1260 = vrot.slane %v339, 3
        %v1261 = vsel %vm1256, %v1258, %v1260
        %v1262 = vrot.slane %v340, 3
        %v1263 = vsel %vm1256, %v1260, %v1262
        %v1264 = vrot.slane %v341, 3
        %v1265 = vsel %vm1256, %v1262, %v1264
        %v1266 = vrot.slane %v342, 3
        %v1267 = vsel %vm1256, %v1264, %v1266
        %v1268 = vrot.slane %v343, 3
        %v1269 = vsel %vm1256, %v1266, %v1268
        %v1270 = vrot.slane %v344, 3
        %v1271 = vsel %vm1256, %v1268, %v1270
        %v1272 = vrot.slane %v345, 3
        %v1273 = vsel %vm1256, %v1270, %v1272
        %v1274 = vrot.slane %v346, 3
        %v1275 = vsel %vm1256, %v1272, %v1274
        %v1276 = vrot.slane %v347, 3
        %v1277 = vsel %vm1256, %v1274, %v1276
        %v1278 = vrot.slane %v348, 3
        %v1279 = vsel %vm1256, %v1276, %v1278
        %v1280 = vrot.slane %v349, 3
        %v1281 = vsel %vm1256, %v1278, %v1280
        %v1282 = vrot.slane %v350, 3
        %v1283 = vsel %vm1256, %v1280, %v1282
        %v1284 = vrot.slane %v351, 3
        %v1285 = vsel %vm1256, %v1282, %v1284
        %v1286 = vrot.slane %v352, 3
        %v1287 = vsel %vm1256, %v1284, %v1286
        %v1288 = vrot.slane %v353, 3
        %v1289 = vsel %vm1256, %v1286, %v1288
        %v1290 = vrot.slane %v354, 3
        %v1291 = vsel %vm1256, %v1288, %v1290
        %v1292 = vrot.slane %v355, 3
        %v1293 = vsel %vm1256, %v1290, %v1292
        %v1294 = vsel %vm432, %v1259, 0
        %v1296 = vsel %vm432, %v1261, 0
        %v1298 = vsel %vm432, %v1263, 0
        %v1300 = vsel %vm432, %v1265, 0
        %v1302 = vsel %vm432, %v1267, 0
        %v1304 = vsel %vm432, %v1269, 0
        %v1306 = vsel %vm432, %v1271, 0
        %v1308 = vsel %vm432, %v1273, 0
        %v1310 = vsel %vm432, %v1275, 0
        %v1312 = vsel %vm432, %v1277, 0
        %v1314 = vsel %vm432, %v1279, 0
        %v1316 = vsel %vm432, %v1281, 0
        %v1318 = vsel %vm432, %v1283, 0
        %v1320 = vsel %vm432, %v1285, 0
        %v1322 = vsel %vm432, %v1287, 0
        %v1324 = vsel %vm432, %v1289, 0
        %v1326 = vsel %vm432, %v1291, 0
        %v1328 = vsel %vm432, %v1293, 0
        %1330 = vmatpush.msra.mxu0 0.0
        %1331 = vmatpush.msra.mxu0 0.0
        %1332 = vmatpush.msra.mxu0 0.0
        %1333 = vmatpush.msra.mxu0 0.0
        %1334 = vmatpush.msra.mxu0 0.0
        %1335 = vmatpush.msra.mxu0 0.0
        %1336 = vmatpush.msra.mxu0 0.0
        %1337 = vmatpush.msra.mxu0 0.0
        %1338 = vmatpush.msra.mxu0 0.0
        %1339 = vmatpush.msra.mxu0 0.0
        %1340 = vmatpush.msra.mxu0 0.0
        %1341 = vmatpush.msra.mxu0 0.0
        %1342 = vmatpush.msra.mxu0 %v1254
        %1343 = vmatpush.msra.mxu0 %v1252
        %1344 = vmatpush.msra.mxu0 %v1250
        %1345 = vmatpush.msra.mxu0 %v1248
        %1346 = vmatmul.f32.gmra.mxu0 %v1294
        %v1347 = vpop.f32.mrf.mxu0
        %v1348 = vadd.f32 0.0, %v1347
        %1349 = vmatmul.f32.gmra.mxu0 %v1296
        %v1350 = vpop.f32.mrf.mxu0
        %v1351 = vadd.f32 0.0, %v1350
        %1352 = vmatmul.f32.gmra.mxu0 %v1298
        %v1353 = vpop.f32.mrf.mxu0
        %v1354 = vadd.f32 0.0, %v1353
        %1355 = vmatmul.f32.gmra.mxu0 %v1300
        %v1356 = vpop.f32.mrf.mxu0
        %v1357 = vadd.f32 0.0, %v1356
        %1358 = vmatmul.f32.gmra.mxu0 %v1302
        %v1359 = vpop.f32.mrf.mxu0
        %v1360 = vadd.f32 0.0, %v1359
        %1361 = vmatmul.f32.gmra.mxu0 %v1304
        %v1362 = vpop.f32.mrf.mxu0
        %v1363 = vadd.f32 0.0, %v1362
        %1364 = vmatmul.f32.gmra.mxu0 %v1306
        %v1365 = vpop.f32.mrf.mxu0
        %v1366 = vadd.f32 0.0, %v1365
        %1367 = vmatmul.f32.gmra.mxu0 %v1308
        %v1368 = vpop.f32.mrf.mxu0
        %v1369 = vadd.f32 0.0, %v1368
        %1370 = vmatmul.f32.gmra.mxu0 %v1310
        %v1371 = vpop.f32.mrf.mxu0
        %v1372 = vadd.f32 0.0, %v1371
        %1373 = vmatmul.f32.gmra.mxu0 %v1312
        %v1374 = vpop.f32.mrf.mxu0
        %v1375 = vadd.f32 0.0, %v1374
        %1376 = vmatmul.f32.gmra.mxu0 %v1314
        %v1377 = vpop.f32.mrf.mxu0
        %v1378 = vadd.f32 0.0, %v1377
        %1379 = vmatmul.f32.gmra.mxu0 %v1316
        %v1380 = vpop.f32.mrf.mxu0
        %v1381 = vadd.f32 0.0, %v1380
        %1382 = vmatmul.f32.gmra.mxu0 %v1318
        %v1383 = vpop.f32.mrf.mxu0
        %v1384 = vadd.f32 0.0, %v1383
        %1385 = vmatmul.f32.gmra.mxu0 %v1320
        %v1386 = vpop.f32.mrf.mxu0
        %v1387 = vadd.f32 0.0, %v1386
        %1388 = vmatmul.f32.gmra.mxu0 %v1322
        %v1389 = vpop.f32.mrf.mxu0
        %v1390 = vadd.f32 0.0, %v1389
        %1391 = vmatmul.f32.gmra.mxu0 %v1324
        %v1392 = vpop.f32.mrf.mxu0
        %v1393 = vadd.f32 0.0, %v1392
        %1394 = vmatmul.f32.gmra.mxu0 %v1326
        %v1395 = vpop.f32.mrf.mxu0
        %v1396 = vadd.f32 0.0, %v1395
        %1397 = vmatmul.f32.gmra.mxu0 %v1328
        %v1398 = vpop.f32.mrf.mxu0
        %v1399 = vadd.f32 0.0, %v1398
        %1400 = vdwg.mxu0
        %1401 = vmatpush.msra.mxu0 0.0
        %1402 = vmatpush.msra.mxu0 0.0
        %1403 = vmatpush.msra.mxu0 0.0
        %1404 = vmatpush.msra.mxu0 0.0
        %1405 = vmatpush.msra.mxu0 0.0
        %1406 = vmatpush.msra.mxu0 0.0
        %1407 = vmatpush.msra.mxu0 0.0
        %1408 = vmatpush.msra.mxu0 0.0
        %1409 = vmatpush.msra.mxu0 0.0
        %1410 = vmatpush.msra.mxu0 0.0
        %1411 = vmatpush.msra.mxu0 0.0
        %1412 = vmatpush.msra.mxu0 0.0
        %1413 = vmatpush.msra.mxu0 %v1255
        %1414 = vmatpush.msra.mxu0 %v1253
        %1415 = vmatpush.msra.mxu0 %v1251
        %1416 = vmatpush.msra.mxu0 %v1249
        %1417 = vmatmul.f32.gmra.mxu0 %v1294
        %v1418 = vpop.f32.mrf.mxu0
        %v1419 = vadd.f32 0.0, %v1418
        %1420 = vmatmul.f32.gmra.mxu0 %v1296
        %v1421 = vpop.f32.mrf.mxu0
        %v1422 = vadd.f32 0.0, %v1421
        %1423 = vmatmul.f32.gmra.mxu0 %v1298
        %v1424 = vpop.f32.mrf.mxu0
        %v1425 = vadd.f32 0.0, %v1424
        %1426 = vmatmul.f32.gmra.mxu0 %v1300
        %v1427 = vpop.f32.mrf.mxu0
        %v1428 = vadd.f32 0.0, %v1427
        %1429 = vmatmul.f32.gmra.mxu0 %v1302
        %v1430 = vpop.f32.mrf.mxu0
        %v1431 = vadd.f32 0.0, %v1430
        %1432 = vmatmul.f32.gmra.mxu0 %v1304
        %v1433 = vpop.f32.mrf.mxu0
        %v1434 = vadd.f32 0.0, %v1433
        %1435 = vmatmul.f32.gmra.mxu0 %v1306
        %v1436 = vpop.f32.mrf.mxu0
        %v1437 = vadd.f32 0.0, %v1436
        %1438 = vmatmul.f32.gmra.mxu0 %v1308
        %v1439 = vpop.f32.mrf.mxu0
        %v1440 = vadd.f32 0.0, %v1439
        %1441 = vmatmul.f32.gmra.mxu0 %v1310
        %v1442 = vpop.f32.mrf.mxu0
        %v1443 = vadd.f32 0.0, %v1442
        %1444 = vmatmul.f32.gmra.mxu0 %v1312
        %v1445 = vpop.f32.mrf.mxu0
        %v1446 = vadd.f32 0.0, %v1445
        %1447 = vmatmul.f32.gmra.mxu0 %v1314
        %v1448 = vpop.f32.mrf.mxu0
        %v1449 = vadd.f32 0.0, %v1448
        %1450 = vmatmul.f32.gmra.mxu0 %v1316
        %v1451 = vpop.f32.mrf.mxu0
        %v1452 = vadd.f32 0.0, %v1451
        %1453 = vmatmul.f32.gmra.mxu0 %v1318
        %v1454 = vpop.f32.mrf.mxu0
        %v1455 = vadd.f32 0.0, %v1454
        %1456 = vmatmul.f32.gmra.mxu0 %v1320
        %v1457 = vpop.f32.mrf.mxu0
        %v1458 = vadd.f32 0.0, %v1457
        %1459 = vmatmul.f32.gmra.mxu0 %v1322
        %v1460 = vpop.f32.mrf.mxu0
        %v1461 = vadd.f32 0.0, %v1460
        %1462 = vmatmul.f32.gmra.mxu0 %v1324
        %v1463 = vpop.f32.mrf.mxu0
        %v1464 = vadd.f32 0.0, %v1463
        %1465 = vmatmul.f32.gmra.mxu0 %v1326
        %v1466 = vpop.f32.mrf.mxu0
        %v1467 = vadd.f32 0.0, %v1466
        %1468 = vmatmul.f32.gmra.mxu0 %v1328
        %v1469 = vpop.f32.mrf.mxu0
        %v1470 = vadd.f32 0.0, %v1469
        %1471 = vdwg.mxu0
        %v1472 = vadd.f32 %v1211, %v1348
        %v1473 = vadd.f32 %v1212, %v1419
        %v1474 = vadd.f32 %v1213, %v1351
        %v1475 = vadd.f32 %v1214, %v1422
        %v1476 = vadd.f32 %v1215, %v1354
        %v1477 = vadd.f32 %v1216, %v1425
        %v1478 = vadd.f32 %v1217, %v1357
        %v1479 = vadd.f32 %v1218, %v1428
        %v1480 = vadd.f32 %v1219, %v1360
        %v1481 = vadd.f32 %v1220, %v1431
        %v1482 = vadd.f32 %v1221, %v1363
        %v1483 = vadd.f32 %v1222, %v1434
        %v1484 = vadd.f32 %v1223, %v1366
        %v1485 = vadd.f32 %v1224, %v1437
        %v1486 = vadd.f32 %v1225, %v1369
        %v1487 = vadd.f32 %v1226, %v1440
        %v1488 = vadd.f32 %v1227, %v1372
        %v1489 = vadd.f32 %v1228, %v1443
        %v1490 = vadd.f32 %v1229, %v1375
        %v1491 = vadd.f32 %v1230, %v1446
        %v1492 = vadd.f32 %v1231, %v1378
        %v1493 = vadd.f32 %v1232, %v1449
        %v1494 = vadd.f32 %v1233, %v1381
        %v1495 = vadd.f32 %v1234, %v1452
        %v1496 = vadd.f32 %v1235, %v1384
        %v1497 = vadd.f32 %v1236, %v1455
        %v1498 = vadd.f32 %v1237, %v1387
        %v1499 = vadd.f32 %v1238, %v1458
        %v1500 = vadd.f32 %v1239, %v1390
        %v1501 = vadd.f32 %v1240, %v1461
        %v1502 = vadd.f32 %v1241, %v1393
        %v1503 = vadd.f32 %v1242, %v1464
        %v1504 = vadd.f32 %v1243, %v1396
        %v1505 = vadd.f32 %v1244, %v1467
        %v1506 = vadd.f32 %v1245, %v1399
        %v1507 = vadd.f32 %v1246, %v1470
        %s1508 = scalar_lea.vmem %s2, 320
        %v1509 = vld [vmem:[%s1508] sm:$0xff]
        %v1510 = vld [vmem:[%s1508 + $0x8] sm:$0xff]
        %v1511 = vld [vmem:[%s1508 + $0x10] sm:$0xff]
        %v1512 = vld [vmem:[%s1508 + $0x18] sm:$0xff]
        %v1513 = vld [vmem:[%s1508 + $0x20] sm:$0xff]
        %v1514 = vld [vmem:[%s1508 + $0x28] sm:$0xff]
        %v1515 = vld [vmem:[%s1508 + $0x30] sm:$0xff]
        %v1516 = vld [vmem:[%s1508 + $0x38] sm:$0xff]
        %vm1517 = vcmask 1043456
        %v1518 = vrot.slane %v337, 4
        %v1519 = vrot.slane %v338, 4
        %v1520 = vsel %vm1517, %v1518, %v1519
        %v1521 = vrot.slane %v339, 4
        %v1522 = vsel %vm1517, %v1519, %v1521
        %v1523 = vrot.slane %v340, 4
        %v1524 = vsel %vm1517, %v1521, %v1523
        %v1525 = vrot.slane %v341, 4
        %v1526 = vsel %vm1517, %v1523, %v1525
        %v1527 = vrot.slane %v342, 4
        %v1528 = vsel %vm1517, %v1525, %v1527
        %v1529 = vrot.slane %v343, 4
        %v1530 = vsel %vm1517, %v1527, %v1529
        %v1531 = vrot.slane %v344, 4
        %v1532 = vsel %vm1517, %v1529, %v1531
        %v1533 = vrot.slane %v345, 4
        %v1534 = vsel %vm1517, %v1531, %v1533
        %v1535 = vrot.slane %v346, 4
        %v1536 = vsel %vm1517, %v1533, %v1535
        %v1537 = vrot.slane %v347, 4
        %v1538 = vsel %vm1517, %v1535, %v1537
        %v1539 = vrot.slane %v348, 4
        %v1540 = vsel %vm1517, %v1537, %v1539
        %v1541 = vrot.slane %v349, 4
        %v1542 = vsel %vm1517, %v1539, %v1541
        %v1543 = vrot.slane %v350, 4
        %v1544 = vsel %vm1517, %v1541, %v1543
        %v1545 = vrot.slane %v351, 4
        %v1546 = vsel %vm1517, %v1543, %v1545
        %v1547 = vrot.slane %v352, 4
        %v1548 = vsel %vm1517, %v1545, %v1547
        %v1549 = vrot.slane %v353, 4
        %v1550 = vsel %vm1517, %v1547, %v1549
        %v1551 = vrot.slane %v354, 4
        %v1552 = vsel %vm1517, %v1549, %v1551
        %v1553 = vrot.slane %v355, 4
        %v1554 = vsel %vm1517, %v1551, %v1553
        %v1555 = vsel %vm432, %v1520, 0
        %v1557 = vsel %vm432, %v1522, 0
        %v1559 = vsel %vm432, %v1524, 0
        %v1561 = vsel %vm432, %v1526, 0
        %v1563 = vsel %vm432, %v1528, 0
        %v1565 = vsel %vm432, %v1530, 0
        %v1567 = vsel %vm432, %v1532, 0
        %v1569 = vsel %vm432, %v1534, 0
        %v1571 = vsel %vm432, %v1536, 0
        %v1573 = vsel %vm432, %v1538, 0
        %v1575 = vsel %vm432, %v1540, 0
        %v1577 = vsel %vm432, %v1542, 0
        %v1579 = vsel %vm432, %v1544, 0
        %v1581 = vsel %vm432, %v1546, 0
        %v1583 = vsel %vm432, %v1548, 0
        %v1585 = vsel %vm432, %v1550, 0
        %v1587 = vsel %vm432, %v1552, 0
        %v1589 = vsel %vm432, %v1554, 0
        %1591 = vmatpush.msra.mxu0 0.0
        %1592 = vmatpush.msra.mxu0 0.0
        %1593 = vmatpush.msra.mxu0 0.0
        %1594 = vmatpush.msra.mxu0 0.0
        %1595 = vmatpush.msra.mxu0 0.0
        %1596 = vmatpush.msra.mxu0 0.0
        %1597 = vmatpush.msra.mxu0 0.0
        %1598 = vmatpush.msra.mxu0 0.0
        %1599 = vmatpush.msra.mxu0 0.0
        %1600 = vmatpush.msra.mxu0 0.0
        %1601 = vmatpush.msra.mxu0 0.0
        %1602 = vmatpush.msra.mxu0 0.0
        %1603 = vmatpush.msra.mxu0 %v1515
        %1604 = vmatpush.msra.mxu0 %v1513
        %1605 = vmatpush.msra.mxu0 %v1511
        %1606 = vmatpush.msra.mxu0 %v1509
        %1607 = vmatmul.f32.gmra.mxu0 %v1555
        %v1608 = vpop.f32.mrf.mxu0
        %v1609 = vadd.f32 0.0, %v1608
        %1610 = vmatmul.f32.gmra.mxu0 %v1557
        %v1611 = vpop.f32.mrf.mxu0
        %v1612 = vadd.f32 0.0, %v1611
        %1613 = vmatmul.f32.gmra.mxu0 %v1559
        %v1614 = vpop.f32.mrf.mxu0
        %v1615 = vadd.f32 0.0, %v1614
        %1616 = vmatmul.f32.gmra.mxu0 %v1561
        %v1617 = vpop.f32.mrf.mxu0
        %v1618 = vadd.f32 0.0, %v1617
        %1619 = vmatmul.f32.gmra.mxu0 %v1563
        %v1620 = vpop.f32.mrf.mxu0
        %v1621 = vadd.f32 0.0, %v1620
        %1622 = vmatmul.f32.gmra.mxu0 %v1565
        %v1623 = vpop.f32.mrf.mxu0
        %v1624 = vadd.f32 0.0, %v1623
        %1625 = vmatmul.f32.gmra.mxu0 %v1567
        %v1626 = vpop.f32.mrf.mxu0
        %v1627 = vadd.f32 0.0, %v1626
        %1628 = vmatmul.f32.gmra.mxu0 %v1569
        %v1629 = vpop.f32.mrf.mxu0
        %v1630 = vadd.f32 0.0, %v1629
        %1631 = vmatmul.f32.gmra.mxu0 %v1571
        %v1632 = vpop.f32.mrf.mxu0
        %v1633 = vadd.f32 0.0, %v1632
        %1634 = vmatmul.f32.gmra.mxu0 %v1573
        %v1635 = vpop.f32.mrf.mxu0
        %v1636 = vadd.f32 0.0, %v1635
        %1637 = vmatmul.f32.gmra.mxu0 %v1575
        %v1638 = vpop.f32.mrf.mxu0
        %v1639 = vadd.f32 0.0, %v1638
        %1640 = vmatmul.f32.gmra.mxu0 %v1577
        %v1641 = vpop.f32.mrf.mxu0
        %v1642 = vadd.f32 0.0, %v1641
        %1643 = vmatmul.f32.gmra.mxu0 %v1579
        %v1644 = vpop.f32.mrf.mxu0
        %v1645 = vadd.f32 0.0, %v1644
        %1646 = vmatmul.f32.gmra.mxu0 %v1581
        %v1647 = vpop.f32.mrf.mxu0
        %v1648 = vadd.f32 0.0, %v1647
        %1649 = vmatmul.f32.gmra.mxu0 %v1583
        %v1650 = vpop.f32.mrf.mxu0
        %v1651 = vadd.f32 0.0, %v1650
        %1652 = vmatmul.f32.gmra.mxu0 %v1585
        %v1653 = vpop.f32.mrf.mxu0
        %v1654 = vadd.f32 0.0, %v1653
        %1655 = vmatmul.f32.gmra.mxu0 %v1587
        %v1656 = vpop.f32.mrf.mxu0
        %v1657 = vadd.f32 0.0, %v1656
        %1658 = vmatmul.f32.gmra.mxu0 %v1589
        %v1659 = vpop.f32.mrf.mxu0
        %v1660 = vadd.f32 0.0, %v1659
        %1661 = vdwg.mxu0
        %1662 = vmatpush.msra.mxu0 0.0
        %1663 = vmatpush.msra.mxu0 0.0
        %1664 = vmatpush.msra.mxu0 0.0
        %1665 = vmatpush.msra.mxu0 0.0
        %1666 = vmatpush.msra.mxu0 0.0
        %1667 = vmatpush.msra.mxu0 0.0
        %1668 = vmatpush.msra.mxu0 0.0
        %1669 = vmatpush.msra.mxu0 0.0
        %1670 = vmatpush.msra.mxu0 0.0
        %1671 = vmatpush.msra.mxu0 0.0
        %1672 = vmatpush.msra.mxu0 0.0
        %1673 = vmatpush.msra.mxu0 0.0
        %1674 = vmatpush.msra.mxu0 %v1516
        %1675 = vmatpush.msra.mxu0 %v1514
        %1676 = vmatpush.msra.mxu0 %v1512
        %1677 = vmatpush.msra.mxu0 %v1510
        %1678 = vmatmul.f32.gmra.mxu0 %v1555
        %v1679 = vpop.f32.mrf.mxu0
        %v1680 = vadd.f32 0.0, %v1679
        %1681 = vmatmul.f32.gmra.mxu0 %v1557
        %v1682 = vpop.f32.mrf.mxu0
        %v1683 = vadd.f32 0.0, %v1682
        %1684 = vmatmul.f32.gmra.mxu0 %v1559
        %v1685 = vpop.f32.mrf.mxu0
        %v1686 = vadd.f32 0.0, %v1685
        %1687 = vmatmul.f32.gmra.mxu0 %v1561
        %v1688 = vpop.f32.mrf.mxu0
        %v1689 = vadd.f32 0.0, %v1688
        %1690 = vmatmul.f32.gmra.mxu0 %v1563
        %v1691 = vpop.f32.mrf.mxu0
        %v1692 = vadd.f32 0.0, %v1691
        %1693 = vmatmul.f32.gmra.mxu0 %v1565
        %v1694 = vpop.f32.mrf.mxu0
        %v1695 = vadd.f32 0.0, %v1694
        %1696 = vmatmul.f32.gmra.mxu0 %v1567
        %v1697 = vpop.f32.mrf.mxu0
        %v1698 = vadd.f32 0.0, %v1697
        %1699 = vmatmul.f32.gmra.mxu0 %v1569
        %v1700 = vpop.f32.mrf.mxu0
        %v1701 = vadd.f32 0.0, %v1700
        %1702 = vmatmul.f32.gmra.mxu0 %v1571
        %v1703 = vpop.f32.mrf.mxu0
        %v1704 = vadd.f32 0.0, %v1703
        %1705 = vmatmul.f32.gmra.mxu0 %v1573
        %v1706 = vpop.f32.mrf.mxu0
        %v1707 = vadd.f32 0.0, %v1706
        %1708 = vmatmul.f32.gmra.mxu0 %v1575
        %v1709 = vpop.f32.mrf.mxu0
        %v1710 = vadd.f32 0.0, %v1709
        %1711 = vmatmul.f32.gmra.mxu0 %v1577
        %v1712 = vpop.f32.mrf.mxu0
        %v1713 = vadd.f32 0.0, %v1712
        %1714 = vmatmul.f32.gmra.mxu0 %v1579
        %v1715 = vpop.f32.mrf.mxu0
        %v1716 = vadd.f32 0.0, %v1715
        %1717 = vmatmul.f32.gmra.mxu0 %v1581
        %v1718 = vpop.f32.mrf.mxu0
        %v1719 = vadd.f32 0.0, %v1718
        %1720 = vmatmul.f32.gmra.mxu0 %v1583
        %v1721 = vpop.f32.mrf.mxu0
        %v1722 = vadd.f32 0.0, %v1721
        %1723 = vmatmul.f32.gmra.mxu0 %v1585
        %v1724 = vpop.f32.mrf.mxu0
        %v1725 = vadd.f32 0.0, %v1724
        %1726 = vmatmul.f32.gmra.mxu0 %v1587
        %v1727 = vpop.f32.mrf.mxu0
        %v1728 = vadd.f32 0.0, %v1727
        %1729 = vmatmul.f32.gmra.mxu0 %v1589
        %v1730 = vpop.f32.mrf.mxu0
        %v1731 = vadd.f32 0.0, %v1730
        %1732 = vdwg.mxu0
        %v1733 = vadd.f32 %v1472, %v1609
        %v1734 = vadd.f32 %v1473, %v1680
        %v1735 = vadd.f32 %v1474, %v1612
        %v1736 = vadd.f32 %v1475, %v1683
        %v1737 = vadd.f32 %v1476, %v1615
        %v1738 = vadd.f32 %v1477, %v1686
        %v1739 = vadd.f32 %v1478, %v1618
        %v1740 = vadd.f32 %v1479, %v1689
        %v1741 = vadd.f32 %v1480, %v1621
        %v1742 = vadd.f32 %v1481, %v1692
        %v1743 = vadd.f32 %v1482, %v1624
        %v1744 = vadd.f32 %v1483, %v1695
        %v1745 = vadd.f32 %v1484, %v1627
        %v1746 = vadd.f32 %v1485, %v1698
        %v1747 = vadd.f32 %v1486, %v1630
        %v1748 = vadd.f32 %v1487, %v1701
        %v1749 = vadd.f32 %v1488, %v1633
        %v1750 = vadd.f32 %v1489, %v1704
        %v1751 = vadd.f32 %v1490, %v1636
        %v1752 = vadd.f32 %v1491, %v1707
        %v1753 = vadd.f32 %v1492, %v1639
        %v1754 = vadd.f32 %v1493, %v1710
        %v1755 = vadd.f32 %v1494, %v1642
        %v1756 = vadd.f32 %v1495, %v1713
        %v1757 = vadd.f32 %v1496, %v1645
        %v1758 = vadd.f32 %v1497, %v1716
        %v1759 = vadd.f32 %v1498, %v1648
        %v1760 = vadd.f32 %v1499, %v1719
        %v1761 = vadd.f32 %v1500, %v1651
        %v1762 = vadd.f32 %v1501, %v1722
        %v1763 = vadd.f32 %v1502, %v1654
        %v1764 = vadd.f32 %v1503, %v1725
        %v1765 = vadd.f32 %v1504, %v1657
        %v1766 = vadd.f32 %v1505, %v1728
        %v1767 = vadd.f32 %v1506, %v1660
        %v1768 = vadd.f32 %v1507, %v1731
        %s1769 = scalar_lea.vmem %s2, 384
        %v1770 = vld [vmem:[%s1769] sm:$0xff]
        %v1771 = vld [vmem:[%s1769 + $0x8] sm:$0xff]
        %v1772 = vld [vmem:[%s1769 + $0x10] sm:$0xff]
        %v1773 = vld [vmem:[%s1769 + $0x18] sm:$0xff]
        %v1774 = vld [vmem:[%s1769 + $0x20] sm:$0xff]
        %v1775 = vld [vmem:[%s1769 + $0x28] sm:$0xff]
        %v1776 = vld [vmem:[%s1769 + $0x30] sm:$0xff]
        %v1777 = vld [vmem:[%s1769 + $0x38] sm:$0xff]
        %v1780 = vrot.slane %v356, 4
        %v1781 = vsel %vm1517, %v1553, %v1780
        %v1782 = vrot.slane %v357, 4
        %v1783 = vsel %vm1517, %v1780, %v1782
        %v1784 = vsel %vm432, %v1781, 0
        %v1786 = vsel %vm432, %v1783, 0
        %1788 = vmatpush.msra.mxu0 0.0
        %1789 = vmatpush.msra.mxu0 0.0
        %1790 = vmatpush.msra.mxu0 0.0
        %1791 = vmatpush.msra.mxu0 0.0
        %1792 = vmatpush.msra.mxu0 0.0
        %1793 = vmatpush.msra.mxu0 0.0
        %1794 = vmatpush.msra.mxu0 0.0
        %1795 = vmatpush.msra.mxu0 0.0
        %1796 = vmatpush.msra.mxu0 0.0
        %1797 = vmatpush.msra.mxu0 0.0
        %1798 = vmatpush.msra.mxu0 0.0
        %1799 = vmatpush.msra.mxu0 0.0
        %1800 = vmatpush.msra.mxu0 %v1776
        %1801 = vmatpush.msra.mxu0 %v1774
        %1802 = vmatpush.msra.mxu0 %v1772
        %1803 = vmatpush.msra.mxu0 %v1770
        %1804 = vmatmul.f32.gmra.mxu0 %v1559
        %v1805 = vpop.f32.mrf.mxu0
        %v1806 = vadd.f32 0.0, %v1805
        %1807 = vmatmul.f32.gmra.mxu0 %v1561
        %v1808 = vpop.f32.mrf.mxu0
        %v1809 = vadd.f32 0.0, %v1808
        %1810 = vmatmul.f32.gmra.mxu0 %v1563
        %v1811 = vpop.f32.mrf.mxu0
        %v1812 = vadd.f32 0.0, %v1811
        %1813 = vmatmul.f32.gmra.mxu0 %v1565
        %v1814 = vpop.f32.mrf.mxu0
        %v1815 = vadd.f32 0.0, %v1814
        %1816 = vmatmul.f32.gmra.mxu0 %v1567
        %v1817 = vpop.f32.mrf.mxu0
        %v1818 = vadd.f32 0.0, %v1817
        %1819 = vmatmul.f32.gmra.mxu0 %v1569
        %v1820 = vpop.f32.mrf.mxu0
        %v1821 = vadd.f32 0.0, %v1820
        %1822 = vmatmul.f32.gmra.mxu0 %v1571
        %v1823 = vpop.f32.mrf.mxu0
        %v1824 = vadd.f32 0.0, %v1823
        %1825 = vmatmul.f32.gmra.mxu0 %v1573
        %v1826 = vpop.f32.mrf.mxu0
        %v1827 = vadd.f32 0.0, %v1826
        %1828 = vmatmul.f32.gmra.mxu0 %v1575
        %v1829 = vpop.f32.mrf.mxu0
        %v1830 = vadd.f32 0.0, %v1829
        %1831 = vmatmul.f32.gmra.mxu0 %v1577
        %v1832 = vpop.f32.mrf.mxu0
        %v1833 = vadd.f32 0.0, %v1832
        %1834 = vmatmul.f32.gmra.mxu0 %v1579
        %v1835 = vpop.f32.mrf.mxu0
        %v1836 = vadd.f32 0.0, %v1835
        %1837 = vmatmul.f32.gmra.mxu0 %v1581
        %v1838 = vpop.f32.mrf.mxu0
        %v1839 = vadd.f32 0.0, %v1838
        %1840 = vmatmul.f32.gmra.mxu0 %v1583
        %v1841 = vpop.f32.mrf.mxu0
        %v1842 = vadd.f32 0.0, %v1841
        %1843 = vmatmul.f32.gmra.mxu0 %v1585
        %v1844 = vpop.f32.mrf.mxu0
        %v1845 = vadd.f32 0.0, %v1844
        %1846 = vmatmul.f32.gmra.mxu0 %v1587
        %v1847 = vpop.f32.mrf.mxu0
        %v1848 = vadd.f32 0.0, %v1847
        %1849 = vmatmul.f32.gmra.mxu0 %v1589
        %v1850 = vpop.f32.mrf.mxu0
        %v1851 = vadd.f32 0.0, %v1850
        %1852 = vmatmul.f32.gmra.mxu0 %v1784
        %v1853 = vpop.f32.mrf.mxu0
        %v1854 = vadd.f32 0.0, %v1853
        %1855 = vmatmul.f32.gmra.mxu0 %v1786
        %v1856 = vpop.f32.mrf.mxu0
        %v1857 = vadd.f32 0.0, %v1856
        %1858 = vdwg.mxu0
        %1859 = vmatpush.msra.mxu0 0.0
        %1860 = vmatpush.msra.mxu0 0.0
        %1861 = vmatpush.msra.mxu0 0.0
        %1862 = vmatpush.msra.mxu0 0.0
        %1863 = vmatpush.msra.mxu0 0.0
        %1864 = vmatpush.msra.mxu0 0.0
        %1865 = vmatpush.msra.mxu0 0.0
        %1866 = vmatpush.msra.mxu0 0.0
        %1867 = vmatpush.msra.mxu0 0.0
        %1868 = vmatpush.msra.mxu0 0.0
        %1869 = vmatpush.msra.mxu0 0.0
        %1870 = vmatpush.msra.mxu0 0.0
        %1871 = vmatpush.msra.mxu0 %v1777
        %1872 = vmatpush.msra.mxu0 %v1775
        %1873 = vmatpush.msra.mxu0 %v1773
        %1874 = vmatpush.msra.mxu0 %v1771
        %1875 = vmatmul.f32.gmra.mxu0 %v1559
        %v1876 = vpop.f32.mrf.mxu0
        %v1877 = vadd.f32 0.0, %v1876
        %1878 = vmatmul.f32.gmra.mxu0 %v1561
        %v1879 = vpop.f32.mrf.mxu0
        %v1880 = vadd.f32 0.0, %v1879
        %1881 = vmatmul.f32.gmra.mxu0 %v1563
        %v1882 = vpop.f32.mrf.mxu0
        %v1883 = vadd.f32 0.0, %v1882
        %1884 = vmatmul.f32.gmra.mxu0 %v1565
        %v1885 = vpop.f32.mrf.mxu0
        %v1886 = vadd.f32 0.0, %v1885
        %1887 = vmatmul.f32.gmra.mxu0 %v1567
        %v1888 = vpop.f32.mrf.mxu0
        %v1889 = vadd.f32 0.0, %v1888
        %1890 = vmatmul.f32.gmra.mxu0 %v1569
        %v1891 = vpop.f32.mrf.mxu0
        %v1892 = vadd.f32 0.0, %v1891
        %1893 = vmatmul.f32.gmra.mxu0 %v1571
        %v1894 = vpop.f32.mrf.mxu0
        %v1895 = vadd.f32 0.0, %v1894
        %1896 = vmatmul.f32.gmra.mxu0 %v1573
        %v1897 = vpop.f32.mrf.mxu0
        %v1898 = vadd.f32 0.0, %v1897
        %1899 = vmatmul.f32.gmra.mxu0 %v1575
        %v1900 = vpop.f32.mrf.mxu0
        %v1901 = vadd.f32 0.0, %v1900
        %1902 = vmatmul.f32.gmra.mxu0 %v1577
        %v1903 = vpop.f32.mrf.mxu0
        %v1904 = vadd.f32 0.0, %v1903
        %1905 = vmatmul.f32.gmra.mxu0 %v1579
        %v1906 = vpop.f32.mrf.mxu0
        %v1907 = vadd.f32 0.0, %v1906
        %1908 = vmatmul.f32.gmra.mxu0 %v1581
        %v1909 = vpop.f32.mrf.mxu0
        %v1910 = vadd.f32 0.0, %v1909
        %1911 = vmatmul.f32.gmra.mxu0 %v1583
        %v1912 = vpop.f32.mrf.mxu0
        %v1913 = vadd.f32 0.0, %v1912
        %1914 = vmatmul.f32.gmra.mxu0 %v1585
        %v1915 = vpop.f32.mrf.mxu0
        %v1916 = vadd.f32 0.0, %v1915
        %1917 = vmatmul.f32.gmra.mxu0 %v1587
        %v1918 = vpop.f32.mrf.mxu0
        %v1919 = vadd.f32 0.0, %v1918
        %1920 = vmatmul.f32.gmra.mxu0 %v1589
        %v1921 = vpop.f32.mrf.mxu0
        %v1922 = vadd.f32 0.0, %v1921
        %1923 = vmatmul.f32.gmra.mxu0 %v1784
        %v1924 = vpop.f32.mrf.mxu0
        %v1925 = vadd.f32 0.0, %v1924
        %1926 = vmatmul.f32.gmra.mxu0 %v1786
        %v1927 = vpop.f32.mrf.mxu0
        %v1928 = vadd.f32 0.0, %v1927
        %1929 = vdwg.mxu0
        %v1930 = vadd.f32 %v1733, %v1806
        %v1931 = vadd.f32 %v1734, %v1877
        %v1932 = vadd.f32 %v1735, %v1809
        %v1933 = vadd.f32 %v1736, %v1880
        %v1934 = vadd.f32 %v1737, %v1812
        %v1935 = vadd.f32 %v1738, %v1883
        %v1936 = vadd.f32 %v1739, %v1815
        %v1937 = vadd.f32 %v1740, %v1886
        %v1938 = vadd.f32 %v1741, %v1818
        %v1939 = vadd.f32 %v1742, %v1889
        %v1940 = vadd.f32 %v1743, %v1821
        %v1941 = vadd.f32 %v1744, %v1892
        %v1942 = vadd.f32 %v1745, %v1824
        %v1943 = vadd.f32 %v1746, %v1895
        %v1944 = vadd.f32 %v1747, %v1827
        %v1945 = vadd.f32 %v1748, %v1898
        %v1946 = vadd.f32 %v1749, %v1830
        %v1947 = vadd.f32 %v1750, %v1901
        %v1948 = vadd.f32 %v1751, %v1833
        %v1949 = vadd.f32 %v1752, %v1904
        %v1950 = vadd.f32 %v1753, %v1836
        %v1951 = vadd.f32 %v1754, %v1907
        %v1952 = vadd.f32 %v1755, %v1839
        %v1953 = vadd.f32 %v1756, %v1910
        %v1954 = vadd.f32 %v1757, %v1842
        %v1955 = vadd.f32 %v1758, %v1913
        %v1956 = vadd.f32 %v1759, %v1845
        %v1957 = vadd.f32 %v1760, %v1916
        %v1958 = vadd.f32 %v1761, %v1848
        %v1959 = vadd.f32 %v1762, %v1919
        %v1960 = vadd.f32 %v1763, %v1851
        %v1961 = vadd.f32 %v1764, %v1922
        %v1962 = vadd.f32 %v1765, %v1854
        %v1963 = vadd.f32 %v1766, %v1925
        %v1964 = vadd.f32 %v1767, %v1857
        %v1965 = vadd.f32 %v1768, %v1928
        %s1966 = scalar_lea.vmem %s2, 448
        %v1967 = vld [vmem:[%s1966] sm:$0xff]
        %v1968 = vld [vmem:[%s1966 + $0x8] sm:$0xff]
        %v1969 = vld [vmem:[%s1966 + $0x10] sm:$0xff]
        %v1970 = vld [vmem:[%s1966 + $0x18] sm:$0xff]
        %v1971 = vld [vmem:[%s1966 + $0x20] sm:$0xff]
        %v1972 = vld [vmem:[%s1966 + $0x28] sm:$0xff]
        %v1973 = vld [vmem:[%s1966 + $0x30] sm:$0xff]
        %v1974 = vld [vmem:[%s1966 + $0x38] sm:$0xff]
        %vm1975 = vcmask 1042432
        %v1976 = vrot.slane %v339, 5
        %v1977 = vrot.slane %v340, 5
        %v1978 = vsel %vm1975, %v1976, %v1977
        %v1979 = vrot.slane %v341, 5
        %v1980 = vsel %vm1975, %v1977, %v1979
        %v1981 = vrot.slane %v342, 5
        %v1982 = vsel %vm1975, %v1979, %v1981
        %v1983 = vrot.slane %v343, 5
        %v1984 = vsel %vm1975, %v1981, %v1983
        %v1985 = vrot.slane %v344, 5
        %v1986 = vsel %vm1975, %v1983, %v1985
        %v1987 = vrot.slane %v345, 5
        %v1988 = vsel %vm1975, %v1985, %v1987
        %v1989 = vrot.slane %v346, 5
        %v1990 = vsel %vm1975, %v1987, %v1989
        %v1991 = vrot.slane %v347, 5
        %v1992 = vsel %vm1975, %v1989, %v1991
        %v1993 = vrot.slane %v348, 5
        %v1994 = vsel %vm1975, %v1991, %v1993
        %v1995 = vrot.slane %v349, 5
        %v1996 = vsel %vm1975, %v1993, %v1995
        %v1997 = vrot.slane %v350, 5
        %v1998 = vsel %vm1975, %v1995, %v1997
        %v1999 = vrot.slane %v351, 5
        %v2000 = vsel %vm1975, %v1997, %v1999
        %v2001 = vrot.slane %v352, 5
        %v2002 = vsel %vm1975, %v1999, %v2001
        %v2003 = vrot.slane %v353, 5
        %v2004 = vsel %vm1975, %v2001, %v2003
        %v2005 = vrot.slane %v354, 5
        %v2006 = vsel %vm1975, %v2003, %v2005
        %v2007 = vrot.slane %v355, 5
        %v2008 = vsel %vm1975, %v2005, %v2007
        %v2009 = vrot.slane %v356, 5
        %v2010 = vsel %vm1975, %v2007, %v2009
        %v2011 = vrot.slane %v357, 5
        %v2012 = vsel %vm1975, %v2009, %v2011
        %v2013 = vsel %vm432, %v1978, 0
        %v2015 = vsel %vm432, %v1980, 0
        %v2017 = vsel %vm432, %v1982, 0
        %v2019 = vsel %vm432, %v1984, 0
        %v2021 = vsel %vm432, %v1986, 0
        %v2023 = vsel %vm432, %v1988, 0
        %v2025 = vsel %vm432, %v1990, 0
        %v2027 = vsel %vm432, %v1992, 0
        %v2029 = vsel %vm432, %v1994, 0
        %v2031 = vsel %vm432, %v1996, 0
        %v2033 = vsel %vm432, %v1998, 0
        %v2035 = vsel %vm432, %v2000, 0
        %v2037 = vsel %vm432, %v2002, 0
        %v2039 = vsel %vm432, %v2004, 0
        %v2041 = vsel %vm432, %v2006, 0
        %v2043 = vsel %vm432, %v2008, 0
        %v2045 = vsel %vm432, %v2010, 0
        %v2047 = vsel %vm432, %v2012, 0
        %2049 = vmatpush.msra.mxu0 0.0
        %2050 = vmatpush.msra.mxu0 0.0
        %2051 = vmatpush.msra.mxu0 0.0
        %2052 = vmatpush.msra.mxu0 0.0
        %2053 = vmatpush.msra.mxu0 0.0
        %2054 = vmatpush.msra.mxu0 0.0
        %2055 = vmatpush.msra.mxu0 0.0
        %2056 = vmatpush.msra.mxu0 0.0
        %2057 = vmatpush.msra.mxu0 0.0
        %2058 = vmatpush.msra.mxu0 0.0
        %2059 = vmatpush.msra.mxu0 0.0
        %2060 = vmatpush.msra.mxu0 0.0
        %2061 = vmatpush.msra.mxu0 %v1973
        %2062 = vmatpush.msra.mxu0 %v1971
        %2063 = vmatpush.msra.mxu0 %v1969
        %2064 = vmatpush.msra.mxu0 %v1967
        %2065 = vmatmul.f32.gmra.mxu0 %v2013
        %v2066 = vpop.f32.mrf.mxu0
        %v2067 = vadd.f32 0.0, %v2066
        %2068 = vmatmul.f32.gmra.mxu0 %v2015
        %v2069 = vpop.f32.mrf.mxu0
        %v2070 = vadd.f32 0.0, %v2069
        %2071 = vmatmul.f32.gmra.mxu0 %v2017
        %v2072 = vpop.f32.mrf.mxu0
        %v2073 = vadd.f32 0.0, %v2072
        %2074 = vmatmul.f32.gmra.mxu0 %v2019
        %v2075 = vpop.f32.mrf.mxu0
        %v2076 = vadd.f32 0.0, %v2075
        %2077 = vmatmul.f32.gmra.mxu0 %v2021
        %v2078 = vpop.f32.mrf.mxu0
        %v2079 = vadd.f32 0.0, %v2078
        %2080 = vmatmul.f32.gmra.mxu0 %v2023
        %v2081 = vpop.f32.mrf.mxu0
        %v2082 = vadd.f32 0.0, %v2081
        %2083 = vmatmul.f32.gmra.mxu0 %v2025
        %v2084 = vpop.f32.mrf.mxu0
        %v2085 = vadd.f32 0.0, %v2084
        %2086 = vmatmul.f32.gmra.mxu0 %v2027
        %v2087 = vpop.f32.mrf.mxu0
        %v2088 = vadd.f32 0.0, %v2087
        %2089 = vmatmul.f32.gmra.mxu0 %v2029
        %v2090 = vpop.f32.mrf.mxu0
        %v2091 = vadd.f32 0.0, %v2090
        %2092 = vmatmul.f32.gmra.mxu0 %v2031
        %v2093 = vpop.f32.mrf.mxu0
        %v2094 = vadd.f32 0.0, %v2093
        %2095 = vmatmul.f32.gmra.mxu0 %v2033
        %v2096 = vpop.f32.mrf.mxu0
        %v2097 = vadd.f32 0.0, %v2096
        %2098 = vmatmul.f32.gmra.mxu0 %v2035
        %v2099 = vpop.f32.mrf.mxu0
        %v2100 = vadd.f32 0.0, %v2099
        %2101 = vmatmul.f32.gmra.mxu0 %v2037
        %v2102 = vpop.f32.mrf.mxu0
        %v2103 = vadd.f32 0.0, %v2102
        %2104 = vmatmul.f32.gmra.mxu0 %v2039
        %v2105 = vpop.f32.mrf.mxu0
        %v2106 = vadd.f32 0.0, %v2105
        %2107 = vmatmul.f32.gmra.mxu0 %v2041
        %v2108 = vpop.f32.mrf.mxu0
        %v2109 = vadd.f32 0.0, %v2108
        %2110 = vmatmul.f32.gmra.mxu0 %v2043
        %v2111 = vpop.f32.mrf.mxu0
        %v2112 = vadd.f32 0.0, %v2111
        %2113 = vmatmul.f32.gmra.mxu0 %v2045
        %v2114 = vpop.f32.mrf.mxu0
        %v2115 = vadd.f32 0.0, %v2114
        %2116 = vmatmul.f32.gmra.mxu0 %v2047
        %v2117 = vpop.f32.mrf.mxu0
        %v2118 = vadd.f32 0.0, %v2117
        %2119 = vdwg.mxu0
        %2120 = vmatpush.msra.mxu0 0.0
        %2121 = vmatpush.msra.mxu0 0.0
        %2122 = vmatpush.msra.mxu0 0.0
        %2123 = vmatpush.msra.mxu0 0.0
        %2124 = vmatpush.msra.mxu0 0.0
        %2125 = vmatpush.msra.mxu0 0.0
        %2126 = vmatpush.msra.mxu0 0.0
        %2127 = vmatpush.msra.mxu0 0.0
        %2128 = vmatpush.msra.mxu0 0.0
        %2129 = vmatpush.msra.mxu0 0.0
        %2130 = vmatpush.msra.mxu0 0.0
        %2131 = vmatpush.msra.mxu0 0.0
        %2132 = vmatpush.msra.mxu0 %v1974
        %2133 = vmatpush.msra.mxu0 %v1972
        %2134 = vmatpush.msra.mxu0 %v1970
        %2135 = vmatpush.msra.mxu0 %v1968
        %2136 = vmatmul.f32.gmra.mxu0 %v2013
        %v2137 = vpop.f32.mrf.mxu0
        %v2138 = vadd.f32 0.0, %v2137
        %2139 = vmatmul.f32.gmra.mxu0 %v2015
        %v2140 = vpop.f32.mrf.mxu0
        %v2141 = vadd.f32 0.0, %v2140
        %2142 = vmatmul.f32.gmra.mxu0 %v2017
        %v2143 = vpop.f32.mrf.mxu0
        %v2144 = vadd.f32 0.0, %v2143
        %2145 = vmatmul.f32.gmra.mxu0 %v2019
        %v2146 = vpop.f32.mrf.mxu0
        %v2147 = vadd.f32 0.0, %v2146
        %2148 = vmatmul.f32.gmra.mxu0 %v2021
        %v2149 = vpop.f32.mrf.mxu0
        %v2150 = vadd.f32 0.0, %v2149
        %2151 = vmatmul.f32.gmra.mxu0 %v2023
        %v2152 = vpop.f32.mrf.mxu0
        %v2153 = vadd.f32 0.0, %v2152
        %2154 = vmatmul.f32.gmra.mxu0 %v2025
        %v2155 = vpop.f32.mrf.mxu0
        %v2156 = vadd.f32 0.0, %v2155
        %2157 = vmatmul.f32.gmra.mxu0 %v2027
        %v2158 = vpop.f32.mrf.mxu0
        %v2159 = vadd.f32 0.0, %v2158
        %2160 = vmatmul.f32.gmra.mxu0 %v2029
        %v2161 = vpop.f32.mrf.mxu0
        %v2162 = vadd.f32 0.0, %v2161
        %2163 = vmatmul.f32.gmra.mxu0 %v2031
        %v2164 = vpop.f32.mrf.mxu0
        %v2165 = vadd.f32 0.0, %v2164
        %2166 = vmatmul.f32.gmra.mxu0 %v2033
        %v2167 = vpop.f32.mrf.mxu0
        %v2168 = vadd.f32 0.0, %v2167
        %2169 = vmatmul.f32.gmra.mxu0 %v2035
        %v2170 = vpop.f32.mrf.mxu0
        %v2171 = vadd.f32 0.0, %v2170
        %2172 = vmatmul.f32.gmra.mxu0 %v2037
        %v2173 = vpop.f32.mrf.mxu0
        %v2174 = vadd.f32 0.0, %v2173
        %2175 = vmatmul.f32.gmra.mxu0 %v2039
        %v2176 = vpop.f32.mrf.mxu0
        %v2177 = vadd.f32 0.0, %v2176
        %2178 = vmatmul.f32.gmra.mxu0 %v2041
        %v2179 = vpop.f32.mrf.mxu0
        %v2180 = vadd.f32 0.0, %v2179
        %2181 = vmatmul.f32.gmra.mxu0 %v2043
        %v2182 = vpop.f32.mrf.mxu0
        %v2183 = vadd.f32 0.0, %v2182
        %2184 = vmatmul.f32.gmra.mxu0 %v2045
        %v2185 = vpop.f32.mrf.mxu0
        %v2186 = vadd.f32 0.0, %v2185
        %2187 = vmatmul.f32.gmra.mxu0 %v2047
        %v2188 = vpop.f32.mrf.mxu0
        %v2189 = vadd.f32 0.0, %v2188
        %2190 = vdwg.mxu0
        %v2191 = vadd.f32 %v1930, %v2067
        %v2192 = vadd.f32 %v1931, %v2138
        %v2193 = vadd.f32 %v1932, %v2070
        %v2194 = vadd.f32 %v1933, %v2141
        %v2195 = vadd.f32 %v1934, %v2073
        %v2196 = vadd.f32 %v1935, %v2144
        %v2197 = vadd.f32 %v1936, %v2076
        %v2198 = vadd.f32 %v1937, %v2147
        %v2199 = vadd.f32 %v1938, %v2079
        %v2200 = vadd.f32 %v1939, %v2150
        %v2201 = vadd.f32 %v1940, %v2082
        %v2202 = vadd.f32 %v1941, %v2153
        %v2203 = vadd.f32 %v1942, %v2085
        %v2204 = vadd.f32 %v1943, %v2156
        %v2205 = vadd.f32 %v1944, %v2088
        %v2206 = vadd.f32 %v1945, %v2159
        %v2207 = vadd.f32 %v1946, %v2091
        %v2208 = vadd.f32 %v1947, %v2162
        %v2209 = vadd.f32 %v1948, %v2094
        %v2210 = vadd.f32 %v1949, %v2165
        %v2211 = vadd.f32 %v1950, %v2097
        %v2212 = vadd.f32 %v1951, %v2168
        %v2213 = vadd.f32 %v1952, %v2100
        %v2214 = vadd.f32 %v1953, %v2171
        %v2215 = vadd.f32 %v1954, %v2103
        %v2216 = vadd.f32 %v1955, %v2174
        %v2217 = vadd.f32 %v1956, %v2106
        %v2218 = vadd.f32 %v1957, %v2177
        %v2219 = vadd.f32 %v1958, %v2109
        %v2220 = vadd.f32 %v1959, %v2180
        %v2221 = vadd.f32 %v1960, %v2112
        %v2222 = vadd.f32 %v1961, %v2183
        %v2223 = vadd.f32 %v1962, %v2115
        %v2224 = vadd.f32 %v1963, %v2186
        %v2225 = vadd.f32 %v1964, %v2118
        %v2226 = vadd.f32 %v1965, %v2189
        %s2227 = scalar_lea.vmem %s2, 512
        %v2228 = vld [vmem:[%s2227] sm:$0xff]
        %v2229 = vld [vmem:[%s2227 + $0x8] sm:$0xff]
        %v2230 = vld [vmem:[%s2227 + $0x10] sm:$0xff]
        %v2231 = vld [vmem:[%s2227 + $0x18] sm:$0xff]
        %v2232 = vld [vmem:[%s2227 + $0x20] sm:$0xff]
        %v2233 = vld [vmem:[%s2227 + $0x28] sm:$0xff]
        %v2234 = vld [vmem:[%s2227 + $0x30] sm:$0xff]
        %v2235 = vld [vmem:[%s2227 + $0x38] sm:$0xff]
        %vm2236 = vcmask 1041408
        %v2237 = vrot.slane %v339, 6
        %v2238 = vrot.slane %v340, 6
        %v2239 = vsel %vm2236, %v2237, %v2238
        %v2240 = vrot.slane %v341, 6
        %v2241 = vsel %vm2236, %v2238, %v2240
        %v2242 = vrot.slane %v342, 6
        %v2243 = vsel %vm2236, %v2240, %v2242
        %v2244 = vrot.slane %v343, 6
        %v2245 = vsel %vm2236, %v2242, %v2244
        %v2246 = vrot.slane %v344, 6
        %v2247 = vsel %vm2236, %v2244, %v2246
        %v2248 = vrot.slane %v345, 6
        %v2249 = vsel %vm2236, %v2246, %v2248
        %v2250 = vrot.slane %v346, 6
        %v2251 = vsel %vm2236, %v2248, %v2250
        %v2252 = vrot.slane %v347, 6
        %v2253 = vsel %vm2236, %v2250, %v2252
        %v2254 = vrot.slane %v348, 6
        %v2255 = vsel %vm2236, %v2252, %v2254
        %v2256 = vrot.slane %v349, 6
        %v2257 = vsel %vm2236, %v2254, %v2256
        %v2258 = vrot.slane %v350, 6
        %v2259 = vsel %vm2236, %v2256, %v2258
        %v2260 = vrot.slane %v351, 6
        %v2261 = vsel %vm2236, %v2258, %v2260
        %v2262 = vrot.slane %v352, 6
        %v2263 = vsel %vm2236, %v2260, %v2262
        %v2264 = vrot.slane %v353, 6
        %v2265 = vsel %vm2236, %v2262, %v2264
        %v2266 = vrot.slane %v354, 6
        %v2267 = vsel %vm2236, %v2264, %v2266
        %v2268 = vrot.slane %v355, 6
        %v2269 = vsel %vm2236, %v2266, %v2268
        %v2270 = vrot.slane %v356, 6
        %v2271 = vsel %vm2236, %v2268, %v2270
        %v2272 = vrot.slane %v357, 6
        %v2273 = vsel %vm2236, %v2270, %v2272
        %v2274 = vsel %vm432, %v2239, 0
        %v2276 = vsel %vm432, %v2241, 0
        %v2278 = vsel %vm432, %v2243, 0
        %v2280 = vsel %vm432, %v2245, 0
        %v2282 = vsel %vm432, %v2247, 0
        %v2284 = vsel %vm432, %v2249, 0
        %v2286 = vsel %vm432, %v2251, 0
        %v2288 = vsel %vm432, %v2253, 0
        %v2290 = vsel %vm432, %v2255, 0
        %v2292 = vsel %vm432, %v2257, 0
        %v2294 = vsel %vm432, %v2259, 0
        %v2296 = vsel %vm432, %v2261, 0
        %v2298 = vsel %vm432, %v2263, 0
        %v2300 = vsel %vm432, %v2265, 0
        %v2302 = vsel %vm432, %v2267, 0
        %v2304 = vsel %vm432, %v2269, 0
        %v2306 = vsel %vm432, %v2271, 0
        %v2308 = vsel %vm432, %v2273, 0
        %2310 = vmatpush.msra.mxu0 0.0
        %2311 = vmatpush.msra.mxu0 0.0
        %2312 = vmatpush.msra.mxu0 0.0
        %2313 = vmatpush.msra.mxu0 0.0
        %2314 = vmatpush.msra.mxu0 0.0
        %2315 = vmatpush.msra.mxu0 0.0
        %2316 = vmatpush.msra.mxu0 0.0
        %2317 = vmatpush.msra.mxu0 0.0
        %2318 = vmatpush.msra.mxu0 0.0
        %2319 = vmatpush.msra.mxu0 0.0
        %2320 = vmatpush.msra.mxu0 0.0
        %2321 = vmatpush.msra.mxu0 0.0
        %2322 = vmatpush.msra.mxu0 %v2234
        %2323 = vmatpush.msra.mxu0 %v2232
        %2324 = vmatpush.msra.mxu0 %v2230
        %2325 = vmatpush.msra.mxu0 %v2228
        %2326 = vmatmul.f32.gmra.mxu0 %v2274
        %v2327 = vpop.f32.mrf.mxu0
        %v2328 = vadd.f32 0.0, %v2327
        %2329 = vmatmul.f32.gmra.mxu0 %v2276
        %v2330 = vpop.f32.mrf.mxu0
        %v2331 = vadd.f32 0.0, %v2330
        %2332 = vmatmul.f32.gmra.mxu0 %v2278
        %v2333 = vpop.f32.mrf.mxu0
        %v2334 = vadd.f32 0.0, %v2333
        %2335 = vmatmul.f32.gmra.mxu0 %v2280
        %v2336 = vpop.f32.mrf.mxu0
        %v2337 = vadd.f32 0.0, %v2336
        %2338 = vmatmul.f32.gmra.mxu0 %v2282
        %v2339 = vpop.f32.mrf.mxu0
        %v2340 = vadd.f32 0.0, %v2339
        %2341 = vmatmul.f32.gmra.mxu0 %v2284
        %v2342 = vpop.f32.mrf.mxu0
        %v2343 = vadd.f32 0.0, %v2342
        %2344 = vmatmul.f32.gmra.mxu0 %v2286
        %v2345 = vpop.f32.mrf.mxu0
        %v2346 = vadd.f32 0.0, %v2345
        %2347 = vmatmul.f32.gmra.mxu0 %v2288
        %v2348 = vpop.f32.mrf.mxu0
        %v2349 = vadd.f32 0.0, %v2348
        %2350 = vmatmul.f32.gmra.mxu0 %v2290
        %v2351 = vpop.f32.mrf.mxu0
        %v2352 = vadd.f32 0.0, %v2351
        %2353 = vmatmul.f32.gmra.mxu0 %v2292
        %v2354 = vpop.f32.mrf.mxu0
        %v2355 = vadd.f32 0.0, %v2354
        %2356 = vmatmul.f32.gmra.mxu0 %v2294
        %v2357 = vpop.f32.mrf.mxu0
        %v2358 = vadd.f32 0.0, %v2357
        %2359 = vmatmul.f32.gmra.mxu0 %v2296
        %v2360 = vpop.f32.mrf.mxu0
        %v2361 = vadd.f32 0.0, %v2360
        %2362 = vmatmul.f32.gmra.mxu0 %v2298
        %v2363 = vpop.f32.mrf.mxu0
        %v2364 = vadd.f32 0.0, %v2363
        %2365 = vmatmul.f32.gmra.mxu0 %v2300
        %v2366 = vpop.f32.mrf.mxu0
        %v2367 = vadd.f32 0.0, %v2366
        %2368 = vmatmul.f32.gmra.mxu0 %v2302
        %v2369 = vpop.f32.mrf.mxu0
        %v2370 = vadd.f32 0.0, %v2369
        %2371 = vmatmul.f32.gmra.mxu0 %v2304
        %v2372 = vpop.f32.mrf.mxu0
        %v2373 = vadd.f32 0.0, %v2372
        %2374 = vmatmul.f32.gmra.mxu0 %v2306
        %v2375 = vpop.f32.mrf.mxu0
        %v2376 = vadd.f32 0.0, %v2375
        %2377 = vmatmul.f32.gmra.mxu0 %v2308
        %v2378 = vpop.f32.mrf.mxu0
        %v2379 = vadd.f32 0.0, %v2378
        %2380 = vdwg.mxu0
        %2381 = vmatpush.msra.mxu0 0.0
        %2382 = vmatpush.msra.mxu0 0.0
        %2383 = vmatpush.msra.mxu0 0.0
        %2384 = vmatpush.msra.mxu0 0.0
        %2385 = vmatpush.msra.mxu0 0.0
        %2386 = vmatpush.msra.mxu0 0.0
        %2387 = vmatpush.msra.mxu0 0.0
        %2388 = vmatpush.msra.mxu0 0.0
        %2389 = vmatpush.msra.mxu0 0.0
        %2390 = vmatpush.msra.mxu0 0.0
        %2391 = vmatpush.msra.mxu0 0.0
        %2392 = vmatpush.msra.mxu0 0.0
        %2393 = vmatpush.msra.mxu0 %v2235
        %2394 = vmatpush.msra.mxu0 %v2233
        %2395 = vmatpush.msra.mxu0 %v2231
        %2396 = vmatpush.msra.mxu0 %v2229
        %2397 = vmatmul.f32.gmra.mxu0 %v2274
        %v2398 = vpop.f32.mrf.mxu0
        %v2399 = vadd.f32 0.0, %v2398
        %2400 = vmatmul.f32.gmra.mxu0 %v2276
        %v2401 = vpop.f32.mrf.mxu0
        %v2402 = vadd.f32 0.0, %v2401
        %2403 = vmatmul.f32.gmra.mxu0 %v2278
        %v2404 = vpop.f32.mrf.mxu0
        %v2405 = vadd.f32 0.0, %v2404
        %2406 = vmatmul.f32.gmra.mxu0 %v2280
        %v2407 = vpop.f32.mrf.mxu0
        %v2408 = vadd.f32 0.0, %v2407
        %2409 = vmatmul.f32.gmra.mxu0 %v2282
        %v2410 = vpop.f32.mrf.mxu0
        %v2411 = vadd.f32 0.0, %v2410
        %2412 = vmatmul.f32.gmra.mxu0 %v2284
        %v2413 = vpop.f32.mrf.mxu0
        %v2414 = vadd.f32 0.0, %v2413
        %2415 = vmatmul.f32.gmra.mxu0 %v2286
        %v2416 = vpop.f32.mrf.mxu0
        %v2417 = vadd.f32 0.0, %v2416
        %2418 = vmatmul.f32.gmra.mxu0 %v2288
        %v2419 = vpop.f32.mrf.mxu0
        %v2420 = vadd.f32 0.0, %v2419
        %2421 = vmatmul.f32.gmra.mxu0 %v2290
        %v2422 = vpop.f32.mrf.mxu0
        %v2423 = vadd.f32 0.0, %v2422
        %2424 = vmatmul.f32.gmra.mxu0 %v2292
        %v2425 = vpop.f32.mrf.mxu0
        %v2426 = vadd.f32 0.0, %v2425
        %2427 = vmatmul.f32.gmra.mxu0 %v2294
        %v2428 = vpop.f32.mrf.mxu0
        %v2429 = vadd.f32 0.0, %v2428
        %2430 = vmatmul.f32.gmra.mxu0 %v2296
        %v2431 = vpop.f32.mrf.mxu0
        %v2432 = vadd.f32 0.0, %v2431
        %2433 = vmatmul.f32.gmra.mxu0 %v2298
        %v2434 = vpop.f32.mrf.mxu0
        %v2435 = vadd.f32 0.0, %v2434
        %2436 = vmatmul.f32.gmra.mxu0 %v2300
        %v2437 = vpop.f32.mrf.mxu0
        %v2438 = vadd.f32 0.0, %v2437
        %2439 = vmatmul.f32.gmra.mxu0 %v2302
        %v2440 = vpop.f32.mrf.mxu0
        %v2441 = vadd.f32 0.0, %v2440
        %2442 = vmatmul.f32.gmra.mxu0 %v2304
        %v2443 = vpop.f32.mrf.mxu0
        %v2444 = vadd.f32 0.0, %v2443
        %2445 = vmatmul.f32.gmra.mxu0 %v2306
        %v2446 = vpop.f32.mrf.mxu0
        %v2447 = vadd.f32 0.0, %v2446
        %2448 = vmatmul.f32.gmra.mxu0 %v2308
        %v2449 = vpop.f32.mrf.mxu0
        %v2450 = vadd.f32 0.0, %v2449
        %2451 = vdwg.mxu0
        %v2452 = vadd.f32 %v2191, %v2328
        %v2453 = vadd.f32 %v2192, %v2399
        %v2454 = vadd.f32 %v2193, %v2331
        %v2455 = vadd.f32 %v2194, %v2402
        %v2456 = vadd.f32 %v2195, %v2334
        %v2457 = vadd.f32 %v2196, %v2405
        %v2458 = vadd.f32 %v2197, %v2337
        %v2459 = vadd.f32 %v2198, %v2408
        %v2460 = vadd.f32 %v2199, %v2340
        %v2461 = vadd.f32 %v2200, %v2411
        %v2462 = vadd.f32 %v2201, %v2343
        %v2463 = vadd.f32 %v2202, %v2414
        %v2464 = vadd.f32 %v2203, %v2346
        %v2465 = vadd.f32 %v2204, %v2417
        %v2466 = vadd.f32 %v2205, %v2349
        %v2467 = vadd.f32 %v2206, %v2420
        %v2468 = vadd.f32 %v2207, %v2352
        %v2469 = vadd.f32 %v2208, %v2423
        %v2470 = vadd.f32 %v2209, %v2355
        %v2471 = vadd.f32 %v2210, %v2426
        %v2472 = vadd.f32 %v2211, %v2358
        %v2473 = vadd.f32 %v2212, %v2429
        %v2474 = vadd.f32 %v2213, %v2361
        %v2475 = vadd.f32 %v2214, %v2432
        %v2476 = vadd.f32 %v2215, %v2364
        %v2477 = vadd.f32 %v2216, %v2435
        %v2478 = vadd.f32 %v2217, %v2367
        %v2479 = vadd.f32 %v2218, %v2438
        %v2480 = vadd.f32 %v2219, %v2370
        %v2481 = vadd.f32 %v2220, %v2441
        %v2482 = vadd.f32 %v2221, %v2373
        %v2483 = vadd.f32 %v2222, %v2444
        %v2484 = vadd.f32 %v2223, %v2376
        %v2485 = vadd.f32 %v2224, %v2447
        %v2486 = vadd.f32 %v2225, %v2379
        %v2487 = vadd.f32 %v2226, %v2450
        %v2488 = vld [vmem:[%s3] sm:$0x3]
        %v2490 = vperm.slane %v2488, 0
        %v2491 = vperm.slane %v2488, 1
        %v2494 = vadd.f32 %v2452, %v2490
        %v2495 = vadd.f32 %v2453, %v2491
        %v2496 = vadd.f32 %v2454, %v2490
        %v2497 = vadd.f32 %v2455, %v2491
        %v2498 = vadd.f32 %v2456, %v2490
        %v2499 = vadd.f32 %v2457, %v2491
        %v2500 = vadd.f32 %v2458, %v2490
        %v2501 = vadd.f32 %v2459, %v2491
        %v2502 = vadd.f32 %v2460, %v2490
        %v2503 = vadd.f32 %v2461, %v2491
        %v2504 = vadd.f32 %v2462, %v2490
        %v2505 = vadd.f32 %v2463, %v2491
        %v2506 = vadd.f32 %v2464, %v2490
        %v2507 = vadd.f32 %v2465, %v2491
        %v2508 = vadd.f32 %v2466, %v2490
        %v2509 = vadd.f32 %v2467, %v2491
        %v2510 = vadd.f32 %v2468, %v2490
        %v2511 = vadd.f32 %v2469, %v2491
        %v2512 = vadd.f32 %v2470, %v2490
        %v2513 = vadd.f32 %v2471, %v2491
        %v2514 = vadd.f32 %v2472, %v2490
        %v2515 = vadd.f32 %v2473, %v2491
        %v2516 = vadd.f32 %v2474, %v2490
        %v2517 = vadd.f32 %v2475, %v2491
        %v2518 = vadd.f32 %v2476, %v2490
        %v2519 = vadd.f32 %v2477, %v2491
        %v2520 = vadd.f32 %v2478, %v2490
        %v2521 = vadd.f32 %v2479, %v2491
        %v2522 = vadd.f32 %v2480, %v2490
        %v2523 = vadd.f32 %v2481, %v2491
        %v2524 = vadd.f32 %v2482, %v2490
        %v2525 = vadd.f32 %v2483, %v2491
        %v2526 = vadd.f32 %v2484, %v2490
        %v2527 = vadd.f32 %v2485, %v2491
        %v2528 = vadd.f32 %v2486, %v2490
        %v2529 = vadd.f32 %v2487, %v2491
        %v2530 = vlaneseq
        %v2531 = vand.u32 %v2530, 127
        %vm2532 = vcmp.ge.s32.totalorder %v2531, 64
        %vm2533 = vcmp.lt.s32.totalorder %v2531, 96
        %vm2534 = vmand %vm2532, %vm2533
        %v2535 = vsel %vm2534, 1.0, 0.0
        %v2536 = vadd.f32 %v2494, %v2495
        %v2537 = vadd.f32 %v2496, %v2497
        %v2538 = vadd.f32 %v2498, %v2499
        %v2539 = vadd.f32 %v2500, %v2501
        %v2540 = vadd.f32 %v2502, %v2503
        %v2541 = vadd.f32 %v2504, %v2505
        %v2542 = vadd.f32 %v2506, %v2507
        %v2543 = vadd.f32 %v2508, %v2509
        %v2544 = vadd.f32 %v2510, %v2511
        %v2545 = vadd.f32 %v2512, %v2513
        %v2546 = vadd.f32 %v2514, %v2515
        %v2547 = vadd.f32 %v2516, %v2517
        %v2548 = vadd.f32 %v2518, %v2519
        %v2549 = vadd.f32 %v2520, %v2521
        %v2550 = vadd.f32 %v2522, %v2523
        %v2551 = vadd.f32 %v2524, %v2525
        %v2552 = vadd.f32 %v2526, %v2527
        %v2553 = vadd.f32 %v2528, %v2529
        %v2554 = vadd.f32 %v2536, %v2535
        %v2555 = vadd.f32 %v2537, %v2535
        %v2556 = vadd.f32 %v2538, %v2535
        %v2557 = vadd.f32 %v2539, %v2535
        %v2558 = vadd.f32 %v2540, %v2535
        %v2559 = vadd.f32 %v2541, %v2535
        %v2560 = vadd.f32 %v2542, %v2535
        %v2561 = vadd.f32 %v2543, %v2535
        %v2562 = vadd.f32 %v2544, %v2535
        %v2563 = vadd.f32 %v2545, %v2535
        %v2564 = vadd.f32 %v2546, %v2535
        %v2565 = vadd.f32 %v2547, %v2535
        %v2566 = vadd.f32 %v2548, %v2535
        %v2567 = vadd.f32 %v2549, %v2535
        %v2568 = vadd.f32 %v2550, %v2535
        %v2569 = vadd.f32 %v2551, %v2535
        %v2570 = vadd.f32 %v2552, %v2535
        %v2571 = vadd.f32 %v2553, %v2535
        %v2572 = vmul.f32 %v2494, 2.0
        %v2573 = vmul.f32 %v2496, 2.0
        %v2574 = vmul.f32 %v2498, 2.0
        %v2575 = vmul.f32 %v2500, 2.0
        %v2576 = vmul.f32 %v2502, 2.0
        %v2577 = vmul.f32 %v2504, 2.0
        %v2578 = vmul.f32 %v2506, 2.0
        %v2579 = vmul.f32 %v2508, 2.0
        %v2580 = vmul.f32 %v2510, 2.0
        %v2581 = vmul.f32 %v2512, 2.0
        %v2582 = vmul.f32 %v2514, 2.0
        %v2583 = vmul.f32 %v2516, 2.0
        %v2584 = vmul.f32 %v2518, 2.0
        %v2585 = vmul.f32 %v2520, 2.0
        %v2586 = vmul.f32 %v2522, 2.0
        %v2587 = vmul.f32 %v2524, 2.0
        %v2588 = vmul.f32 %v2526, 2.0
        %v2589 = vmul.f32 %v2528, 2.0
        %v2590 = vadd.f32 %v2572, %v2535
        %v2591 = vadd.f32 %v2573, %v2535
        %v2592 = vadd.f32 %v2574, %v2535
        %v2593 = vadd.f32 %v2575, %v2535
        %v2594 = vadd.f32 %v2576, %v2535
        %v2595 = vadd.f32 %v2577, %v2535
        %v2596 = vadd.f32 %v2578, %v2535
        %v2597 = vadd.f32 %v2579, %v2535
        %v2598 = vadd.f32 %v2580, %v2535
        %v2599 = vadd.f32 %v2581, %v2535
        %v2600 = vadd.f32 %v2582, %v2535
        %v2601 = vadd.f32 %v2583, %v2535
        %v2602 = vadd.f32 %v2584, %v2535
        %v2603 = vadd.f32 %v2585, %v2535
        %v2604 = vadd.f32 %v2586, %v2535
        %v2605 = vadd.f32 %v2587, %v2535
        %v2606 = vadd.f32 %v2588, %v2535
        %v2607 = vadd.f32 %v2589, %v2535
        %v2608 = vxor.u32 %v2554, 2147483648
        %v2609 = vxor.u32 %v2555, 2147483648
        %v2610 = vxor.u32 %v2556, 2147483648
        %v2611 = vxor.u32 %v2557, 2147483648
        %v2612 = vxor.u32 %v2558, 2147483648
        %v2613 = vxor.u32 %v2559, 2147483648
        %v2614 = vxor.u32 %v2560, 2147483648
        %v2615 = vxor.u32 %v2561, 2147483648
        %v2616 = vxor.u32 %v2562, 2147483648
        %v2617 = vxor.u32 %v2563, 2147483648
        %v2618 = vxor.u32 %v2564, 2147483648
        %v2619 = vxor.u32 %v2565, 2147483648
        %v2620 = vxor.u32 %v2566, 2147483648
        %v2621 = vxor.u32 %v2567, 2147483648
        %v2622 = vxor.u32 %v2568, 2147483648
        %v2623 = vxor.u32 %v2569, 2147483648
        %v2624 = vxor.u32 %v2570, 2147483648
        %v2625 = vxor.u32 %v2571, 2147483648
        %v2626 = vmul.f32 %v2608, 1.442695
        %v2627 = vpow.pop %v2626
        %v2628 = vmul.f32 %v2609, 1.442695
        %v2629 = vpow.pop %v2628
        %v2630 = vmul.f32 %v2610, 1.442695
        %v2631 = vpow.pop %v2630
        %v2632 = vmul.f32 %v2611, 1.442695
        %v2633 = vpow.pop %v2632
        %v2634 = vmul.f32 %v2612, 1.442695
        %v2635 = vpow.pop %v2634
        %v2636 = vmul.f32 %v2613, 1.442695
        %v2637 = vpow.pop %v2636
        %v2638 = vmul.f32 %v2614, 1.442695
        %v2639 = vpow.pop %v2638
        %v2640 = vmul.f32 %v2615, 1.442695
        %v2641 = vpow.pop %v2640
        %v2642 = vmul.f32 %v2616, 1.442695
        %v2643 = vpow.pop %v2642
        %v2644 = vmul.f32 %v2617, 1.442695
        %v2645 = vpow.pop %v2644
        %v2646 = vmul.f32 %v2618, 1.442695
        %v2647 = vpow.pop %v2646
        %v2648 = vmul.f32 %v2619, 1.442695
        %v2649 = vpow.pop %v2648
        %v2650 = vmul.f32 %v2620, 1.442695
        %v2651 = vpow.pop %v2650
        %v2652 = vmul.f32 %v2621, 1.442695
        %v2653 = vpow.pop %v2652
        %v2654 = vmul.f32 %v2622, 1.442695
        %v2655 = vpow.pop %v2654
        %v2656 = vmul.f32 %v2623, 1.442695
        %v2657 = vpow.pop %v2656
        %v2658 = vmul.f32 %v2624, 1.442695
        %v2659 = vpow.pop %v2658
        %v2660 = vmul.f32 %v2625, 1.442695
        %v2661 = vpow.pop %v2660
        %v2662 = vadd.f32 %v2627, 1.0
        %v2663 = vadd.f32 %v2629, 1.0
        %v2664 = vadd.f32 %v2631, 1.0
        %v2665 = vadd.f32 %v2633, 1.0
        %v2666 = vadd.f32 %v2635, 1.0
        %v2667 = vadd.f32 %v2637, 1.0
        %v2668 = vadd.f32 %v2639, 1.0
        %v2669 = vadd.f32 %v2641, 1.0
        %v2670 = vadd.f32 %v2643, 1.0
        %v2671 = vadd.f32 %v2645, 1.0
        %v2672 = vadd.f32 %v2647, 1.0
        %v2673 = vadd.f32 %v2649, 1.0
        %v2674 = vadd.f32 %v2651, 1.0
        %v2675 = vadd.f32 %v2653, 1.0
        %v2676 = vadd.f32 %v2655, 1.0
        %v2677 = vadd.f32 %v2657, 1.0
        %v2678 = vadd.f32 %v2659, 1.0
        %v2679 = vadd.f32 %v2661, 1.0
        %v2680 = vrcp.pop %v2662
        %v2681 = vmul.f32 %v2662, %v2680
        %v2682 = vsub.f32 1.0, %v2681
        %v2683 = vmul.f32 %v2680, %v2682
        %v2684 = vadd.f32 %v2680, %v2683
        %vm2685 = vweird.f32 %v2662
        %vm2686 = vweird.f32 %v2680
        %vm2687 = vmor %vm2685, %vm2686
        %v2688 = vsel %vm2687, %v2680, %v2684
        %v2689 = vand.u32 2147483647, %v2662
        %vm2690 = vcmp.eq.f32.partialorder %v2689, 8.507059e+37
        %v2691 = vand.u32 %v2662, 2147483648
        %v2692 = vor.u32 1.1754944e-38, %v2691
        %v2693 = vsel %vm2690, %v2692, %v2688
        %v2694 = vmul.f32 1.0, %v2693
        %v2695 = vrcp.pop %v2663
        %v2696 = vmul.f32 %v2663, %v2695
        %v2697 = vsub.f32 1.0, %v2696
        %v2698 = vmul.f32 %v2695, %v2697
        %v2699 = vadd.f32 %v2695, %v2698
        %vm2700 = vweird.f32 %v2663
        %vm2701 = vweird.f32 %v2695
        %vm2702 = vmor %vm2700, %vm2701
        %v2703 = vsel %vm2702, %v2695, %v2699
        %v2704 = vand.u32 2147483647, %v2663
        %vm2705 = vcmp.eq.f32.partialorder %v2704, 8.507059e+37
        %v2706 = vand.u32 %v2663, 2147483648
        %v2707 = vor.u32 1.1754944e-38, %v2706
        %v2708 = vsel %vm2705, %v2707, %v2703
        %v2709 = vmul.f32 1.0, %v2708
        %v2710 = vrcp.pop %v2664
        %v2711 = vmul.f32 %v2664, %v2710
        %v2712 = vsub.f32 1.0, %v2711
        %v2713 = vmul.f32 %v2710, %v2712
        %v2714 = vadd.f32 %v2710, %v2713
        %vm2715 = vweird.f32 %v2664
        %vm2716 = vweird.f32 %v2710
        %vm2717 = vmor %vm2715, %vm2716
        %v2718 = vsel %vm2717, %v2710, %v2714
        %v2719 = vand.u32 2147483647, %v2664
        %vm2720 = vcmp.eq.f32.partialorder %v2719, 8.507059e+37
        %v2721 = vand.u32 %v2664, 2147483648
        %v2722 = vor.u32 1.1754944e-38, %v2721
        %v2723 = vsel %vm2720, %v2722, %v2718
        %v2724 = vmul.f32 1.0, %v2723
        %v2725 = vrcp.pop %v2665
        %v2726 = vmul.f32 %v2665, %v2725
        %v2727 = vsub.f32 1.0, %v2726
        %v2728 = vmul.f32 %v2725, %v2727
        %v2729 = vadd.f32 %v2725, %v2728
        %vm2730 = vweird.f32 %v2665
        %vm2731 = vweird.f32 %v2725
        %vm2732 = vmor %vm2730, %vm2731
        %v2733 = vsel %vm2732, %v2725, %v2729
        %v2734 = vand.u32 2147483647, %v2665
        %vm2735 = vcmp.eq.f32.partialorder %v2734, 8.507059e+37
        %v2736 = vand.u32 %v2665, 2147483648
        %v2737 = vor.u32 1.1754944e-38, %v2736
        %v2738 = vsel %vm2735, %v2737, %v2733
        %v2739 = vmul.f32 1.0, %v2738
        %v2740 = vrcp.pop %v2666
        %v2741 = vmul.f32 %v2666, %v2740
        %v2742 = vsub.f32 1.0, %v2741
        %v2743 = vmul.f32 %v2740, %v2742
        %v2744 = vadd.f32 %v2740, %v2743
        %vm2745 = vweird.f32 %v2666
        %vm2746 = vweird.f32 %v2740
        %vm2747 = vmor %vm2745, %vm2746
        %v2748 = vsel %vm2747, %v2740, %v2744
        %v2749 = vand.u32 2147483647, %v2666
        %vm2750 = vcmp.eq.f32.partialorder %v2749, 8.507059e+37
        %v2751 = vand.u32 %v2666, 2147483648
        %v2752 = vor.u32 1.1754944e-38, %v2751
        %v2753 = vsel %vm2750, %v2752, %v2748
        %v2754 = vmul.f32 1.0, %v2753
        %v2755 = vrcp.pop %v2667
        %v2756 = vmul.f32 %v2667, %v2755
        %v2757 = vsub.f32 1.0, %v2756
        %v2758 = vmul.f32 %v2755, %v2757
        %v2759 = vadd.f32 %v2755, %v2758
        %vm2760 = vweird.f32 %v2667
        %vm2761 = vweird.f32 %v2755
        %vm2762 = vmor %vm2760, %vm2761
        %v2763 = vsel %vm2762, %v2755, %v2759
        %v2764 = vand.u32 2147483647, %v2667
        %vm2765 = vcmp.eq.f32.partialorder %v2764, 8.507059e+37
        %v2766 = vand.u32 %v2667, 2147483648
        %v2767 = vor.u32 1.1754944e-38, %v2766
        %v2768 = vsel %vm2765, %v2767, %v2763
        %v2769 = vmul.f32 1.0, %v2768
        %v2770 = vrcp.pop %v2668
        %v2771 = vmul.f32 %v2668, %v2770
        %v2772 = vsub.f32 1.0, %v2771
        %v2773 = vmul.f32 %v2770, %v2772
        %v2774 = vadd.f32 %v2770, %v2773
        %vm2775 = vweird.f32 %v2668
        %vm2776 = vweird.f32 %v2770
        %vm2777 = vmor %vm2775, %vm2776
        %v2778 = vsel %vm2777, %v2770, %v2774
        %v2779 = vand.u32 2147483647, %v2668
        %vm2780 = vcmp.eq.f32.partialorder %v2779, 8.507059e+37
        %v2781 = vand.u32 %v2668, 2147483648
        %v2782 = vor.u32 1.1754944e-38, %v2781
        %v2783 = vsel %vm2780, %v2782, %v2778
        %v2784 = vmul.f32 1.0, %v2783
        %v2785 = vrcp.pop %v2669
        %v2786 = vmul.f32 %v2669, %v2785
        %v2787 = vsub.f32 1.0, %v2786
        %v2788 = vmul.f32 %v2785, %v2787
        %v2789 = vadd.f32 %v2785, %v2788
        %vm2790 = vweird.f32 %v2669
        %vm2791 = vweird.f32 %v2785
        %vm2792 = vmor %vm2790, %vm2791
        %v2793 = vsel %vm2792, %v2785, %v2789
        %v2794 = vand.u32 2147483647, %v2669
        %vm2795 = vcmp.eq.f32.partialorder %v2794, 8.507059e+37
        %v2796 = vand.u32 %v2669, 2147483648
        %v2797 = vor.u32 1.1754944e-38, %v2796
        %v2798 = vsel %vm2795, %v2797, %v2793
        %v2799 = vmul.f32 1.0, %v2798
        %v2800 = vrcp.pop %v2670
        %v2801 = vmul.f32 %v2670, %v2800
        %v2802 = vsub.f32 1.0, %v2801
        %v2803 = vmul.f32 %v2800, %v2802
        %v2804 = vadd.f32 %v2800, %v2803
        %vm2805 = vweird.f32 %v2670
        %vm2806 = vweird.f32 %v2800
        %vm2807 = vmor %vm2805, %vm2806
        %v2808 = vsel %vm2807, %v2800, %v2804
        %v2809 = vand.u32 2147483647, %v2670
        %vm2810 = vcmp.eq.f32.partialorder %v2809, 8.507059e+37
        %v2811 = vand.u32 %v2670, 2147483648
        %v2812 = vor.u32 1.1754944e-38, %v2811
        %v2813 = vsel %vm2810, %v2812, %v2808
        %v2814 = vmul.f32 1.0, %v2813
        %v2815 = vrcp.pop %v2671
        %v2816 = vmul.f32 %v2671, %v2815
        %v2817 = vsub.f32 1.0, %v2816
        %v2818 = vmul.f32 %v2815, %v2817
        %v2819 = vadd.f32 %v2815, %v2818
        %vm2820 = vweird.f32 %v2671
        %vm2821 = vweird.f32 %v2815
        %vm2822 = vmor %vm2820, %vm2821
        %v2823 = vsel %vm2822, %v2815, %v2819
        %v2824 = vand.u32 2147483647, %v2671
        %vm2825 = vcmp.eq.f32.partialorder %v2824, 8.507059e+37
        %v2826 = vand.u32 %v2671, 2147483648
        %v2827 = vor.u32 1.1754944e-38, %v2826
        %v2828 = vsel %vm2825, %v2827, %v2823
        %v2829 = vmul.f32 1.0, %v2828
        %v2830 = vrcp.pop %v2672
        %v2831 = vmul.f32 %v2672, %v2830
        %v2832 = vsub.f32 1.0, %v2831
        %v2833 = vmul.f32 %v2830, %v2832
        %v2834 = vadd.f32 %v2830, %v2833
        %vm2835 = vweird.f32 %v2672
        %vm2836 = vweird.f32 %v2830
        %vm2837 = vmor %vm2835, %vm2836
        %v2838 = vsel %vm2837, %v2830, %v2834
        %v2839 = vand.u32 2147483647, %v2672
        %vm2840 = vcmp.eq.f32.partialorder %v2839, 8.507059e+37
        %v2841 = vand.u32 %v2672, 2147483648
        %v2842 = vor.u32 1.1754944e-38, %v2841
        %v2843 = vsel %vm2840, %v2842, %v2838
        %v2844 = vmul.f32 1.0, %v2843
        %v2845 = vrcp.pop %v2673
        %v2846 = vmul.f32 %v2673, %v2845
        %v2847 = vsub.f32 1.0, %v2846
        %v2848 = vmul.f32 %v2845, %v2847
        %v2849 = vadd.f32 %v2845, %v2848
        %vm2850 = vweird.f32 %v2673
        %vm2851 = vweird.f32 %v2845
        %vm2852 = vmor %vm2850, %vm2851
        %v2853 = vsel %vm2852, %v2845, %v2849
        %v2854 = vand.u32 2147483647, %v2673
        %vm2855 = vcmp.eq.f32.partialorder %v2854, 8.507059e+37
        %v2856 = vand.u32 %v2673, 2147483648
        %v2857 = vor.u32 1.1754944e-38, %v2856
        %v2858 = vsel %vm2855, %v2857, %v2853
        %v2859 = vmul.f32 1.0, %v2858
        %v2860 = vrcp.pop %v2674
        %v2861 = vmul.f32 %v2674, %v2860
        %v2862 = vsub.f32 1.0, %v2861
        %v2863 = vmul.f32 %v2860, %v2862
        %v2864 = vadd.f32 %v2860, %v2863
        %vm2865 = vweird.f32 %v2674
        %vm2866 = vweird.f32 %v2860
        %vm2867 = vmor %vm2865, %vm2866
        %v2868 = vsel %vm2867, %v2860, %v2864
        %v2869 = vand.u32 2147483647, %v2674
        %vm2870 = vcmp.eq.f32.partialorder %v2869, 8.507059e+37
        %v2871 = vand.u32 %v2674, 2147483648
        %v2872 = vor.u32 1.1754944e-38, %v2871
        %v2873 = vsel %vm2870, %v2872, %v2868
        %v2874 = vmul.f32 1.0, %v2873
        %v2875 = vrcp.pop %v2675
        %v2876 = vmul.f32 %v2675, %v2875
        %v2877 = vsub.f32 1.0, %v2876
        %v2878 = vmul.f32 %v2875, %v2877
        %v2879 = vadd.f32 %v2875, %v2878
        %vm2880 = vweird.f32 %v2675
        %vm2881 = vweird.f32 %v2875
        %vm2882 = vmor %vm2880, %vm2881
        %v2883 = vsel %vm2882, %v2875, %v2879
        %v2884 = vand.u32 2147483647, %v2675
        %vm2885 = vcmp.eq.f32.partialorder %v2884, 8.507059e+37
        %v2886 = vand.u32 %v2675, 2147483648
        %v2887 = vor.u32 1.1754944e-38, %v2886
        %v2888 = vsel %vm2885, %v2887, %v2883
        %v2889 = vmul.f32 1.0, %v2888
        %v2890 = vrcp.pop %v2676
        %v2891 = vmul.f32 %v2676, %v2890
        %v2892 = vsub.f32 1.0, %v2891
        %v2893 = vmul.f32 %v2890, %v2892
        %v2894 = vadd.f32 %v2890, %v2893
        %vm2895 = vweird.f32 %v2676
        %vm2896 = vweird.f32 %v2890
        %vm2897 = vmor %vm2895, %vm2896
        %v2898 = vsel %vm2897, %v2890, %v2894
        %v2899 = vand.u32 2147483647, %v2676
        %vm2900 = vcmp.eq.f32.partialorder %v2899, 8.507059e+37
        %v2901 = vand.u32 %v2676, 2147483648
        %v2902 = vor.u32 1.1754944e-38, %v2901
        %v2903 = vsel %vm2900, %v2902, %v2898
        %v2904 = vmul.f32 1.0, %v2903
        %v2905 = vrcp.pop %v2677
        %v2906 = vmul.f32 %v2677, %v2905
        %v2907 = vsub.f32 1.0, %v2906
        %v2908 = vmul.f32 %v2905, %v2907
        %v2909 = vadd.f32 %v2905, %v2908
        %vm2910 = vweird.f32 %v2677
        %vm2911 = vweird.f32 %v2905
        %vm2912 = vmor %vm2910, %vm2911
        %v2913 = vsel %vm2912, %v2905, %v2909
        %v2914 = vand.u32 2147483647, %v2677
        %vm2915 = vcmp.eq.f32.partialorder %v2914, 8.507059e+37
        %v2916 = vand.u32 %v2677, 2147483648
        %v2917 = vor.u32 1.1754944e-38, %v2916
        %v2918 = vsel %vm2915, %v2917, %v2913
        %v2919 = vmul.f32 1.0, %v2918
        %v2920 = vrcp.pop %v2678
        %v2921 = vmul.f32 %v2678, %v2920
        %v2922 = vsub.f32 1.0, %v2921
        %v2923 = vmul.f32 %v2920, %v2922
        %v2924 = vadd.f32 %v2920, %v2923
        %vm2925 = vweird.f32 %v2678
        %vm2926 = vweird.f32 %v2920
        %vm2927 = vmor %vm2925, %vm2926
        %v2928 = vsel %vm2927, %v2920, %v2924
        %v2929 = vand.u32 2147483647, %v2678
        %vm2930 = vcmp.eq.f32.partialorder %v2929, 8.507059e+37
        %v2931 = vand.u32 %v2678, 2147483648
        %v2932 = vor.u32 1.1754944e-38, %v2931
        %v2933 = vsel %vm2930, %v2932, %v2928
        %v2934 = vmul.f32 1.0, %v2933
        %v2935 = vrcp.pop %v2679
        %v2936 = vmul.f32 %v2679, %v2935
        %v2937 = vsub.f32 1.0, %v2936
        %v2938 = vmul.f32 %v2935, %v2937
        %v2939 = vadd.f32 %v2935, %v2938
        %vm2940 = vweird.f32 %v2679
        %vm2941 = vweird.f32 %v2935
        %vm2942 = vmor %vm2940, %vm2941
        %v2943 = vsel %vm2942, %v2935, %v2939
        %v2944 = vand.u32 2147483647, %v2679
        %vm2945 = vcmp.eq.f32.partialorder %v2944, 8.507059e+37
        %v2946 = vand.u32 %v2679, 2147483648
        %v2947 = vor.u32 1.1754944e-38, %v2946
        %v2948 = vsel %vm2945, %v2947, %v2943
        %v2949 = vmul.f32 1.0, %v2948
        %v2950 = vtanh.pop %v2554
        %v2951 = vtanh.pop %v2555
        %v2952 = vtanh.pop %v2556
        %v2953 = vtanh.pop %v2557
        %v2954 = vtanh.pop %v2558
        %v2955 = vtanh.pop %v2559
        %v2956 = vtanh.pop %v2560
        %v2957 = vtanh.pop %v2561
        %v2958 = vtanh.pop %v2562
        %v2959 = vtanh.pop %v2563
        %v2960 = vtanh.pop %v2564
        %v2961 = vtanh.pop %v2565
        %v2962 = vtanh.pop %v2566
        %v2963 = vtanh.pop %v2567
        %v2964 = vtanh.pop %v2568
        %v2965 = vtanh.pop %v2569
        %v2966 = vtanh.pop %v2570
        %v2967 = vtanh.pop %v2571
        %v2968 = vxor.u32 %v2590, 2147483648
        %v2969 = vxor.u32 %v2591, 2147483648
        %v2970 = vxor.u32 %v2592, 2147483648
        %v2971 = vxor.u32 %v2593, 2147483648
        %v2972 = vxor.u32 %v2594, 2147483648
        %v2973 = vxor.u32 %v2595, 2147483648
        %v2974 = vxor.u32 %v2596, 2147483648
        %v2975 = vxor.u32 %v2597, 2147483648
        %v2976 = vxor.u32 %v2598, 2147483648
        %v2977 = vxor.u32 %v2599, 2147483648
        %v2978 = vxor.u32 %v2600, 2147483648
        %v2979 = vxor.u32 %v2601, 2147483648
        %v2980 = vxor.u32 %v2602, 2147483648
        %v2981 = vxor.u32 %v2603, 2147483648
        %v2982 = vxor.u32 %v2604, 2147483648
        %v2983 = vxor.u32 %v2605, 2147483648
        %v2984 = vxor.u32 %v2606, 2147483648
        %v2985 = vxor.u32 %v2607, 2147483648
        %v2986 = vmul.f32 %v2968, 1.442695
        %v2987 = vpow.pop %v2986
        %v2988 = vmul.f32 %v2969, 1.442695
        %v2989 = vpow.pop %v2988
        %v2990 = vmul.f32 %v2970, 1.442695
        %v2991 = vpow.pop %v2990
        %v2992 = vmul.f32 %v2971, 1.442695
        %v2993 = vpow.pop %v2992
        %v2994 = vmul.f32 %v2972, 1.442695
        %v2995 = vpow.pop %v2994
        %v2996 = vmul.f32 %v2973, 1.442695
        %v2997 = vpow.pop %v2996
        %v2998 = vmul.f32 %v2974, 1.442695
        %v2999 = vpow.pop %v2998
        %v3000 = vmul.f32 %v2975, 1.442695
        %v3001 = vpow.pop %v3000
        %v3002 = vmul.f32 %v2976, 1.442695
        %v3003 = vpow.pop %v3002
        %v3004 = vmul.f32 %v2977, 1.442695
        %v3005 = vpow.pop %v3004
        %v3006 = vmul.f32 %v2978, 1.442695
        %v3007 = vpow.pop %v3006
        %v3008 = vmul.f32 %v2979, 1.442695
        %v3009 = vpow.pop %v3008
        %v3010 = vmul.f32 %v2980, 1.442695
        %v3011 = vpow.pop %v3010
        %v3012 = vmul.f32 %v2981, 1.442695
        %v3013 = vpow.pop %v3012
        %v3014 = vmul.f32 %v2982, 1.442695
        %v3015 = vpow.pop %v3014
        %v3016 = vmul.f32 %v2983, 1.442695
        %v3017 = vpow.pop %v3016
        %v3018 = vmul.f32 %v2984, 1.442695
        %v3019 = vpow.pop %v3018
        %v3020 = vmul.f32 %v2985, 1.442695
        %v3021 = vpow.pop %v3020
        %v3022 = vadd.f32 %v2987, 1.0
        %v3023 = vadd.f32 %v2989, 1.0
        %v3024 = vadd.f32 %v2991, 1.0
        %v3025 = vadd.f32 %v2993, 1.0
        %v3026 = vadd.f32 %v2995, 1.0
        %v3027 = vadd.f32 %v2997, 1.0
        %v3028 = vadd.f32 %v2999, 1.0
        %v3029 = vadd.f32 %v3001, 1.0
        %v3030 = vadd.f32 %v3003, 1.0
        %v3031 = vadd.f32 %v3005, 1.0
        %v3032 = vadd.f32 %v3007, 1.0
        %v3033 = vadd.f32 %v3009, 1.0
        %v3034 = vadd.f32 %v3011, 1.0
        %v3035 = vadd.f32 %v3013, 1.0
        %v3036 = vadd.f32 %v3015, 1.0
        %v3037 = vadd.f32 %v3017, 1.0
        %v3038 = vadd.f32 %v3019, 1.0
        %v3039 = vadd.f32 %v3021, 1.0
        %v3040 = vrcp.pop %v3022
        %v3041 = vmul.f32 %v3022, %v3040
        %v3042 = vsub.f32 1.0, %v3041
        %v3043 = vmul.f32 %v3040, %v3042
        %v3044 = vadd.f32 %v3040, %v3043
        %vm3045 = vweird.f32 %v3022
        %vm3046 = vweird.f32 %v3040
        %vm3047 = vmor %vm3045, %vm3046
        %v3048 = vsel %vm3047, %v3040, %v3044
        %v3049 = vand.u32 2147483647, %v3022
        %vm3050 = vcmp.eq.f32.partialorder %v3049, 8.507059e+37
        %v3051 = vand.u32 %v3022, 2147483648
        %v3052 = vor.u32 1.1754944e-38, %v3051
        %v3053 = vsel %vm3050, %v3052, %v3048
        %v3054 = vmul.f32 1.0, %v3053
        %v3055 = vrcp.pop %v3023
        %v3056 = vmul.f32 %v3023, %v3055
        %v3057 = vsub.f32 1.0, %v3056
        %v3058 = vmul.f32 %v3055, %v3057
        %v3059 = vadd.f32 %v3055, %v3058
        %vm3060 = vweird.f32 %v3023
        %vm3061 = vweird.f32 %v3055
        %vm3062 = vmor %vm3060, %vm3061
        %v3063 = vsel %vm3062, %v3055, %v3059
        %v3064 = vand.u32 2147483647, %v3023
        %vm3065 = vcmp.eq.f32.partialorder %v3064, 8.507059e+37
        %v3066 = vand.u32 %v3023, 2147483648
        %v3067 = vor.u32 1.1754944e-38, %v3066
        %v3068 = vsel %vm3065, %v3067, %v3063
        %v3069 = vmul.f32 1.0, %v3068
        %v3070 = vrcp.pop %v3024
        %v3071 = vmul.f32 %v3024, %v3070
        %v3072 = vsub.f32 1.0, %v3071
        %v3073 = vmul.f32 %v3070, %v3072
        %v3074 = vadd.f32 %v3070, %v3073
        %vm3075 = vweird.f32 %v3024
        %vm3076 = vweird.f32 %v3070
        %vm3077 = vmor %vm3075, %vm3076
        %v3078 = vsel %vm3077, %v3070, %v3074
        %v3079 = vand.u32 2147483647, %v3024
        %vm3080 = vcmp.eq.f32.partialorder %v3079, 8.507059e+37
        %v3081 = vand.u32 %v3024, 2147483648
        %v3082 = vor.u32 1.1754944e-38, %v3081
        %v3083 = vsel %vm3080, %v3082, %v3078
        %v3084 = vmul.f32 1.0, %v3083
        %v3085 = vrcp.pop %v3025
        %v3086 = vmul.f32 %v3025, %v3085
        %v3087 = vsub.f32 1.0, %v3086
        %v3088 = vmul.f32 %v3085, %v3087
        %v3089 = vadd.f32 %v3085, %v3088
        %vm3090 = vweird.f32 %v3025
        %vm3091 = vweird.f32 %v3085
        %vm3092 = vmor %vm3090, %vm3091
        %v3093 = vsel %vm3092, %v3085, %v3089
        %v3094 = vand.u32 2147483647, %v3025
        %vm3095 = vcmp.eq.f32.partialorder %v3094, 8.507059e+37
        %v3096 = vand.u32 %v3025, 2147483648
        %v3097 = vor.u32 1.1754944e-38, %v3096
        %v3098 = vsel %vm3095, %v3097, %v3093
        %v3099 = vmul.f32 1.0, %v3098
        %v3100 = vrcp.pop %v3026
        %v3101 = vmul.f32 %v3026, %v3100
        %v3102 = vsub.f32 1.0, %v3101
        %v3103 = vmul.f32 %v3100, %v3102
        %v3104 = vadd.f32 %v3100, %v3103
        %vm3105 = vweird.f32 %v3026
        %vm3106 = vweird.f32 %v3100
        %vm3107 = vmor %vm3105, %vm3106
        %v3108 = vsel %vm3107, %v3100, %v3104
        %v3109 = vand.u32 2147483647, %v3026
        %vm3110 = vcmp.eq.f32.partialorder %v3109, 8.507059e+37
        %v3111 = vand.u32 %v3026, 2147483648
        %v3112 = vor.u32 1.1754944e-38, %v3111
        %v3113 = vsel %vm3110, %v3112, %v3108
        %v3114 = vmul.f32 1.0, %v3113
        %v3115 = vrcp.pop %v3027
        %v3116 = vmul.f32 %v3027, %v3115
        %v3117 = vsub.f32 1.0, %v3116
        %v3118 = vmul.f32 %v3115, %v3117
        %v3119 = vadd.f32 %v3115, %v3118
        %vm3120 = vweird.f32 %v3027
        %vm3121 = vweird.f32 %v3115
        %vm3122 = vmor %vm3120, %vm3121
        %v3123 = vsel %vm3122, %v3115, %v3119
        %v3124 = vand.u32 2147483647, %v3027
        %vm3125 = vcmp.eq.f32.partialorder %v3124, 8.507059e+37
        %v3126 = vand.u32 %v3027, 2147483648
        %v3127 = vor.u32 1.1754944e-38, %v3126
        %v3128 = vsel %vm3125, %v3127, %v3123
        %v3129 = vmul.f32 1.0, %v3128
        %v3130 = vrcp.pop %v3028
        %v3131 = vmul.f32 %v3028, %v3130
        %v3132 = vsub.f32 1.0, %v3131
        %v3133 = vmul.f32 %v3130, %v3132
        %v3134 = vadd.f32 %v3130, %v3133
        %vm3135 = vweird.f32 %v3028
        %vm3136 = vweird.f32 %v3130
        %vm3137 = vmor %vm3135, %vm3136
        %v3138 = vsel %vm3137, %v3130, %v3134
        %v3139 = vand.u32 2147483647, %v3028
        %vm3140 = vcmp.eq.f32.partialorder %v3139, 8.507059e+37
        %v3141 = vand.u32 %v3028, 2147483648
        %v3142 = vor.u32 1.1754944e-38, %v3141
        %v3143 = vsel %vm3140, %v3142, %v3138
        %v3144 = vmul.f32 1.0, %v3143
        %v3145 = vrcp.pop %v3029
        %v3146 = vmul.f32 %v3029, %v3145
        %v3147 = vsub.f32 1.0, %v3146
        %v3148 = vmul.f32 %v3145, %v3147
        %v3149 = vadd.f32 %v3145, %v3148
        %vm3150 = vweird.f32 %v3029
        %vm3151 = vweird.f32 %v3145
        %vm3152 = vmor %vm3150, %vm3151
        %v3153 = vsel %vm3152, %v3145, %v3149
        %v3154 = vand.u32 2147483647, %v3029
        %vm3155 = vcmp.eq.f32.partialorder %v3154, 8.507059e+37
        %v3156 = vand.u32 %v3029, 2147483648
        %v3157 = vor.u32 1.1754944e-38, %v3156
        %v3158 = vsel %vm3155, %v3157, %v3153
        %v3159 = vmul.f32 1.0, %v3158
        %v3160 = vrcp.pop %v3030
        %v3161 = vmul.f32 %v3030, %v3160
        %v3162 = vsub.f32 1.0, %v3161
        %v3163 = vmul.f32 %v3160, %v3162
        %v3164 = vadd.f32 %v3160, %v3163
        %vm3165 = vweird.f32 %v3030
        %vm3166 = vweird.f32 %v3160
        %vm3167 = vmor %vm3165, %vm3166
        %v3168 = vsel %vm3167, %v3160, %v3164
        %v3169 = vand.u32 2147483647, %v3030
        %vm3170 = vcmp.eq.f32.partialorder %v3169, 8.507059e+37
        %v3171 = vand.u32 %v3030, 2147483648
        %v3172 = vor.u32 1.1754944e-38, %v3171
        %v3173 = vsel %vm3170, %v3172, %v3168
        %v3174 = vmul.f32 1.0, %v3173
        %v3175 = vrcp.pop %v3031
        %v3176 = vmul.f32 %v3031, %v3175
        %v3177 = vsub.f32 1.0, %v3176
        %v3178 = vmul.f32 %v3175, %v3177
        %v3179 = vadd.f32 %v3175, %v3178
        %vm3180 = vweird.f32 %v3031
        %vm3181 = vweird.f32 %v3175
        %vm3182 = vmor %vm3180, %vm3181
        %v3183 = vsel %vm3182, %v3175, %v3179
        %v3184 = vand.u32 2147483647, %v3031
        %vm3185 = vcmp.eq.f32.partialorder %v3184, 8.507059e+37
        %v3186 = vand.u32 %v3031, 2147483648
        %v3187 = vor.u32 1.1754944e-38, %v3186
        %v3188 = vsel %vm3185, %v3187, %v3183
        %v3189 = vmul.f32 1.0, %v3188
        %v3190 = vrcp.pop %v3032
        %v3191 = vmul.f32 %v3032, %v3190
        %v3192 = vsub.f32 1.0, %v3191
        %v3193 = vmul.f32 %v3190, %v3192
        %v3194 = vadd.f32 %v3190, %v3193
        %vm3195 = vweird.f32 %v3032
        %vm3196 = vweird.f32 %v3190
        %vm3197 = vmor %vm3195, %vm3196
        %v3198 = vsel %vm3197, %v3190, %v3194
        %v3199 = vand.u32 2147483647, %v3032
        %vm3200 = vcmp.eq.f32.partialorder %v3199, 8.507059e+37
        %v3201 = vand.u32 %v3032, 2147483648
        %v3202 = vor.u32 1.1754944e-38, %v3201
        %v3203 = vsel %vm3200, %v3202, %v3198
        %v3204 = vmul.f32 1.0, %v3203
        %v3205 = vrcp.pop %v3033
        %v3206 = vmul.f32 %v3033, %v3205
        %v3207 = vsub.f32 1.0, %v3206
        %v3208 = vmul.f32 %v3205, %v3207
        %v3209 = vadd.f32 %v3205, %v3208
        %vm3210 = vweird.f32 %v3033
        %vm3211 = vweird.f32 %v3205
        %vm3212 = vmor %vm3210, %vm3211
        %v3213 = vsel %vm3212, %v3205, %v3209
        %v3214 = vand.u32 2147483647, %v3033
        %vm3215 = vcmp.eq.f32.partialorder %v3214, 8.507059e+37
        %v3216 = vand.u32 %v3033, 2147483648
        %v3217 = vor.u32 1.1754944e-38, %v3216
        %v3218 = vsel %vm3215, %v3217, %v3213
        %v3219 = vmul.f32 1.0, %v3218
        %v3220 = vrcp.pop %v3034
        %v3221 = vmul.f32 %v3034, %v3220
        %v3222 = vsub.f32 1.0, %v3221
        %v3223 = vmul.f32 %v3220, %v3222
        %v3224 = vadd.f32 %v3220, %v3223
        %vm3225 = vweird.f32 %v3034
        %vm3226 = vweird.f32 %v3220
        %vm3227 = vmor %vm3225, %vm3226
        %v3228 = vsel %vm3227, %v3220, %v3224
        %v3229 = vand.u32 2147483647, %v3034
        %vm3230 = vcmp.eq.f32.partialorder %v3229, 8.507059e+37
        %v3231 = vand.u32 %v3034, 2147483648
        %v3232 = vor.u32 1.1754944e-38, %v3231
        %v3233 = vsel %vm3230, %v3232, %v3228
        %v3234 = vmul.f32 1.0, %v3233
        %v3235 = vrcp.pop %v3035
        %v3236 = vmul.f32 %v3035, %v3235
        %v3237 = vsub.f32 1.0, %v3236
        %v3238 = vmul.f32 %v3235, %v3237
        %v3239 = vadd.f32 %v3235, %v3238
        %vm3240 = vweird.f32 %v3035
        %vm3241 = vweird.f32 %v3235
        %vm3242 = vmor %vm3240, %vm3241
        %v3243 = vsel %vm3242, %v3235, %v3239
        %v3244 = vand.u32 2147483647, %v3035
        %vm3245 = vcmp.eq.f32.partialorder %v3244, 8.507059e+37
        %v3246 = vand.u32 %v3035, 2147483648
        %v3247 = vor.u32 1.1754944e-38, %v3246
        %v3248 = vsel %vm3245, %v3247, %v3243
        %v3249 = vmul.f32 1.0, %v3248
        %v3250 = vrcp.pop %v3036
        %v3251 = vmul.f32 %v3036, %v3250
        %v3252 = vsub.f32 1.0, %v3251
        %v3253 = vmul.f32 %v3250, %v3252
        %v3254 = vadd.f32 %v3250, %v3253
        %vm3255 = vweird.f32 %v3036
        %vm3256 = vweird.f32 %v3250
        %vm3257 = vmor %vm3255, %vm3256
        %v3258 = vsel %vm3257, %v3250, %v3254
        %v3259 = vand.u32 2147483647, %v3036
        %vm3260 = vcmp.eq.f32.partialorder %v3259, 8.507059e+37
        %v3261 = vand.u32 %v3036, 2147483648
        %v3262 = vor.u32 1.1754944e-38, %v3261
        %v3263 = vsel %vm3260, %v3262, %v3258
        %v3264 = vmul.f32 1.0, %v3263
        %v3265 = vrcp.pop %v3037
        %v3266 = vmul.f32 %v3037, %v3265
        %v3267 = vsub.f32 1.0, %v3266
        %v3268 = vmul.f32 %v3265, %v3267
        %v3269 = vadd.f32 %v3265, %v3268
        %vm3270 = vweird.f32 %v3037
        %vm3271 = vweird.f32 %v3265
        %vm3272 = vmor %vm3270, %vm3271
        %v3273 = vsel %vm3272, %v3265, %v3269
        %v3274 = vand.u32 2147483647, %v3037
        %vm3275 = vcmp.eq.f32.partialorder %v3274, 8.507059e+37
        %v3276 = vand.u32 %v3037, 2147483648
        %v3277 = vor.u32 1.1754944e-38, %v3276
        %v3278 = vsel %vm3275, %v3277, %v3273
        %v3279 = vmul.f32 1.0, %v3278
        %v3280 = vrcp.pop %v3038
        %v3281 = vmul.f32 %v3038, %v3280
        %v3282 = vsub.f32 1.0, %v3281
        %v3283 = vmul.f32 %v3280, %v3282
        %v3284 = vadd.f32 %v3280, %v3283
        %vm3285 = vweird.f32 %v3038
        %vm3286 = vweird.f32 %v3280
        %vm3287 = vmor %vm3285, %vm3286
        %v3288 = vsel %vm3287, %v3280, %v3284
        %v3289 = vand.u32 2147483647, %v3038
        %vm3290 = vcmp.eq.f32.partialorder %v3289, 8.507059e+37
        %v3291 = vand.u32 %v3038, 2147483648
        %v3292 = vor.u32 1.1754944e-38, %v3291
        %v3293 = vsel %vm3290, %v3292, %v3288
        %v3294 = vmul.f32 1.0, %v3293
        %v3295 = vrcp.pop %v3039
        %v3296 = vmul.f32 %v3039, %v3295
        %v3297 = vsub.f32 1.0, %v3296
        %v3298 = vmul.f32 %v3295, %v3297
        %v3299 = vadd.f32 %v3295, %v3298
        %vm3300 = vweird.f32 %v3039
        %vm3301 = vweird.f32 %v3295
        %vm3302 = vmor %vm3300, %vm3301
        %v3303 = vsel %vm3302, %v3295, %v3299
        %v3304 = vand.u32 2147483647, %v3039
        %vm3305 = vcmp.eq.f32.partialorder %v3304, 8.507059e+37
        %v3306 = vand.u32 %v3039, 2147483648
        %v3307 = vor.u32 1.1754944e-38, %v3306
        %v3308 = vsel %vm3305, %v3307, %v3303
        %v3309 = vmul.f32 1.0, %v3308
        %v3310 = vtanh.pop %v2590
        %v3311 = vtanh.pop %v2591
        %v3312 = vtanh.pop %v2592
        %v3313 = vtanh.pop %v2593
        %v3314 = vtanh.pop %v2594
        %v3315 = vtanh.pop %v2595
        %v3316 = vtanh.pop %v2596
        %v3317 = vtanh.pop %v2597
        %v3318 = vtanh.pop %v2598
        %v3319 = vtanh.pop %v2599
        %v3320 = vtanh.pop %v2600
        %v3321 = vtanh.pop %v2601
        %v3322 = vtanh.pop %v2602
        %v3323 = vtanh.pop %v2603
        %v3324 = vtanh.pop %v2604
        %v3325 = vtanh.pop %v2605
        %v3326 = vtanh.pop %v2606
        %v3327 = vtanh.pop %v2607
        %v3328 = vadd.f32 %v2554, %v2494
        %v3329 = vadd.f32 %v2555, %v2496
        %v3330 = vadd.f32 %v2556, %v2498
        %v3331 = vadd.f32 %v2557, %v2500
        %v3332 = vadd.f32 %v2558, %v2502
        %v3333 = vadd.f32 %v2559, %v2504
        %v3334 = vadd.f32 %v2560, %v2506
        %v3335 = vadd.f32 %v2561, %v2508
        %v3336 = vadd.f32 %v2562, %v2510
        %v3337 = vadd.f32 %v2563, %v2512
        %v3338 = vadd.f32 %v2564, %v2514
        %v3339 = vadd.f32 %v2565, %v2516
        %v3340 = vadd.f32 %v2566, %v2518
        %v3341 = vadd.f32 %v2567, %v2520
        %v3342 = vadd.f32 %v2568, %v2522
        %v3343 = vadd.f32 %v2569, %v2524
        %v3344 = vadd.f32 %v2570, %v2526
        %v3345 = vadd.f32 %v2571, %v2528
        %v3346 = vxor.u32 %v3328, 2147483648
        %v3347 = vxor.u32 %v3329, 2147483648
        %v3348 = vxor.u32 %v3330, 2147483648
        %v3349 = vxor.u32 %v3331, 2147483648
        %v3350 = vxor.u32 %v3332, 2147483648
        %v3351 = vxor.u32 %v3333, 2147483648
        %v3352 = vxor.u32 %v3334, 2147483648
        %v3353 = vxor.u32 %v3335, 2147483648
        %v3354 = vxor.u32 %v3336, 2147483648
        %v3355 = vxor.u32 %v3337, 2147483648
        %v3356 = vxor.u32 %v3338, 2147483648
        %v3357 = vxor.u32 %v3339, 2147483648
        %v3358 = vxor.u32 %v3340, 2147483648
        %v3359 = vxor.u32 %v3341, 2147483648
        %v3360 = vxor.u32 %v3342, 2147483648
        %v3361 = vxor.u32 %v3343, 2147483648
        %v3362 = vxor.u32 %v3344, 2147483648
        %v3363 = vxor.u32 %v3345, 2147483648
        %v3364 = vmul.f32 %v3346, 1.442695
        %v3365 = vpow.pop %v3364
        %v3366 = vmul.f32 %v3347, 1.442695
        %v3367 = vpow.pop %v3366
        %v3368 = vmul.f32 %v3348, 1.442695
        %v3369 = vpow.pop %v3368
        %v3370 = vmul.f32 %v3349, 1.442695
        %v3371 = vpow.pop %v3370
        %v3372 = vmul.f32 %v3350, 1.442695
        %v3373 = vpow.pop %v3372
        %v3374 = vmul.f32 %v3351, 1.442695
        %v3375 = vpow.pop %v3374
        %v3376 = vmul.f32 %v3352, 1.442695
        %v3377 = vpow.pop %v3376
        %v3378 = vmul.f32 %v3353, 1.442695
        %v3379 = vpow.pop %v3378
        %v3380 = vmul.f32 %v3354, 1.442695
        %v3381 = vpow.pop %v3380
        %v3382 = vmul.f32 %v3355, 1.442695
        %v3383 = vpow.pop %v3382
        %v3384 = vmul.f32 %v3356, 1.442695
        %v3385 = vpow.pop %v3384
        %v3386 = vmul.f32 %v3357, 1.442695
        %v3387 = vpow.pop %v3386
        %v3388 = vmul.f32 %v3358, 1.442695
        %v3389 = vpow.pop %v3388
        %v3390 = vmul.f32 %v3359, 1.442695
        %v3391 = vpow.pop %v3390
        %v3392 = vmul.f32 %v3360, 1.442695
        %v3393 = vpow.pop %v3392
        %v3394 = vmul.f32 %v3361, 1.442695
        %v3395 = vpow.pop %v3394
        %v3396 = vmul.f32 %v3362, 1.442695
        %v3397 = vpow.pop %v3396
        %v3398 = vmul.f32 %v3363, 1.442695
        %v3399 = vpow.pop %v3398
        %v3400 = vadd.f32 %v3365, 1.0
        %v3401 = vadd.f32 %v3367, 1.0
        %v3402 = vadd.f32 %v3369, 1.0
        %v3403 = vadd.f32 %v3371, 1.0
        %v3404 = vadd.f32 %v3373, 1.0
        %v3405 = vadd.f32 %v3375, 1.0
        %v3406 = vadd.f32 %v3377, 1.0
        %v3407 = vadd.f32 %v3379, 1.0
        %v3408 = vadd.f32 %v3381, 1.0
        %v3409 = vadd.f32 %v3383, 1.0
        %v3410 = vadd.f32 %v3385, 1.0
        %v3411 = vadd.f32 %v3387, 1.0
        %v3412 = vadd.f32 %v3389, 1.0
        %v3413 = vadd.f32 %v3391, 1.0
        %v3414 = vadd.f32 %v3393, 1.0
        %v3415 = vadd.f32 %v3395, 1.0
        %v3416 = vadd.f32 %v3397, 1.0
        %v3417 = vadd.f32 %v3399, 1.0
        %v3418 = vrcp.pop %v3400
        %v3419 = vmul.f32 %v3400, %v3418
        %v3420 = vsub.f32 1.0, %v3419
        %v3421 = vmul.f32 %v3418, %v3420
        %v3422 = vadd.f32 %v3418, %v3421
        %vm3423 = vweird.f32 %v3400
        %vm3424 = vweird.f32 %v3418
        %vm3425 = vmor %vm3423, %vm3424
        %v3426 = vsel %vm3425, %v3418, %v3422
        %v3427 = vand.u32 2147483647, %v3400
        %vm3428 = vcmp.eq.f32.partialorder %v3427, 8.507059e+37
        %v3429 = vand.u32 %v3400, 2147483648
        %v3430 = vor.u32 1.1754944e-38, %v3429
        %v3431 = vsel %vm3428, %v3430, %v3426
        %v3432 = vmul.f32 1.0, %v3431
        %v3433 = vrcp.pop %v3401
        %v3434 = vmul.f32 %v3401, %v3433
        %v3435 = vsub.f32 1.0, %v3434
        %v3436 = vmul.f32 %v3433, %v3435
        %v3437 = vadd.f32 %v3433, %v3436
        %vm3438 = vweird.f32 %v3401
        %vm3439 = vweird.f32 %v3433
        %vm3440 = vmor %vm3438, %vm3439
        %v3441 = vsel %vm3440, %v3433, %v3437
        %v3442 = vand.u32 2147483647, %v3401
        %vm3443 = vcmp.eq.f32.partialorder %v3442, 8.507059e+37
        %v3444 = vand.u32 %v3401, 2147483648
        %v3445 = vor.u32 1.1754944e-38, %v3444
        %v3446 = vsel %vm3443, %v3445, %v3441
        %v3447 = vmul.f32 1.0, %v3446
        %v3448 = vrcp.pop %v3402
        %v3449 = vmul.f32 %v3402, %v3448
        %v3450 = vsub.f32 1.0, %v3449
        %v3451 = vmul.f32 %v3448, %v3450
        %v3452 = vadd.f32 %v3448, %v3451
        %vm3453 = vweird.f32 %v3402
        %vm3454 = vweird.f32 %v3448
        %vm3455 = vmor %vm3453, %vm3454
        %v3456 = vsel %vm3455, %v3448, %v3452
        %v3457 = vand.u32 2147483647, %v3402
        %vm3458 = vcmp.eq.f32.partialorder %v3457, 8.507059e+37
        %v3459 = vand.u32 %v3402, 2147483648
        %v3460 = vor.u32 1.1754944e-38, %v3459
        %v3461 = vsel %vm3458, %v3460, %v3456
        %v3462 = vmul.f32 1.0, %v3461
        %v3463 = vrcp.pop %v3403
        %v3464 = vmul.f32 %v3403, %v3463
        %v3465 = vsub.f32 1.0, %v3464
        %v3466 = vmul.f32 %v3463, %v3465
        %v3467 = vadd.f32 %v3463, %v3466
        %vm3468 = vweird.f32 %v3403
        %vm3469 = vweird.f32 %v3463
        %vm3470 = vmor %vm3468, %vm3469
        %v3471 = vsel %vm3470, %v3463, %v3467
        %v3472 = vand.u32 2147483647, %v3403
        %vm3473 = vcmp.eq.f32.partialorder %v3472, 8.507059e+37
        %v3474 = vand.u32 %v3403, 2147483648
        %v3475 = vor.u32 1.1754944e-38, %v3474
        %v3476 = vsel %vm3473, %v3475, %v3471
        %v3477 = vmul.f32 1.0, %v3476
        %v3478 = vrcp.pop %v3404
        %v3479 = vmul.f32 %v3404, %v3478
        %v3480 = vsub.f32 1.0, %v3479
        %v3481 = vmul.f32 %v3478, %v3480
        %v3482 = vadd.f32 %v3478, %v3481
        %vm3483 = vweird.f32 %v3404
        %vm3484 = vweird.f32 %v3478
        %vm3485 = vmor %vm3483, %vm3484
        %v3486 = vsel %vm3485, %v3478, %v3482
        %v3487 = vand.u32 2147483647, %v3404
        %vm3488 = vcmp.eq.f32.partialorder %v3487, 8.507059e+37
        %v3489 = vand.u32 %v3404, 2147483648
        %v3490 = vor.u32 1.1754944e-38, %v3489
        %v3491 = vsel %vm3488, %v3490, %v3486
        %v3492 = vmul.f32 1.0, %v3491
        %v3493 = vrcp.pop %v3405
        %v3494 = vmul.f32 %v3405, %v3493
        %v3495 = vsub.f32 1.0, %v3494
        %v3496 = vmul.f32 %v3493, %v3495
        %v3497 = vadd.f32 %v3493, %v3496
        %vm3498 = vweird.f32 %v3405
        %vm3499 = vweird.f32 %v3493
        %vm3500 = vmor %vm3498, %vm3499
        %v3501 = vsel %vm3500, %v3493, %v3497
        %v3502 = vand.u32 2147483647, %v3405
        %vm3503 = vcmp.eq.f32.partialorder %v3502, 8.507059e+37
        %v3504 = vand.u32 %v3405, 2147483648
        %v3505 = vor.u32 1.1754944e-38, %v3504
        %v3506 = vsel %vm3503, %v3505, %v3501
        %v3507 = vmul.f32 1.0, %v3506
        %v3508 = vrcp.pop %v3406
        %v3509 = vmul.f32 %v3406, %v3508
        %v3510 = vsub.f32 1.0, %v3509
        %v3511 = vmul.f32 %v3508, %v3510
        %v3512 = vadd.f32 %v3508, %v3511
        %vm3513 = vweird.f32 %v3406
        %vm3514 = vweird.f32 %v3508
        %vm3515 = vmor %vm3513, %vm3514
        %v3516 = vsel %vm3515, %v3508, %v3512
        %v3517 = vand.u32 2147483647, %v3406
        %vm3518 = vcmp.eq.f32.partialorder %v3517, 8.507059e+37
        %v3519 = vand.u32 %v3406, 2147483648
        %v3520 = vor.u32 1.1754944e-38, %v3519
        %v3521 = vsel %vm3518, %v3520, %v3516
        %v3522 = vmul.f32 1.0, %v3521
        %v3523 = vrcp.pop %v3407
        %v3524 = vmul.f32 %v3407, %v3523
        %v3525 = vsub.f32 1.0, %v3524
        %v3526 = vmul.f32 %v3523, %v3525
        %v3527 = vadd.f32 %v3523, %v3526
        %vm3528 = vweird.f32 %v3407
        %vm3529 = vweird.f32 %v3523
        %vm3530 = vmor %vm3528, %vm3529
        %v3531 = vsel %vm3530, %v3523, %v3527
        %v3532 = vand.u32 2147483647, %v3407
        %vm3533 = vcmp.eq.f32.partialorder %v3532, 8.507059e+37
        %v3534 = vand.u32 %v3407, 2147483648
        %v3535 = vor.u32 1.1754944e-38, %v3534
        %v3536 = vsel %vm3533, %v3535, %v3531
        %v3537 = vmul.f32 1.0, %v3536
        %v3538 = vrcp.pop %v3408
        %v3539 = vmul.f32 %v3408, %v3538
        %v3540 = vsub.f32 1.0, %v3539
        %v3541 = vmul.f32 %v3538, %v3540
        %v3542 = vadd.f32 %v3538, %v3541
        %vm3543 = vweird.f32 %v3408
        %vm3544 = vweird.f32 %v3538
        %vm3545 = vmor %vm3543, %vm3544
        %v3546 = vsel %vm3545, %v3538, %v3542
        %v3547 = vand.u32 2147483647, %v3408
        %vm3548 = vcmp.eq.f32.partialorder %v3547, 8.507059e+37
        %v3549 = vand.u32 %v3408, 2147483648
        %v3550 = vor.u32 1.1754944e-38, %v3549
        %v3551 = vsel %vm3548, %v3550, %v3546
        %v3552 = vmul.f32 1.0, %v3551
        %v3553 = vrcp.pop %v3409
        %v3554 = vmul.f32 %v3409, %v3553
        %v3555 = vsub.f32 1.0, %v3554
        %v3556 = vmul.f32 %v3553, %v3555
        %v3557 = vadd.f32 %v3553, %v3556
        %vm3558 = vweird.f32 %v3409
        %vm3559 = vweird.f32 %v3553
        %vm3560 = vmor %vm3558, %vm3559
        %v3561 = vsel %vm3560, %v3553, %v3557
        %v3562 = vand.u32 2147483647, %v3409
        %vm3563 = vcmp.eq.f32.partialorder %v3562, 8.507059e+37
        %v3564 = vand.u32 %v3409, 2147483648
        %v3565 = vor.u32 1.1754944e-38, %v3564
        %v3566 = vsel %vm3563, %v3565, %v3561
        %v3567 = vmul.f32 1.0, %v3566
        %v3568 = vrcp.pop %v3410
        %v3569 = vmul.f32 %v3410, %v3568
        %v3570 = vsub.f32 1.0, %v3569
        %v3571 = vmul.f32 %v3568, %v3570
        %v3572 = vadd.f32 %v3568, %v3571
        %vm3573 = vweird.f32 %v3410
        %vm3574 = vweird.f32 %v3568
        %vm3575 = vmor %vm3573, %vm3574
        %v3576 = vsel %vm3575, %v3568, %v3572
        %v3577 = vand.u32 2147483647, %v3410
        %vm3578 = vcmp.eq.f32.partialorder %v3577, 8.507059e+37
        %v3579 = vand.u32 %v3410, 2147483648
        %v3580 = vor.u32 1.1754944e-38, %v3579
        %v3581 = vsel %vm3578, %v3580, %v3576
        %v3582 = vmul.f32 1.0, %v3581
        %v3583 = vrcp.pop %v3411
        %v3584 = vmul.f32 %v3411, %v3583
        %v3585 = vsub.f32 1.0, %v3584
        %v3586 = vmul.f32 %v3583, %v3585
        %v3587 = vadd.f32 %v3583, %v3586
        %vm3588 = vweird.f32 %v3411
        %vm3589 = vweird.f32 %v3583
        %vm3590 = vmor %vm3588, %vm3589
        %v3591 = vsel %vm3590, %v3583, %v3587
        %v3592 = vand.u32 2147483647, %v3411
        %vm3593 = vcmp.eq.f32.partialorder %v3592, 8.507059e+37
        %v3594 = vand.u32 %v3411, 2147483648
        %v3595 = vor.u32 1.1754944e-38, %v3594
        %v3596 = vsel %vm3593, %v3595, %v3591
        %v3597 = vmul.f32 1.0, %v3596
        %v3598 = vrcp.pop %v3412
        %v3599 = vmul.f32 %v3412, %v3598
        %v3600 = vsub.f32 1.0, %v3599
        %v3601 = vmul.f32 %v3598, %v3600
        %v3602 = vadd.f32 %v3598, %v3601
        %vm3603 = vweird.f32 %v3412
        %vm3604 = vweird.f32 %v3598
        %vm3605 = vmor %vm3603, %vm3604
        %v3606 = vsel %vm3605, %v3598, %v3602
        %v3607 = vand.u32 2147483647, %v3412
        %vm3608 = vcmp.eq.f32.partialorder %v3607, 8.507059e+37
        %v3609 = vand.u32 %v3412, 2147483648
        %v3610 = vor.u32 1.1754944e-38, %v3609
        %v3611 = vsel %vm3608, %v3610, %v3606
        %v3612 = vmul.f32 1.0, %v3611
        %v3613 = vrcp.pop %v3413
        %v3614 = vmul.f32 %v3413, %v3613
        %v3615 = vsub.f32 1.0, %v3614
        %v3616 = vmul.f32 %v3613, %v3615
        %v3617 = vadd.f32 %v3613, %v3616
        %vm3618 = vweird.f32 %v3413
        %vm3619 = vweird.f32 %v3613
        %vm3620 = vmor %vm3618, %vm3619
        %v3621 = vsel %vm3620, %v3613, %v3617
        %v3622 = vand.u32 2147483647, %v3413
        %vm3623 = vcmp.eq.f32.partialorder %v3622, 8.507059e+37
        %v3624 = vand.u32 %v3413, 2147483648
        %v3625 = vor.u32 1.1754944e-38, %v3624
        %v3626 = vsel %vm3623, %v3625, %v3621
        %v3627 = vmul.f32 1.0, %v3626
        %v3628 = vrcp.pop %v3414
        %v3629 = vmul.f32 %v3414, %v3628
        %v3630 = vsub.f32 1.0, %v3629
        %v3631 = vmul.f32 %v3628, %v3630
        %v3632 = vadd.f32 %v3628, %v3631
        %vm3633 = vweird.f32 %v3414
        %vm3634 = vweird.f32 %v3628
        %vm3635 = vmor %vm3633, %vm3634
        %v3636 = vsel %vm3635, %v3628, %v3632
        %v3637 = vand.u32 2147483647, %v3414
        %vm3638 = vcmp.eq.f32.partialorder %v3637, 8.507059e+37
        %v3639 = vand.u32 %v3414, 2147483648
        %v3640 = vor.u32 1.1754944e-38, %v3639
        %v3641 = vsel %vm3638, %v3640, %v3636
        %v3642 = vmul.f32 1.0, %v3641
        %v3643 = vrcp.pop %v3415
        %v3644 = vmul.f32 %v3415, %v3643
        %v3645 = vsub.f32 1.0, %v3644
        %v3646 = vmul.f32 %v3643, %v3645
        %v3647 = vadd.f32 %v3643, %v3646
        %vm3648 = vweird.f32 %v3415
        %vm3649 = vweird.f32 %v3643
        %vm3650 = vmor %vm3648, %vm3649
        %v3651 = vsel %vm3650, %v3643, %v3647
        %v3652 = vand.u32 2147483647, %v3415
        %vm3653 = vcmp.eq.f32.partialorder %v3652, 8.507059e+37
        %v3654 = vand.u32 %v3415, 2147483648
        %v3655 = vor.u32 1.1754944e-38, %v3654
        %v3656 = vsel %vm3653, %v3655, %v3651
        %v3657 = vmul.f32 1.0, %v3656
        %v3658 = vrcp.pop %v3416
        %v3659 = vmul.f32 %v3416, %v3658
        %v3660 = vsub.f32 1.0, %v3659
        %v3661 = vmul.f32 %v3658, %v3660
        %v3662 = vadd.f32 %v3658, %v3661
        %vm3663 = vweird.f32 %v3416
        %vm3664 = vweird.f32 %v3658
        %vm3665 = vmor %vm3663, %vm3664
        %v3666 = vsel %vm3665, %v3658, %v3662
        %v3667 = vand.u32 2147483647, %v3416
        %vm3668 = vcmp.eq.f32.partialorder %v3667, 8.507059e+37
        %v3669 = vand.u32 %v3416, 2147483648
        %v3670 = vor.u32 1.1754944e-38, %v3669
        %v3671 = vsel %vm3668, %v3670, %v3666
        %v3672 = vmul.f32 1.0, %v3671
        %v3673 = vrcp.pop %v3417
        %v3674 = vmul.f32 %v3417, %v3673
        %v3675 = vsub.f32 1.0, %v3674
        %v3676 = vmul.f32 %v3673, %v3675
        %v3677 = vadd.f32 %v3673, %v3676
        %vm3678 = vweird.f32 %v3417
        %vm3679 = vweird.f32 %v3673
        %vm3680 = vmor %vm3678, %vm3679
        %v3681 = vsel %vm3680, %v3673, %v3677
        %v3682 = vand.u32 2147483647, %v3417
        %vm3683 = vcmp.eq.f32.partialorder %v3682, 8.507059e+37
        %v3684 = vand.u32 %v3417, 2147483648
        %v3685 = vor.u32 1.1754944e-38, %v3684
        %v3686 = vsel %vm3683, %v3685, %v3681
        %v3687 = vmul.f32 1.0, %v3686
        %v3688 = vld [vmem:[%s311] sm:$0xf]
        %v3689 = vld [vmem:[%s311 + $0x4] sm:$0xf]
        %v3690 = vld [vmem:[%s311 + $0x8] sm:$0xf]
        %v3691 = vld [vmem:[%s311 + $0xc] sm:$0xf]
        %v3692 = vld [vmem:[%s311 + $0x10] sm:$0xf]
        %v3693 = vld [vmem:[%s311 + $0x14] sm:$0xf]
        %v3694 = vld [vmem:[%s311 + $0x18] sm:$0xf]
        %v3695 = vld [vmem:[%s311 + $0x1c] sm:$0xf]
        %v3696 = vld [vmem:[%s311 + $0x20] sm:$0xf]
        %v3697 = vld [vmem:[%s311 + $0x24] sm:$0xf]
        %v3698 = vld [vmem:[%s311 + $0x28] sm:$0xf]
        %v3699 = vld [vmem:[%s311 + $0x2c] sm:$0xf]
        %v3700 = vld [vmem:[%s311 + $0x30] sm:$0xf]
        %v3701 = vld [vmem:[%s311 + $0x34] sm:$0xf]
        %v3702 = vld [vmem:[%s311 + $0x38] sm:$0xf]
        %v3703 = vld [vmem:[%s311 + $0x3c] sm:$0xf]
        %v3704 = vld [vmem:[%s311 + $0x40] sm:$0xf]
        %v3705 = vld [vmem:[%s311 + $0x44] sm:$0xf]
        %v3706 = vunpack.c.l.bf16 %v3688
        %v3707 = vunpack.c.l.bf16 %v3689
        %v3708 = vunpack.c.l.bf16 %v3690
        %v3709 = vunpack.c.l.bf16 %v3691
        %v3710 = vunpack.c.l.bf16 %v3692
        %v3711 = vunpack.c.l.bf16 %v3693
        %v3712 = vunpack.c.l.bf16 %v3694
        %v3713 = vunpack.c.l.bf16 %v3695
        %v3714 = vunpack.c.l.bf16 %v3696
        %v3715 = vunpack.c.l.bf16 %v3697
        %v3716 = vunpack.c.l.bf16 %v3698
        %v3717 = vunpack.c.l.bf16 %v3699
        %v3718 = vunpack.c.l.bf16 %v3700
        %v3719 = vunpack.c.l.bf16 %v3701
        %v3720 = vunpack.c.l.bf16 %v3702
        %v3721 = vunpack.c.l.bf16 %v3703
        %v3722 = vunpack.c.l.bf16 %v3704
        %v3723 = vunpack.c.l.bf16 %v3705
        %3742 = vrot.lane.b32.xlu0 %v3706, 32
        %v3743 = vpop.permute.xlu0 %3742
        %3744 = vrot.lane.b32.xlu0 %v3707, 32
        %v3745 = vpop.permute.xlu0 %3744
        %3746 = vrot.lane.b32.xlu0 %v3708, 32
        %v3747 = vpop.permute.xlu0 %3746
        %3748 = vrot.lane.b32.xlu0 %v3709, 32
        %v3749 = vpop.permute.xlu0 %3748
        %3750 = vrot.lane.b32.xlu0 %v3710, 32
        %v3751 = vpop.permute.xlu0 %3750
        %3752 = vrot.lane.b32.xlu0 %v3711, 32
        %v3753 = vpop.permute.xlu0 %3752
        %3754 = vrot.lane.b32.xlu0 %v3712, 32
        %v3755 = vpop.permute.xlu0 %3754
        %3756 = vrot.lane.b32.xlu0 %v3713, 32
        %v3757 = vpop.permute.xlu0 %3756
        %3758 = vrot.lane.b32.xlu0 %v3714, 32
        %v3759 = vpop.permute.xlu0 %3758
        %3760 = vrot.lane.b32.xlu0 %v3715, 32
        %v3761 = vpop.permute.xlu0 %3760
        %3762 = vrot.lane.b32.xlu0 %v3716, 32
        %v3763 = vpop.permute.xlu0 %3762
        %3764 = vrot.lane.b32.xlu0 %v3717, 32
        %v3765 = vpop.permute.xlu0 %3764
        %3766 = vrot.lane.b32.xlu0 %v3718, 32
        %v3767 = vpop.permute.xlu0 %3766
        %3768 = vrot.lane.b32.xlu0 %v3719, 32
        %v3769 = vpop.permute.xlu0 %3768
        %3770 = vrot.lane.b32.xlu0 %v3720, 32
        %v3771 = vpop.permute.xlu0 %3770
        %3772 = vrot.lane.b32.xlu0 %v3721, 32
        %v3773 = vpop.permute.xlu0 %3772
        %3774 = vrot.lane.b32.xlu0 %v3722, 32
        %v3775 = vpop.permute.xlu0 %3774
        %3776 = vrot.lane.b32.xlu0 %v3723, 32
        %v3777 = vpop.permute.xlu0 %3776
        %v3796 = vmul.f32 %v3054, %v3743
        %v3797 = vmul.f32 %v3069, %v3745
        %v3798 = vmul.f32 %v3084, %v3747
        %v3799 = vmul.f32 %v3099, %v3749
        %v3800 = vmul.f32 %v3114, %v3751
        %v3801 = vmul.f32 %v3129, %v3753
        %v3802 = vmul.f32 %v3144, %v3755
        %v3803 = vmul.f32 %v3159, %v3757
        %v3804 = vmul.f32 %v3174, %v3759
        %v3805 = vmul.f32 %v3189, %v3761
        %v3806 = vmul.f32 %v3204, %v3763
        %v3807 = vmul.f32 %v3219, %v3765
        %v3808 = vmul.f32 %v3234, %v3767
        %v3809 = vmul.f32 %v3249, %v3769
        %v3810 = vmul.f32 %v3264, %v3771
        %v3811 = vmul.f32 %v3279, %v3773
        %v3812 = vmul.f32 %v3294, %v3775
        %v3813 = vmul.f32 %v3309, %v3777
        %3832 = vrot.lane.b32.xlu0 %v3310, 96
        %v3833 = vpop.permute.xlu0 %3832
        %3834 = vrot.lane.b32.xlu0 %v3311, 96
        %v3835 = vpop.permute.xlu0 %3834
        %3836 = vrot.lane.b32.xlu0 %v3312, 96
        %v3837 = vpop.permute.xlu0 %3836
        %3838 = vrot.lane.b32.xlu0 %v3313, 96
        %v3839 = vpop.permute.xlu0 %3838
        %3840 = vrot.lane.b32.xlu0 %v3314, 96
        %v3841 = vpop.permute.xlu0 %3840
        %3842 = vrot.lane.b32.xlu0 %v3315, 96
        %v3843 = vpop.permute.xlu0 %3842
        %3844 = vrot.lane.b32.xlu0 %v3316, 96
        %v3845 = vpop.permute.xlu0 %3844
        %3846 = vrot.lane.b32.xlu0 %v3317, 96
        %v3847 = vpop.permute.xlu0 %3846
        %3848 = vrot.lane.b32.xlu0 %v3318, 96
        %v3849 = vpop.permute.xlu0 %3848
        %3850 = vrot.lane.b32.xlu0 %v3319, 96
        %v3851 = vpop.permute.xlu0 %3850
        %3852 = vrot.lane.b32.xlu0 %v3320, 96
        %v3853 = vpop.permute.xlu0 %3852
        %3854 = vrot.lane.b32.xlu0 %v3321, 96
        %v3855 = vpop.permute.xlu0 %3854
        %3856 = vrot.lane.b32.xlu0 %v3322, 96
        %v3857 = vpop.permute.xlu0 %3856
        %3858 = vrot.lane.b32.xlu0 %v3323, 96
        %v3859 = vpop.permute.xlu0 %3858
        %3860 = vrot.lane.b32.xlu0 %v3324, 96
        %v3861 = vpop.permute.xlu0 %3860
        %3862 = vrot.lane.b32.xlu0 %v3325, 96
        %v3863 = vpop.permute.xlu0 %3862
        %3864 = vrot.lane.b32.xlu0 %v3326, 96
        %v3865 = vpop.permute.xlu0 %3864
        %3866 = vrot.lane.b32.xlu0 %v3327, 96
        %v3867 = vpop.permute.xlu0 %3866
        %v3886 = vmul.f32 %v3054, %v3833
        %v3887 = vmul.f32 %v3069, %v3835
        %v3888 = vmul.f32 %v3084, %v3837
        %v3889 = vmul.f32 %v3099, %v3839
        %v3890 = vmul.f32 %v3114, %v3841
        %v3891 = vmul.f32 %v3129, %v3843
        %v3892 = vmul.f32 %v3144, %v3845
        %v3893 = vmul.f32 %v3159, %v3847
        %v3894 = vmul.f32 %v3174, %v3849
        %v3895 = vmul.f32 %v3189, %v3851
        %v3896 = vmul.f32 %v3204, %v3853
        %v3897 = vmul.f32 %v3219, %v3855
        %v3898 = vmul.f32 %v3234, %v3857
        %v3899 = vmul.f32 %v3249, %v3859
        %v3900 = vmul.f32 %v3264, %v3861
        %v3901 = vmul.f32 %v3279, %v3863
        %v3902 = vmul.f32 %v3294, %v3865
        %v3903 = vmul.f32 %v3309, %v3867
        %3922 = vrot.lane.b32.xlu0 %v3886, 64
        %v3923 = vpop.permute.xlu0 %3922
        %3924 = vrot.lane.b32.xlu0 %v3887, 64
        %v3925 = vpop.permute.xlu0 %3924
        %3926 = vrot.lane.b32.xlu0 %v3888, 64
        %v3927 = vpop.permute.xlu0 %3926
        %3928 = vrot.lane.b32.xlu0 %v3889, 64
        %v3929 = vpop.permute.xlu0 %3928
        %3930 = vrot.lane.b32.xlu0 %v3890, 64
        %v3931 = vpop.permute.xlu0 %3930
        %3932 = vrot.lane.b32.xlu0 %v3891, 64
        %v3933 = vpop.permute.xlu0 %3932
        %3934 = vrot.lane.b32.xlu0 %v3892, 64
        %v3935 = vpop.permute.xlu0 %3934
        %3936 = vrot.lane.b32.xlu0 %v3893, 64
        %v3937 = vpop.permute.xlu0 %3936
        %3938 = vrot.lane.b32.xlu0 %v3894, 64
        %v3939 = vpop.permute.xlu0 %3938
        %3940 = vrot.lane.b32.xlu0 %v3895, 64
        %v3941 = vpop.permute.xlu0 %3940
        %3942 = vrot.lane.b32.xlu0 %v3896, 64
        %v3943 = vpop.permute.xlu0 %3942
        %3944 = vrot.lane.b32.xlu0 %v3897, 64
        %v3945 = vpop.permute.xlu0 %3944
        %3946 = vrot.lane.b32.xlu0 %v3898, 64
        %v3947 = vpop.permute.xlu0 %3946
        %3948 = vrot.lane.b32.xlu0 %v3899, 64
        %v3949 = vpop.permute.xlu0 %3948
        %3950 = vrot.lane.b32.xlu0 %v3900, 64
        %v3951 = vpop.permute.xlu0 %3950
        %3952 = vrot.lane.b32.xlu0 %v3901, 64
        %v3953 = vpop.permute.xlu0 %3952
        %3954 = vrot.lane.b32.xlu0 %v3902, 64
        %v3955 = vpop.permute.xlu0 %3954
        %3956 = vrot.lane.b32.xlu0 %v3903, 64
        %v3957 = vpop.permute.xlu0 %3956
        %v3976 = vadd.f32 %v3796, %v3923
        %v3977 = vadd.f32 %v3797, %v3925
        %v3978 = vadd.f32 %v3798, %v3927
        %v3979 = vadd.f32 %v3799, %v3929
        %v3980 = vadd.f32 %v3800, %v3931
        %v3981 = vadd.f32 %v3801, %v3933
        %v3982 = vadd.f32 %v3802, %v3935
        %v3983 = vadd.f32 %v3803, %v3937
        %v3984 = vadd.f32 %v3804, %v3939
        %v3985 = vadd.f32 %v3805, %v3941
        %v3986 = vadd.f32 %v3806, %v3943
        %v3987 = vadd.f32 %v3807, %v3945
        %v3988 = vadd.f32 %v3808, %v3947
        %v3989 = vadd.f32 %v3809, %v3949
        %v3990 = vadd.f32 %v3810, %v3951
        %v3991 = vadd.f32 %v3811, %v3953
        %v3992 = vadd.f32 %v3812, %v3955
        %v3993 = vadd.f32 %v3813, %v3957
        %3994 = vrot.lane.b32.xlu0 %v3706, 64
        %v3995 = vpop.permute.xlu0 %3994
        %3996 = vrot.lane.b32.xlu0 %v3707, 64
        %v3997 = vpop.permute.xlu0 %3996
        %3998 = vrot.lane.b32.xlu0 %v3708, 64
        %v3999 = vpop.permute.xlu0 %3998
        %4000 = vrot.lane.b32.xlu0 %v3709, 64
        %v4001 = vpop.permute.xlu0 %4000
        %4002 = vrot.lane.b32.xlu0 %v3710, 64
        %v4003 = vpop.permute.xlu0 %4002
        %4004 = vrot.lane.b32.xlu0 %v3711, 64
        %v4005 = vpop.permute.xlu0 %4004
        %4006 = vrot.lane.b32.xlu0 %v3712, 64
        %v4007 = vpop.permute.xlu0 %4006
        %4008 = vrot.lane.b32.xlu0 %v3713, 64
        %v4009 = vpop.permute.xlu0 %4008
        %4010 = vrot.lane.b32.xlu0 %v3714, 64
        %v4011 = vpop.permute.xlu0 %4010
        %4012 = vrot.lane.b32.xlu0 %v3715, 64
        %v4013 = vpop.permute.xlu0 %4012
        %4014 = vrot.lane.b32.xlu0 %v3716, 64
        %v4015 = vpop.permute.xlu0 %4014
        %4016 = vrot.lane.b32.xlu0 %v3717, 64
        %v4017 = vpop.permute.xlu0 %4016
        %4018 = vrot.lane.b32.xlu0 %v3718, 64
        %v4019 = vpop.permute.xlu0 %4018
        %4020 = vrot.lane.b32.xlu0 %v3719, 64
        %v4021 = vpop.permute.xlu0 %4020
        %4022 = vrot.lane.b32.xlu0 %v3720, 64
        %v4023 = vpop.permute.xlu0 %4022
        %4024 = vrot.lane.b32.xlu0 %v3721, 64
        %v4025 = vpop.permute.xlu0 %4024
        %4026 = vrot.lane.b32.xlu0 %v3722, 64
        %v4027 = vpop.permute.xlu0 %4026
        %4028 = vrot.lane.b32.xlu0 %v3723, 64
        %v4029 = vpop.permute.xlu0 %4028
        %v4048 = vmul.f32 %v2694, %v3995
        %v4049 = vmul.f32 %v2709, %v3997
        %v4050 = vmul.f32 %v2724, %v3999
        %v4051 = vmul.f32 %v2739, %v4001
        %v4052 = vmul.f32 %v2754, %v4003
        %v4053 = vmul.f32 %v2769, %v4005
        %v4054 = vmul.f32 %v2784, %v4007
        %v4055 = vmul.f32 %v2799, %v4009
        %v4056 = vmul.f32 %v2814, %v4011
        %v4057 = vmul.f32 %v2829, %v4013
        %v4058 = vmul.f32 %v2844, %v4015
        %v4059 = vmul.f32 %v2859, %v4017
        %v4060 = vmul.f32 %v2874, %v4019
        %v4061 = vmul.f32 %v2889, %v4021
        %v4062 = vmul.f32 %v2904, %v4023
        %v4063 = vmul.f32 %v2919, %v4025
        %v4064 = vmul.f32 %v2934, %v4027
        %v4065 = vmul.f32 %v2949, %v4029
        %4084 = vrot.lane.b32.xlu0 %v2950, 96
        %v4085 = vpop.permute.xlu0 %4084
        %4086 = vrot.lane.b32.xlu0 %v2951, 96
        %v4087 = vpop.permute.xlu0 %4086
        %4088 = vrot.lane.b32.xlu0 %v2952, 96
        %v4089 = vpop.permute.xlu0 %4088
        %4090 = vrot.lane.b32.xlu0 %v2953, 96
        %v4091 = vpop.permute.xlu0 %4090
        %4092 = vrot.lane.b32.xlu0 %v2954, 96
        %v4093 = vpop.permute.xlu0 %4092
        %4094 = vrot.lane.b32.xlu0 %v2955, 96
        %v4095 = vpop.permute.xlu0 %4094
        %4096 = vrot.lane.b32.xlu0 %v2956, 96
        %v4097 = vpop.permute.xlu0 %4096
        %4098 = vrot.lane.b32.xlu0 %v2957, 96
        %v4099 = vpop.permute.xlu0 %4098
        %4100 = vrot.lane.b32.xlu0 %v2958, 96
        %v4101 = vpop.permute.xlu0 %4100
        %4102 = vrot.lane.b32.xlu0 %v2959, 96
        %v4103 = vpop.permute.xlu0 %4102
        %4104 = vrot.lane.b32.xlu0 %v2960, 96
        %v4105 = vpop.permute.xlu0 %4104
        %4106 = vrot.lane.b32.xlu0 %v2961, 96
        %v4107 = vpop.permute.xlu0 %4106
        %4108 = vrot.lane.b32.xlu0 %v2962, 96
        %v4109 = vpop.permute.xlu0 %4108
        %4110 = vrot.lane.b32.xlu0 %v2963, 96
        %v4111 = vpop.permute.xlu0 %4110
        %4112 = vrot.lane.b32.xlu0 %v2964, 96
        %v4113 = vpop.permute.xlu0 %4112
        %4114 = vrot.lane.b32.xlu0 %v2965, 96
        %v4115 = vpop.permute.xlu0 %4114
        %4116 = vrot.lane.b32.xlu0 %v2966, 96
        %v4117 = vpop.permute.xlu0 %4116
        %4118 = vrot.lane.b32.xlu0 %v2967, 96
        %v4119 = vpop.permute.xlu0 %4118
        %v4138 = vmul.f32 %v2694, %v4085
        %v4139 = vmul.f32 %v2709, %v4087
        %v4140 = vmul.f32 %v2724, %v4089
        %v4141 = vmul.f32 %v2739, %v4091
        %v4142 = vmul.f32 %v2754, %v4093
        %v4143 = vmul.f32 %v2769, %v4095
        %v4144 = vmul.f32 %v2784, %v4097
        %v4145 = vmul.f32 %v2799, %v4099
        %v4146 = vmul.f32 %v2814, %v4101
        %v4147 = vmul.f32 %v2829, %v4103
        %v4148 = vmul.f32 %v2844, %v4105
        %v4149 = vmul.f32 %v2859, %v4107
        %v4150 = vmul.f32 %v2874, %v4109
        %v4151 = vmul.f32 %v2889, %v4111
        %v4152 = vmul.f32 %v2904, %v4113
        %v4153 = vmul.f32 %v2919, %v4115
        %v4154 = vmul.f32 %v2934, %v4117
        %v4155 = vmul.f32 %v2949, %v4119
        %4174 = vrot.lane.b32.xlu0 %v4138, 64
        %v4175 = vpop.permute.xlu0 %4174
        %4176 = vrot.lane.b32.xlu0 %v4139, 64
        %v4177 = vpop.permute.xlu0 %4176
        %4178 = vrot.lane.b32.xlu0 %v4140, 64
        %v4179 = vpop.permute.xlu0 %4178
        %4180 = vrot.lane.b32.xlu0 %v4141, 64
        %v4181 = vpop.permute.xlu0 %4180
        %4182 = vrot.lane.b32.xlu0 %v4142, 64
        %v4183 = vpop.permute.xlu0 %4182
        %4184 = vrot.lane.b32.xlu0 %v4143, 64
        %v4185 = vpop.permute.xlu0 %4184
        %4186 = vrot.lane.b32.xlu0 %v4144, 64
        %v4187 = vpop.permute.xlu0 %4186
        %4188 = vrot.lane.b32.xlu0 %v4145, 64
        %v4189 = vpop.permute.xlu0 %4188
        %4190 = vrot.lane.b32.xlu0 %v4146, 64
        %v4191 = vpop.permute.xlu0 %4190
        %4192 = vrot.lane.b32.xlu0 %v4147, 64
        %v4193 = vpop.permute.xlu0 %4192
        %4194 = vrot.lane.b32.xlu0 %v4148, 64
        %v4195 = vpop.permute.xlu0 %4194
        %4196 = vrot.lane.b32.xlu0 %v4149, 64
        %v4197 = vpop.permute.xlu0 %4196
        %4198 = vrot.lane.b32.xlu0 %v4150, 64
        %v4199 = vpop.permute.xlu0 %4198
        %4200 = vrot.lane.b32.xlu0 %v4151, 64
        %v4201 = vpop.permute.xlu0 %4200
        %4202 = vrot.lane.b32.xlu0 %v4152, 64
        %v4203 = vpop.permute.xlu0 %4202
        %4204 = vrot.lane.b32.xlu0 %v4153, 64
        %v4205 = vpop.permute.xlu0 %4204
        %4206 = vrot.lane.b32.xlu0 %v4154, 64
        %v4207 = vpop.permute.xlu0 %4206
        %4208 = vrot.lane.b32.xlu0 %v4155, 64
        %v4209 = vpop.permute.xlu0 %4208
        %v4228 = vadd.f32 %v4048, %v4175
        %v4229 = vadd.f32 %v4049, %v4177
        %v4230 = vadd.f32 %v4050, %v4179
        %v4231 = vadd.f32 %v4051, %v4181
        %v4232 = vadd.f32 %v4052, %v4183
        %v4233 = vadd.f32 %v4053, %v4185
        %v4234 = vadd.f32 %v4054, %v4187
        %v4235 = vadd.f32 %v4055, %v4189
        %v4236 = vadd.f32 %v4056, %v4191
        %v4237 = vadd.f32 %v4057, %v4193
        %v4238 = vadd.f32 %v4058, %v4195
        %v4239 = vadd.f32 %v4059, %v4197
        %v4240 = vadd.f32 %v4060, %v4199
        %v4241 = vadd.f32 %v4061, %v4201
        %v4242 = vadd.f32 %v4062, %v4203
        %v4243 = vadd.f32 %v4063, %v4205
        %v4244 = vadd.f32 %v4064, %v4207
        %v4245 = vadd.f32 %v4065, %v4209
        %v4246 = vld [vmem:[%s4] sm:$0xff]
        %v4247 = vld [vmem:[%s4 + $0x8] sm:$0xff]
        %v4248 = vld [vmem:[%s4 + $0x10] sm:$0xff]
        %v4249 = vld [vmem:[%s4 + $0x18] sm:$0xff]
        %v4250 = vld [vmem:[%s4 + $0x20] sm:$0xff]
        %v4251 = vld [vmem:[%s4 + $0x28] sm:$0xff]
        %v4252 = vld [vmem:[%s4 + $0x30] sm:$0xff]
        %v4253 = vld [vmem:[%s4 + $0x38] sm:$0xff]
        %4272 = vrot.lane.b32.xlu0 %v3976, 64
        %v4273 = vpop.permute.xlu0 %4272
        %4274 = vrot.lane.b32.xlu0 %v3977, 64
        %v4275 = vpop.permute.xlu0 %4274
        %4276 = vrot.lane.b32.xlu0 %v3978, 64
        %v4277 = vpop.permute.xlu0 %4276
        %4278 = vrot.lane.b32.xlu0 %v3979, 64
        %v4279 = vpop.permute.xlu0 %4278
        %4280 = vrot.lane.b32.xlu0 %v3980, 64
        %v4281 = vpop.permute.xlu0 %4280
        %4282 = vrot.lane.b32.xlu0 %v3981, 64
        %v4283 = vpop.permute.xlu0 %4282
        %4284 = vrot.lane.b32.xlu0 %v3982, 64
        %v4285 = vpop.permute.xlu0 %4284
        %4286 = vrot.lane.b32.xlu0 %v3983, 64
        %v4287 = vpop.permute.xlu0 %4286
        %4288 = vrot.lane.b32.xlu0 %v3984, 64
        %v4289 = vpop.permute.xlu0 %4288
        %4290 = vrot.lane.b32.xlu0 %v3985, 64
        %v4291 = vpop.permute.xlu0 %4290
        %4292 = vrot.lane.b32.xlu0 %v3986, 64
        %v4293 = vpop.permute.xlu0 %4292
        %4294 = vrot.lane.b32.xlu0 %v3987, 64
        %v4295 = vpop.permute.xlu0 %4294
        %4296 = vrot.lane.b32.xlu0 %v3988, 64
        %v4297 = vpop.permute.xlu0 %4296
        %4298 = vrot.lane.b32.xlu0 %v3989, 64
        %v4299 = vpop.permute.xlu0 %4298
        %4300 = vrot.lane.b32.xlu0 %v3990, 64
        %v4301 = vpop.permute.xlu0 %4300
        %4302 = vrot.lane.b32.xlu0 %v3991, 64
        %v4303 = vpop.permute.xlu0 %4302
        %4304 = vrot.lane.b32.xlu0 %v3992, 64
        %v4305 = vpop.permute.xlu0 %4304
        %4306 = vrot.lane.b32.xlu0 %v3993, 64
        %v4307 = vpop.permute.xlu0 %4306
        %v4308 = vsel %vm432, %v4273, 0
        %v4310 = vsel %vm432, %v4275, 0
        %v4312 = vsel %vm432, %v4277, 0
        %v4314 = vsel %vm432, %v4279, 0
        %v4316 = vsel %vm432, %v4281, 0
        %v4318 = vsel %vm432, %v4283, 0
        %v4320 = vsel %vm432, %v4285, 0
        %v4322 = vsel %vm432, %v4287, 0
        %v4324 = vsel %vm432, %v4289, 0
        %v4326 = vsel %vm432, %v4291, 0
        %v4328 = vsel %vm432, %v4293, 0
        %v4330 = vsel %vm432, %v4295, 0
        %v4332 = vsel %vm432, %v4297, 0
        %v4334 = vsel %vm432, %v4299, 0
        %v4336 = vsel %vm432, %v4301, 0
        %v4338 = vsel %vm432, %v4303, 0
        %v4340 = vsel %vm432, %v4305, 0
        %v4342 = vsel %vm432, %v4307, 0
        %4344 = vmatpush.msra.mxu0 0.0
        %4345 = vmatpush.msra.mxu0 0.0
        %4346 = vmatpush.msra.mxu0 0.0
        %4347 = vmatpush.msra.mxu0 0.0
        %4348 = vmatpush.msra.mxu0 0.0
        %4349 = vmatpush.msra.mxu0 0.0
        %4350 = vmatpush.msra.mxu0 0.0
        %4351 = vmatpush.msra.mxu0 0.0
        %4352 = vmatpush.msra.mxu0 0.0
        %4353 = vmatpush.msra.mxu0 0.0
        %4354 = vmatpush.msra.mxu0 0.0
        %4355 = vmatpush.msra.mxu0 0.0
        %4356 = vmatpush.msra.mxu0 %v4253
        %4357 = vmatpush.msra.mxu0 %v4252
        %4358 = vmatpush.msra.mxu0 %v4251
        %4359 = vmatpush.msra.mxu0 %v4250
        %4360 = vmatmul.f32.gmra.mxu0 %v4308
        %v4361 = vpop.f32.mrf.mxu0
        %v4362 = vadd.f32 0.0, %v4361
        %4363 = vmatmul.f32.gmra.mxu0 %v4310
        %v4364 = vpop.f32.mrf.mxu0
        %v4365 = vadd.f32 0.0, %v4364
        %4366 = vmatmul.f32.gmra.mxu0 %v4312
        %v4367 = vpop.f32.mrf.mxu0
        %v4368 = vadd.f32 0.0, %v4367
        %4369 = vmatmul.f32.gmra.mxu0 %v4314
        %v4370 = vpop.f32.mrf.mxu0
        %v4371 = vadd.f32 0.0, %v4370
        %4372 = vmatmul.f32.gmra.mxu0 %v4316
        %v4373 = vpop.f32.mrf.mxu0
        %v4374 = vadd.f32 0.0, %v4373
        %4375 = vmatmul.f32.gmra.mxu0 %v4318
        %v4376 = vpop.f32.mrf.mxu0
        %v4377 = vadd.f32 0.0, %v4376
        %4378 = vmatmul.f32.gmra.mxu0 %v4320
        %v4379 = vpop.f32.mrf.mxu0
        %v4380 = vadd.f32 0.0, %v4379
        %4381 = vmatmul.f32.gmra.mxu0 %v4322
        %v4382 = vpop.f32.mrf.mxu0
        %v4383 = vadd.f32 0.0, %v4382
        %4384 = vmatmul.f32.gmra.mxu0 %v4324
        %v4385 = vpop.f32.mrf.mxu0
        %v4386 = vadd.f32 0.0, %v4385
        %4387 = vmatmul.f32.gmra.mxu0 %v4326
        %v4388 = vpop.f32.mrf.mxu0
        %v4389 = vadd.f32 0.0, %v4388
        %4390 = vmatmul.f32.gmra.mxu0 %v4328
        %v4391 = vpop.f32.mrf.mxu0
        %v4392 = vadd.f32 0.0, %v4391
        %4393 = vmatmul.f32.gmra.mxu0 %v4330
        %v4394 = vpop.f32.mrf.mxu0
        %v4395 = vadd.f32 0.0, %v4394
        %4396 = vmatmul.f32.gmra.mxu0 %v4332
        %v4397 = vpop.f32.mrf.mxu0
        %v4398 = vadd.f32 0.0, %v4397
        %4399 = vmatmul.f32.gmra.mxu0 %v4334
        %v4400 = vpop.f32.mrf.mxu0
        %v4401 = vadd.f32 0.0, %v4400
        %4402 = vmatmul.f32.gmra.mxu0 %v4336
        %v4403 = vpop.f32.mrf.mxu0
        %v4404 = vadd.f32 0.0, %v4403
        %4405 = vmatmul.f32.gmra.mxu0 %v4338
        %v4406 = vpop.f32.mrf.mxu0
        %v4407 = vadd.f32 0.0, %v4406
        %4408 = vmatmul.f32.gmra.mxu0 %v4340
        %v4409 = vpop.f32.mrf.mxu0
        %v4410 = vadd.f32 0.0, %v4409
        %4411 = vmatmul.f32.gmra.mxu0 %v4342
        %v4412 = vpop.f32.mrf.mxu0
        %v4413 = vadd.f32 0.0, %v4412
        %4414 = vdwg.mxu0
        %4433 = vrot.lane.b32.xlu0 %v4228, 64
        %v4434 = vpop.permute.xlu0 %4433
        %4435 = vrot.lane.b32.xlu0 %v4229, 64
        %v4436 = vpop.permute.xlu0 %4435
        %4437 = vrot.lane.b32.xlu0 %v4230, 64
        %v4438 = vpop.permute.xlu0 %4437
        %4439 = vrot.lane.b32.xlu0 %v4231, 64
        %v4440 = vpop.permute.xlu0 %4439
        %4441 = vrot.lane.b32.xlu0 %v4232, 64
        %v4442 = vpop.permute.xlu0 %4441
        %4443 = vrot.lane.b32.xlu0 %v4233, 64
        %v4444 = vpop.permute.xlu0 %4443
        %4445 = vrot.lane.b32.xlu0 %v4234, 64
        %v4446 = vpop.permute.xlu0 %4445
        %4447 = vrot.lane.b32.xlu0 %v4235, 64
        %v4448 = vpop.permute.xlu0 %4447
        %4449 = vrot.lane.b32.xlu0 %v4236, 64
        %v4450 = vpop.permute.xlu0 %4449
        %4451 = vrot.lane.b32.xlu0 %v4237, 64
        %v4452 = vpop.permute.xlu0 %4451
        %4453 = vrot.lane.b32.xlu0 %v4238, 64
        %v4454 = vpop.permute.xlu0 %4453
        %4455 = vrot.lane.b32.xlu0 %v4239, 64
        %v4456 = vpop.permute.xlu0 %4455
        %4457 = vrot.lane.b32.xlu0 %v4240, 64
        %v4458 = vpop.permute.xlu0 %4457
        %4459 = vrot.lane.b32.xlu0 %v4241, 64
        %v4460 = vpop.permute.xlu0 %4459
        %4461 = vrot.lane.b32.xlu0 %v4242, 64
        %v4462 = vpop.permute.xlu0 %4461
        %4463 = vrot.lane.b32.xlu0 %v4243, 64
        %v4464 = vpop.permute.xlu0 %4463
        %4465 = vrot.lane.b32.xlu0 %v4244, 64
        %v4466 = vpop.permute.xlu0 %4465
        %4467 = vrot.lane.b32.xlu0 %v4245, 64
        %v4468 = vpop.permute.xlu0 %4467
        %v4469 = vsel %vm432, %v4434, 0
        %v4471 = vsel %vm432, %v4436, 0
        %v4473 = vsel %vm432, %v4438, 0
        %v4475 = vsel %vm432, %v4440, 0
        %v4477 = vsel %vm432, %v4442, 0
        %v4479 = vsel %vm432, %v4444, 0
        %v4481 = vsel %vm432, %v4446, 0
        %v4483 = vsel %vm432, %v4448, 0
        %v4485 = vsel %vm432, %v4450, 0
        %v4487 = vsel %vm432, %v4452, 0
        %v4489 = vsel %vm432, %v4454, 0
        %v4491 = vsel %vm432, %v4456, 0
        %v4493 = vsel %vm432, %v4458, 0
        %v4495 = vsel %vm432, %v4460, 0
        %v4497 = vsel %vm432, %v4462, 0
        %v4499 = vsel %vm432, %v4464, 0
        %v4501 = vsel %vm432, %v4466, 0
        %v4503 = vsel %vm432, %v4468, 0
        %4505 = vmatpush.msra.mxu0 0.0
        %4506 = vmatpush.msra.mxu0 0.0
        %4507 = vmatpush.msra.mxu0 0.0
        %4508 = vmatpush.msra.mxu0 0.0
        %4509 = vmatpush.msra.mxu0 0.0
        %4510 = vmatpush.msra.mxu0 0.0
        %4511 = vmatpush.msra.mxu0 0.0
        %4512 = vmatpush.msra.mxu0 0.0
        %4513 = vmatpush.msra.mxu0 0.0
        %4514 = vmatpush.msra.mxu0 0.0
        %4515 = vmatpush.msra.mxu0 0.0
        %4516 = vmatpush.msra.mxu0 0.0
        %4517 = vmatpush.msra.mxu0 %v4249
        %4518 = vmatpush.msra.mxu0 %v4248
        %4519 = vmatpush.msra.mxu0 %v4247
        %4520 = vmatpush.msra.mxu0 %v4246
        %4521 = vmatmul.f32.gmra.mxu0 %v4469
        %v4522 = vpop.f32.mrf.mxu0
        %v4523 = vadd.f32 %v4362, %v4522
        %4524 = vmatmul.f32.gmra.mxu0 %v4471
        %v4525 = vpop.f32.mrf.mxu0
        %v4526 = vadd.f32 %v4365, %v4525
        %4527 = vmatmul.f32.gmra.mxu0 %v4473
        %v4528 = vpop.f32.mrf.mxu0
        %v4529 = vadd.f32 %v4368, %v4528
        %4530 = vmatmul.f32.gmra.mxu0 %v4475
        %v4531 = vpop.f32.mrf.mxu0
        %v4532 = vadd.f32 %v4371, %v4531
        %4533 = vmatmul.f32.gmra.mxu0 %v4477
        %v4534 = vpop.f32.mrf.mxu0
        %v4535 = vadd.f32 %v4374, %v4534
        %4536 = vmatmul.f32.gmra.mxu0 %v4479
        %v4537 = vpop.f32.mrf.mxu0
        %v4538 = vadd.f32 %v4377, %v4537
        %4539 = vmatmul.f32.gmra.mxu0 %v4481
        %v4540 = vpop.f32.mrf.mxu0
        %v4541 = vadd.f32 %v4380, %v4540
        %4542 = vmatmul.f32.gmra.mxu0 %v4483
        %v4543 = vpop.f32.mrf.mxu0
        %v4544 = vadd.f32 %v4383, %v4543
        %4545 = vmatmul.f32.gmra.mxu0 %v4485
        %v4546 = vpop.f32.mrf.mxu0
        %v4547 = vadd.f32 %v4386, %v4546
        %4548 = vmatmul.f32.gmra.mxu0 %v4487
        %v4549 = vpop.f32.mrf.mxu0
        %v4550 = vadd.f32 %v4389, %v4549
        %4551 = vmatmul.f32.gmra.mxu0 %v4489
        %v4552 = vpop.f32.mrf.mxu0
        %v4553 = vadd.f32 %v4392, %v4552
        %4554 = vmatmul.f32.gmra.mxu0 %v4491
        %v4555 = vpop.f32.mrf.mxu0
        %v4556 = vadd.f32 %v4395, %v4555
        %4557 = vmatmul.f32.gmra.mxu0 %v4493
        %v4558 = vpop.f32.mrf.mxu0
        %v4559 = vadd.f32 %v4398, %v4558
        %4560 = vmatmul.f32.gmra.mxu0 %v4495
        %v4561 = vpop.f32.mrf.mxu0
        %v4562 = vadd.f32 %v4401, %v4561
        %4563 = vmatmul.f32.gmra.mxu0 %v4497
        %v4564 = vpop.f32.mrf.mxu0
        %v4565 = vadd.f32 %v4404, %v4564
        %4566 = vmatmul.f32.gmra.mxu0 %v4499
        %v4567 = vpop.f32.mrf.mxu0
        %v4568 = vadd.f32 %v4407, %v4567
        %4569 = vmatmul.f32.gmra.mxu0 %v4501
        %v4570 = vpop.f32.mrf.mxu0
        %v4571 = vadd.f32 %v4410, %v4570
        %4572 = vmatmul.f32.gmra.mxu0 %v4503
        %v4573 = vpop.f32.mrf.mxu0
        %v4574 = vadd.f32 %v4413, %v4573
        %4575 = vdwg.mxu0
        %v4576 = vld [vmem:[%s5] sm:$0x1]
        %v4578 = vperm.slane %v4576, 0
        %v4580 = vadd.f32 %v4523, %v4578
        %v4581 = vadd.f32 %v4526, %v4578
        %v4582 = vadd.f32 %v4529, %v4578
        %v4583 = vadd.f32 %v4532, %v4578
        %v4584 = vadd.f32 %v4535, %v4578
        %v4585 = vadd.f32 %v4538, %v4578
        %v4586 = vadd.f32 %v4541, %v4578
        %v4587 = vadd.f32 %v4544, %v4578
        %v4588 = vadd.f32 %v4547, %v4578
        %v4589 = vadd.f32 %v4550, %v4578
        %v4590 = vadd.f32 %v4553, %v4578
        %v4591 = vadd.f32 %v4556, %v4578
        %v4592 = vadd.f32 %v4559, %v4578
        %v4593 = vadd.f32 %v4562, %v4578
        %v4594 = vadd.f32 %v4565, %v4578
        %v4595 = vadd.f32 %v4568, %v4578
        %v4596 = vadd.f32 %v4571, %v4578
        %v4597 = vadd.f32 %v4574, %v4578
        %v4598 = vtanh.pop %v4580
        %v4599 = vtanh.pop %v4581
        %v4600 = vtanh.pop %v4582
        %v4601 = vtanh.pop %v4583
        %v4602 = vtanh.pop %v4584
        %v4603 = vtanh.pop %v4585
        %v4604 = vtanh.pop %v4586
        %v4605 = vtanh.pop %v4587
        %v4606 = vtanh.pop %v4588
        %v4607 = vtanh.pop %v4589
        %v4608 = vtanh.pop %v4590
        %v4609 = vtanh.pop %v4591
        %v4610 = vtanh.pop %v4592
        %v4611 = vtanh.pop %v4593
        %v4612 = vtanh.pop %v4594
        %v4613 = vtanh.pop %v4595
        %v4614 = vtanh.pop %v4596
        %v4615 = vtanh.pop %v4597
        %4634 = vrot.lane.b32.xlu0 %v4598, 96
        %v4635 = vpop.permute.xlu0 %4634
        %4636 = vrot.lane.b32.xlu0 %v4599, 96
        %v4637 = vpop.permute.xlu0 %4636
        %4638 = vrot.lane.b32.xlu0 %v4600, 96
        %v4639 = vpop.permute.xlu0 %4638
        %4640 = vrot.lane.b32.xlu0 %v4601, 96
        %v4641 = vpop.permute.xlu0 %4640
        %4642 = vrot.lane.b32.xlu0 %v4602, 96
        %v4643 = vpop.permute.xlu0 %4642
        %4644 = vrot.lane.b32.xlu0 %v4603, 96
        %v4645 = vpop.permute.xlu0 %4644
        %4646 = vrot.lane.b32.xlu0 %v4604, 96
        %v4647 = vpop.permute.xlu0 %4646
        %4648 = vrot.lane.b32.xlu0 %v4605, 96
        %v4649 = vpop.permute.xlu0 %4648
        %4650 = vrot.lane.b32.xlu0 %v4606, 96
        %v4651 = vpop.permute.xlu0 %4650
        %4652 = vrot.lane.b32.xlu0 %v4607, 96
        %v4653 = vpop.permute.xlu0 %4652
        %4654 = vrot.lane.b32.xlu0 %v4608, 96
        %v4655 = vpop.permute.xlu0 %4654
        %4656 = vrot.lane.b32.xlu0 %v4609, 96
        %v4657 = vpop.permute.xlu0 %4656
        %4658 = vrot.lane.b32.xlu0 %v4610, 96
        %v4659 = vpop.permute.xlu0 %4658
        %4660 = vrot.lane.b32.xlu0 %v4611, 96
        %v4661 = vpop.permute.xlu0 %4660
        %4662 = vrot.lane.b32.xlu0 %v4612, 96
        %v4663 = vpop.permute.xlu0 %4662
        %4664 = vrot.lane.b32.xlu0 %v4613, 96
        %v4665 = vpop.permute.xlu0 %4664
        %4666 = vrot.lane.b32.xlu0 %v4614, 96
        %v4667 = vpop.permute.xlu0 %4666
        %4668 = vrot.lane.b32.xlu0 %v4615, 96
        %v4669 = vpop.permute.xlu0 %4668
        %v4688 = vmul.f32 %v3432, %v4635
        %v4689 = vmul.f32 %v3447, %v4637
        %v4690 = vmul.f32 %v3462, %v4639
        %v4691 = vmul.f32 %v3477, %v4641
        %v4692 = vmul.f32 %v3492, %v4643
        %v4693 = vmul.f32 %v3507, %v4645
        %v4694 = vmul.f32 %v3522, %v4647
        %v4695 = vmul.f32 %v3537, %v4649
        %v4696 = vmul.f32 %v3552, %v4651
        %v4697 = vmul.f32 %v3567, %v4653
        %v4698 = vmul.f32 %v3582, %v4655
        %v4699 = vmul.f32 %v3597, %v4657
        %v4700 = vmul.f32 %v3612, %v4659
        %v4701 = vmul.f32 %v3627, %v4661
        %v4702 = vmul.f32 %v3642, %v4663
        %v4703 = vmul.f32 %v3657, %v4665
        %v4704 = vmul.f32 %v3672, %v4667
        %v4705 = vmul.f32 %v3687, %v4669
        %4724 = vrot.lane.b32.xlu0 %v4688, 32
        %v4725 = vpop.permute.xlu0 %4724
        %4726 = vrot.lane.b32.xlu0 %v4689, 32
        %v4727 = vpop.permute.xlu0 %4726
        %4728 = vrot.lane.b32.xlu0 %v4690, 32
        %v4729 = vpop.permute.xlu0 %4728
        %4730 = vrot.lane.b32.xlu0 %v4691, 32
        %v4731 = vpop.permute.xlu0 %4730
        %4732 = vrot.lane.b32.xlu0 %v4692, 32
        %v4733 = vpop.permute.xlu0 %4732
        %4734 = vrot.lane.b32.xlu0 %v4693, 32
        %v4735 = vpop.permute.xlu0 %4734
        %4736 = vrot.lane.b32.xlu0 %v4694, 32
        %v4737 = vpop.permute.xlu0 %4736
        %4738 = vrot.lane.b32.xlu0 %v4695, 32
        %v4739 = vpop.permute.xlu0 %4738
        %4740 = vrot.lane.b32.xlu0 %v4696, 32
        %v4741 = vpop.permute.xlu0 %4740
        %4742 = vrot.lane.b32.xlu0 %v4697, 32
        %v4743 = vpop.permute.xlu0 %4742
        %4744 = vrot.lane.b32.xlu0 %v4698, 32
        %v4745 = vpop.permute.xlu0 %4744
        %4746 = vrot.lane.b32.xlu0 %v4699, 32
        %v4747 = vpop.permute.xlu0 %4746
        %4748 = vrot.lane.b32.xlu0 %v4700, 32
        %v4749 = vpop.permute.xlu0 %4748
        %4750 = vrot.lane.b32.xlu0 %v4701, 32
        %v4751 = vpop.permute.xlu0 %4750
        %4752 = vrot.lane.b32.xlu0 %v4702, 32
        %v4753 = vpop.permute.xlu0 %4752
        %4754 = vrot.lane.b32.xlu0 %v4703, 32
        %v4755 = vpop.permute.xlu0 %4754
        %4756 = vrot.lane.b32.xlu0 %v4704, 32
        %v4757 = vpop.permute.xlu0 %4756
        %4758 = vrot.lane.b32.xlu0 %v4705, 32
        %v4759 = vpop.permute.xlu0 %4758
        %4778 = vrot.lane.b32.xlu0 %v4228, 96
        %v4779 = vpop.permute.xlu0 %4778
        %4780 = vrot.lane.b32.xlu0 %v4229, 96
        %v4781 = vpop.permute.xlu0 %4780
        %4782 = vrot.lane.b32.xlu0 %v4230, 96
        %v4783 = vpop.permute.xlu0 %4782
        %4784 = vrot.lane.b32.xlu0 %v4231, 96
        %v4785 = vpop.permute.xlu0 %4784
        %4786 = vrot.lane.b32.xlu0 %v4232, 96
        %v4787 = vpop.permute.xlu0 %4786
        %4788 = vrot.lane.b32.xlu0 %v4233, 96
        %v4789 = vpop.permute.xlu0 %4788
        %4790 = vrot.lane.b32.xlu0 %v4234, 96
        %v4791 = vpop.permute.xlu0 %4790
        %4792 = vrot.lane.b32.xlu0 %v4235, 96
        %v4793 = vpop.permute.xlu0 %4792
        %4794 = vrot.lane.b32.xlu0 %v4236, 96
        %v4795 = vpop.permute.xlu0 %4794
        %4796 = vrot.lane.b32.xlu0 %v4237, 96
        %v4797 = vpop.permute.xlu0 %4796
        %4798 = vrot.lane.b32.xlu0 %v4238, 96
        %v4799 = vpop.permute.xlu0 %4798
        %4800 = vrot.lane.b32.xlu0 %v4239, 96
        %v4801 = vpop.permute.xlu0 %4800
        %4802 = vrot.lane.b32.xlu0 %v4240, 96
        %v4803 = vpop.permute.xlu0 %4802
        %4804 = vrot.lane.b32.xlu0 %v4241, 96
        %v4805 = vpop.permute.xlu0 %4804
        %4806 = vrot.lane.b32.xlu0 %v4242, 96
        %v4807 = vpop.permute.xlu0 %4806
        %4808 = vrot.lane.b32.xlu0 %v4243, 96
        %v4809 = vpop.permute.xlu0 %4808
        %4810 = vrot.lane.b32.xlu0 %v4244, 96
        %v4811 = vpop.permute.xlu0 %4810
        %4812 = vrot.lane.b32.xlu0 %v4245, 96
        %v4813 = vpop.permute.xlu0 %4812
        %v4832 = vsel %vm432, %v4725, %v4779
        %v4833 = vsel %vm432, %v4727, %v4781
        %v4834 = vsel %vm432, %v4729, %v4783
        %v4835 = vsel %vm432, %v4731, %v4785
        %v4836 = vsel %vm432, %v4733, %v4787
        %v4837 = vsel %vm432, %v4735, %v4789
        %v4838 = vsel %vm432, %v4737, %v4791
        %v4839 = vsel %vm432, %v4739, %v4793
        %v4840 = vsel %vm432, %v4741, %v4795
        %v4841 = vsel %vm432, %v4743, %v4797
        %v4842 = vsel %vm432, %v4745, %v4799
        %v4843 = vsel %vm432, %v4747, %v4801
        %v4844 = vsel %vm432, %v4749, %v4803
        %v4845 = vsel %vm432, %v4751, %v4805
        %v4846 = vsel %vm432, %v4753, %v4807
        %v4847 = vsel %vm432, %v4755, %v4809
        %v4848 = vsel %vm432, %v4757, %v4811
        %v4849 = vsel %vm432, %v4759, %v4813
        %vm4850 = vcmask 523264
        %v4851 = vsel %vm4850, %v4832, %v3976
        %v4852 = vsel %vm4850, %v4833, %v3977
        %v4853 = vsel %vm4850, %v4834, %v3978
        %v4854 = vsel %vm4850, %v4835, %v3979
        %v4855 = vsel %vm4850, %v4836, %v3980
        %v4856 = vsel %vm4850, %v4837, %v3981
        %v4857 = vsel %vm4850, %v4838, %v3982
        %v4858 = vsel %vm4850, %v4839, %v3983
        %v4859 = vsel %vm4850, %v4840, %v3984
        %v4860 = vsel %vm4850, %v4841, %v3985
        %v4861 = vsel %vm4850, %v4842, %v3986
        %v4862 = vsel %vm4850, %v4843, %v3987
        %v4863 = vsel %vm4850, %v4844, %v3988
        %v4864 = vsel %vm4850, %v4845, %v3989
        %v4865 = vsel %vm4850, %v4846, %v3990
        %v4866 = vsel %vm4850, %v4847, %v3991
        %v4867 = vsel %vm4850, %v4848, %v3992
        %v4868 = vsel %vm4850, %v4849, %v3993
        %vm4869 = vcmask 785408
        %4870 = vst.msk [vmem:[%s293] sm:$0xff] %vm4869, %v4851
        %4871 = vst.msk [vmem:[%s293 + $0x8] sm:$0xff] %vm4869, %v4852
        %4872 = vst.msk [vmem:[%s293 + $0x10] sm:$0xff] %vm4869, %v4853
        %4873 = vst.msk [vmem:[%s293 + $0x18] sm:$0xff] %vm4869, %v4854
        %4874 = vst.msk [vmem:[%s293 + $0x20] sm:$0xff] %vm4869, %v4855
        %4875 = vst.msk [vmem:[%s293 + $0x28] sm:$0xff] %vm4869, %v4856
        %4876 = vst.msk [vmem:[%s293 + $0x30] sm:$0xff] %vm4869, %v4857
        %4877 = vst.msk [vmem:[%s293 + $0x38] sm:$0xff] %vm4869, %v4858
        %4878 = vst.msk [vmem:[%s293 + $0x40] sm:$0xff] %vm4869, %v4859
        %4879 = vst.msk [vmem:[%s293 + $0x48] sm:$0xff] %vm4869, %v4860
        %4880 = vst.msk [vmem:[%s293 + $0x50] sm:$0xff] %vm4869, %v4861
        %4881 = vst.msk [vmem:[%s293 + $0x58] sm:$0xff] %vm4869, %v4862
        %4882 = vst.msk [vmem:[%s293 + $0x60] sm:$0xff] %vm4869, %v4863
        %4883 = vst.msk [vmem:[%s293 + $0x68] sm:$0xff] %vm4869, %v4864
        %4884 = vst.msk [vmem:[%s293 + $0x70] sm:$0xff] %vm4869, %v4865
        %4885 = vst.msk [vmem:[%s293 + $0x78] sm:$0xff] %vm4869, %v4866
        %4886 = vst.msk [vmem:[%s293 + $0x80] sm:$0xff] %vm4869, %v4867
        %4887 = vst.msk [vmem:[%s293 + $0x88] sm:$0xff] %vm4869, %v4868
        %s4888 = sand.u32 %s182, 1
        %s4889 = scalar_lea.sflag [#allocation3], %s4888
        %s4890 = sand.u32 %s182, 1
        %s4891 = smul.addr %s4890, 144
        %s4892 = scalar_lea.vmem [#allocation2], %s4891
        // Predicated region
        $region45: #{tpu_custom_call.1} parent=43 // pred_check
          %p4893 = pneg %p192
        $region46: #{tpu_custom_call.1} parent=43 // pred_check_branch
          %4895 = sbr.rel (%p4893) target = $region48
        $region47: #{tpu_custom_call.1} parent=43 // pred_region
          %4897 = vsyncadd %s4889, 0
          %s4898 = smul.addr %s25, 18
          %s4899 = smul.addr %s24, 36
          %s4900 = sadd.s32 %s4898, %s4899
          %s4901 = smul.addr %s4900, 8
          %s4902 = scalar_lea.hbm %s6, %s4901
          %s4903 = sshll.u32 %s4892, 4
          %s4904 = int_to_ptr.vmem [resolvable:$true] %s4903
          %s4905 = sshll.u32 %s4902, 4
          %s4906 = int_to_ptr.hbm [resolvable:$true] %s4905
          %4911 = dma.vmem_to_hbm [thread:$0]  %s4904, 2304, %s4906, %s4889, 128, 128, 8
        $region48: #{tpu_custom_call.1} parent=43 // pred_fallthru
          _
      $region44: #{tpu_custom_call.1} parent=5 // pred_fallthru
        _
      %p4912 = scmp.le.s32.totalorder 2, %s15
      // Predicated region
      $region49: #{tpu_custom_call.1} parent=5 // pred_check
        %p4913 = pneg %p4912
      $region50: #{tpu_custom_call.1} parent=5 // pred_check_branch
        %4915 = sbr.rel (%p4913) target = $region52
      $region51: #{tpu_custom_call.1} parent=5 // pred_region
        %s4916 = ssub.s32 %s15, 2
        // Predicated region
        $region53: #{tpu_custom_call.1} parent=51 // pred_check
          %p4917 = pneg %p198
        $region54: #{tpu_custom_call.1} parent=51 // pred_check_branch
          %4919 = sbr.rel (%p4917) target = $region56
        $region55: #{tpu_custom_call.1} parent=51 // pred_region
          %s4920 = sand.u32 %s183, 1
          %s4921 = scalar_lea.sflag [#allocation3], %s4920
          %s4922 = sand.u32 %s183, 1
          %s4923 = smul.addr %s4922, 144
          %s4924 = scalar_lea.vmem [#allocation2], %s4923
          %4926 = dma.done %s4921, 2304
        $region56: #{tpu_custom_call.1} parent=51 // pred_fallthru
          _
      $region52: #{tpu_custom_call.1} parent=5 // pred_fallthru
        _
    $region6: #{tpu_custom_call.1} parent=1 // loop_footer
      %s19 = sadd.s32 1, %s15
    $region7: #{tpu_custom_call.1} parent=1 // loop_footer_branch
      %14 = sbr.rel target = $region3
    $region8: #{tpu_custom_call.1} parent=1 // loop_exit
      _
    %4927 = vsyncpa [#allocation3], 1
    %s4928 = scalar_lea.sflag [#allocation3], 1
    %4929 = vsyncpa %s4928, 1

</llo_original>
